<compile_context>
chip_gen: v6e
topology: v6e:2x2x1
jax: 0.10.0
libtpu: 0.0.40
codegen_flags: <defaults>
</compile_context>

<pallas_src>
import functools
import math

import jax
import jax.numpy as jnp
from jax.experimental import pallas as pl
from jax.experimental.pallas import tpu as pltpu

# ----------------------------------------------------------------------------
# Synthetic small-shape configuration (stands in for the HF CLIP checkpoint).
# encoder_version == 'v1', select_feature == 'patch', num_learnable_tokens == 0
# ----------------------------------------------------------------------------
BATCH = 2
CHANNELS = 3
IMAGE_SIZE = 16
PATCH_SIZE = 8
NUM_PATCHES_PER_SIDE = IMAGE_SIZE // PATCH_SIZE     # 2
NUM_PATCHES = NUM_PATCHES_PER_SIDE ** 2             # 4
VISION_HIDDEN = 32
VISION_HEADS = 4
VISION_HEAD_DIM = VISION_HIDDEN // VISION_HEADS     # 8
VISION_MLP = 64
VISION_LAYERS = 2
SELECT_LAYER = -2                                   # args.mm_vision_select_layer
SELECT_FEATURE = "patch"                            # args.mm_vision_select_feature
VISION_SEQ = 1 + NUM_PATCHES                        # 5 (cls + patches)
VISION_SEQ_PAD = 8                                  # padded to a sublane multiple

TEXT_HIDDEN = 16                                    # stands in for HIDDEN_SIZE=768
TEXT_SEQ = 8                                        # stands in for 77-token context
TEXT_HEADS = 2
TEXT_HEAD_DIM = TEXT_HIDDEN // TEXT_HEADS
TEXT_MLP = 32
TEXT_LAYERS = 2
TEXT_VOCAB = 64
MM_TEXT_SELECT_LAYER = -2
MM_TEXT_SELECT_FEATURE = "patch"                    # drop BOS -> TEXT_SEQ-1 tokens
MM_TEXT_NUM_TOKENS = TEXT_SEQ - 1
NUM_LEARNABLE_TOKENS = 0
NUM_ADDED_TOKENS = NUM_PATCHES + NUM_LEARNABLE_TOKENS + MM_TEXT_NUM_TOKENS
ENCODER_VERSION = "v1"

LN_EPS = 1e-5
VMEM_LIMIT = 32 * 1024 * 1024


def _layers_to_run(select_layer, num_layers):
    """hidden_states has num_layers+1 entries; only hidden_states[select_layer]
    is consumed, so later layers are skipped entirely."""
    idx = select_layer if select_layer >= 0 else num_layers + 1 + select_layer
    assert 0 <= idx <= num_layers
    return idx


# ----------------------------------------------------------------------------
# Fused vision embedding kernel: patch conv (as matmul) + cls + pos + pre-LN.
# The token matrix is pre-padded to VISION_SEQ_PAD rows (row 0 = cls slot,
# trailing rows = padding) so the kernel does one matmul and one full store.
# ----------------------------------------------------------------------------
def _vision_embed_kernel(tok_ref, w_ref, add_ref, g_ref, b_ref, o_ref, *, eps=LN_EPS):
    # tok_ref: (1, S_pad, C*ps*ps); w_ref: (C*ps*ps, D) bf16; add_ref: (S_pad, D) f32
    x = jnp.dot(tok_ref[0].astype(jnp.bfloat16), w_ref[...],
                preferred_element_type=jnp.float32) + add_ref[...]
    mu = jnp.mean(x, axis=-1, keepdims=True)
    var = jnp.mean(jnp.square(x - mu), axis=-1, keepdims=True)
    y = (x - mu) * jax.lax.rsqrt(var + eps) * g_ref[...] + b_ref[...]
    o_ref[0] = y.astype(o_ref.dtype)                 # single unmasked (S_pad, D) store


def vision_embed(images, p):
    B, C, H, W = images.shape
    ps, nps = PATCH_SIZE, NUM_PATCHES_PER_SIDE
    CPP = C * ps * ps
    S, D = VISION_SEQ_PAD, VISION_HIDDEN

    # stride==kernel conv as a matmul on flattened (c, kh, kw) patches (glue)
    patches = images.reshape(B, C, nps, ps, nps, ps)
    patches = patches.transpose(0, 2, 4, 1, 3, 5).reshape(B, NUM_PATCHES, CPP)

    # token rows: row 0 (cls slot) and rows 1+P.. (padding) are zero
    tok = jnp.zeros((B, S, CPP), images.dtype).at[:, 1:1 + NUM_PATCHES].set(patches)
    # additive embedding: row0 = class_embedding + pos[0]; rows 1..P = pos[1:]; pad 0
    add = jnp.zeros((S, D), jnp.float32)
    add = add.at[0].set(p["class_embedding"][0] + p["pos_embedding"][0])
    add = add.at[1:1 + NUM_PATCHES].set(p["pos_embedding"][1:])

    return pl.pallas_call(
        _vision_embed_kernel,
        out_shape=jax.ShapeDtypeStruct((B, S, D), jnp.float32),
        grid=(B,),
        in_specs=[
            pl.BlockSpec((1, S, CPP), lambda b: (b, 0, 0)),
            pl.BlockSpec((CPP, D), lambda b: (0, 0)),
            pl.BlockSpec((S, D), lambda b: (0, 0)),
            pl.BlockSpec((1, D), lambda b: (0, 0)),
            pl.BlockSpec((1, D), lambda b: (0, 0)),
        ],
        out_specs=pl.BlockSpec((1, S, D), lambda b: (b, 0, 0)),
        compiler_params=pltpu.CompilerParams(
            dimension_semantics=("parallel",), vmem_limit_bytes=VMEM_LIMIT),
    )(tok, p["patch_w"], add, p["pre_ln_g"], p["pre_ln_b"])


# ----------------------------------------------------------------------------
# Fused encoder stack: grid = (batch, layer).  Per-layer weights stream over the
# layer axis; the residual stream is carried across layers in a VMEM scratch.
# ----------------------------------------------------------------------------
def _encoder_stack_kernel(h0_ref, ln1_g_ref, ln1_b_ref, wqkv_ref, bqkv_ref,
                          wo_ref, bo_ref, ln2_g_ref, ln2_b_ref,
                          w_fc1_ref, b_fc1_ref, w_fc2_ref, b_fc2_ref,
                          o_ref,
                          h_scr, qkv_scr, ctx_scr,
                          *, num_heads, head_dim, causal, valid_len, eps=LN_EPS):
    layer = pl.program_id(1)
    n_layers = pl.num_programs(1)

    @pl.when(layer == 0)
    def _():
        h_scr[...] = h0_ref[0].astype(jnp.float32)

    h = h_scr[...]                                    # (S, D) f32 residual stream
    S, D = h.shape
    scale = float(head_dim) ** -0.5

    def layer_norm(x, g, b):
        mu = jnp.mean(x, axis=-1, keepdims=True)
        var = jnp.mean(jnp.square(x - mu), axis=-1, keepdims=True)
        return (x - mu) * jax.lax.rsqrt(var + eps) * g + b

    # ---- LN1 (f32) + fused QKV projection (bf16 MXU, f32 accumulate)
    x = layer_norm(h, ln1_g_ref[0], ln1_b_ref[0])
    qkv_scr[...] = (jnp.dot(x.astype(jnp.bfloat16), wqkv_ref[0],
                            preferred_element_type=jnp.float32)
                    + bqkv_ref[0]).astype(jnp.bfloat16)

    # ---- additive attention bias (compile-time flags): key padding + causal
    need_bias = causal or (valid_len < S)
    if need_bias:
        col = jax.lax.broadcasted_iota(jnp.int32, (S, S), 1)
        bias = jnp.zeros((S, S), jnp.float32)
        if valid_len < S:                             # mask padded key tokens
            bias = jnp.where(col >= valid_len, jnp.float32(-1e9), bias)
        if causal:
            row = jax.lax.broadcasted_iota(jnp.int32, (S, S), 0)
            bias = bias + jnp.where(col > row, jnp.float32(-1e9), jnp.float32(0.0))

    # ---- per-head attention: softmax in f32, matmuls in bf16.  Each head's
    #      intermediates die at the ctx_scr store, so live ranges stay bounded.
    # TODO(synk): at real CLIP-L (H=16, S=577) convert to lax.fori_loop with
    #             flash-style KV tiling; at toy H=4/S=8 the static loop is fine.
    for hd in range(num_heads):
        q = qkv_scr[:, hd * head_dim:(hd + 1) * head_dim]                  # (S, Dh) bf16
        k = qkv_scr[:, D + hd * head_dim:D + (hd + 1) * head_dim]
        v = qkv_scr[:, 2 * D + hd * head_dim:2 * D + (hd + 1) * head_dim]
        s = jax.lax.dot_general(q, k, (((1,), (1,)), ((), ())),
                                preferred_element_type=jnp.float32) * scale
        if need_bias:
            s = s + bias
        s = s - jnp.max(s, axis=-1, keepdims=True)
        p = jnp.exp(s)
        p = p * pl.reciprocal(jnp.sum(p, axis=-1, keepdims=True), approx=True)
        ctx_scr[:, hd * head_dim:(hd + 1) * head_dim] = jnp.dot(
            p.astype(jnp.bfloat16), v, preferred_element_type=jnp.float32)

    # ---- single full-depth output projection + residual
    attn = jnp.dot(ctx_scr[...].astype(jnp.bfloat16), wo_ref[0],
                   preferred_element_type=jnp.float32) + bo_ref[0]
    h2 = h + attn

    # ---- LN2 + MLP (quick_gelu in f32, matmuls in bf16) + residual
    x2 = layer_norm(h2, ln2_g_ref[0], ln2_b_ref[0])
    f = jnp.dot(x2.astype(jnp.bfloat16), w_fc1_ref[0],
                preferred_element_type=jnp.float32) + b_fc1_ref[0]
    f = f * jax.nn.sigmoid(1.702 * f)                 # CLIP quick_gelu
    f2 = jnp.dot(f.astype(jnp.bfloat16), w_fc2_ref[0],
                 preferred_element_type=jnp.float32) + b_fc2_ref[0]
    h_new = h2 + f2
    h_scr[...] = h_new                                # carried to the next layer step

    @pl.when(layer == n_layers - 1)
    def _():
        o_ref[0] = h_new.astype(o_ref.dtype)


def encoder_stack(h0, stacked, num_layers, *, num_heads, head_dim, causal, valid_len):
    B, S, D = h0.shape
    MLP = stacked["w_fc1"].shape[-1]
    L = num_layers
    kernel = functools.partial(_encoder_stack_kernel, num_heads=num_heads,
                               head_dim=head_dim, causal=causal, valid_len=valid_len)

    def wspec(shape):
        # one layer's weight tile per grid step, streamed along the layer axis
        return pl.BlockSpec((1,) + shape, lambda b, l, s=shape: (l,) + (0,) * len(s))

    hspec = pl.BlockSpec((1, S, D), lambda b, l: (b, 0, 0))

    return pl.pallas_call(
        kernel,
        out_shape=jax.ShapeDtypeStruct((B, S, D), h0.dtype),
        grid=(B, L),
        in_specs=[
            hspec,
            wspec((1, D)), wspec((1, D)),             # ln1 g / b
            wspec((D, 3 * D)), wspec((1, 3 * D)),     # wqkv / bqkv
            wspec((D, D)), wspec((1, D)),             # wo / bo
            wspec((1, D)), wspec((1, D)),             # ln2 g / b
            wspec((D, MLP)), wspec((1, MLP)),         # fc1
            wspec((MLP, D)), wspec((1, D)),           # fc2
        ],
        out_specs=hspec,
        scratch_shapes=[
            pltpu.VMEM((S, D), jnp.float32),          # residual-stream carry
            pltpu.VMEM((S, 3 * D), jnp.bfloat16),     # fused qkv activations
            pltpu.VMEM((S, D), jnp.float32),          # merged per-head context
        ],
        compiler_params=pltpu.CompilerParams(
            dimension_semantics=("parallel", "arbitrary"),
            vmem_limit_bytes=VMEM_LIMIT),
    )(h0,
      stacked["ln1_g"][:L], stacked["ln1_b"][:L],
      stacked["wqkv"][:L], stacked["bqkv"][:L],
      stacked["wo"][:L], stacked["bo"][:L],
      stacked["ln2_g"][:L], stacked["ln2_b"][:L],
      stacked["w_fc1"][:L], stacked["b_fc1"][:L],
      stacked["w_fc2"][:L], stacked["b_fc2"][:L])


# ----------------------------------------------------------------------------
# Fused "head": text_projection + GELU(erf) + token-concat + image_text_infusion
# ----------------------------------------------------------------------------
def _head_kernel(img_ref, txt_ref, wp_ref, bp_ref, wi_img_ref, wi_txt_ref,
                 bi_ref, o_ref):
    # text_projection (bf16 MXU, f32 accumulate) + exact (erf) GELU in f32
    proj = jnp.dot(txt_ref[0].astype(jnp.bfloat16), wp_ref[...],
                   preferred_element_type=jnp.float32) + bp_ref[...]
    proj = 0.5 * proj * (1.0 + jax.lax.erf(proj * (1.0 / math.sqrt(2.0))))
    img = img_ref[0].astype(jnp.float32)
    # infusion over the token axis with the weight pre-split so the in-kernel
    # token concat is never materialized:
    #   out[p, d] = sum_t W[p, t] * cat(img, proj)[t, d] + b[p]
    out = (jnp.dot(wi_img_ref[...], img, preferred_element_type=jnp.float32)
           + jnp.dot(wi_txt_ref[...], proj, preferred_element_type=jnp.float32)
           + bi_ref[...])
    o_ref[0] = out.astype(o_ref.dtype)


def fused_projection_infusion(image_features, text_features, params):
    B, P, D = image_features.shape
    _, T, Dt = text_features.shape
    wi = params["infusion_w"]                          # (P, P + T)
    wi_img, wi_txt = wi[:, :P], wi[:, P:]              # split once (glue)
    return pl.pallas_call(
        _head_kernel,
        out_shape=jax.ShapeDtypeStruct((B, P, D), image_features.dtype),
        grid=(B,),
        in_specs=[
            pl.BlockSpec((1, P, D), lambda b: (b, 0, 0)),
            pl.BlockSpec((1, T, Dt), lambda b: (b, 0, 0)),
            pl.BlockSpec((Dt, D), lambda b: (0, 0)),
            pl.BlockSpec((1, D), lambda b: (0, 0)),
            pl.BlockSpec((P, P), lambda b: (0, 0)),
            pl.BlockSpec((P, T), lambda b: (0, 0)),
            pl.BlockSpec((P, 1), lambda b: (0, 0)),
        ],
        out_specs=pl.BlockSpec((1, P, D), lambda b: (b, 0, 0)),
        compiler_params=pltpu.CompilerParams(
            dimension_semantics=("parallel",), vmem_limit_bytes=VMEM_LIMIT),
    )(image_features, text_features, params["text_projection_w"],
      params["text_projection_b"], wi_img, wi_txt, params["infusion_b"])


# ----------------------------------------------------------------------------
# Towers
# ----------------------------------------------------------------------------
def vision_tower_forward(images, p):
    """images NCHW -> hidden_states[SELECT_LAYER], padded to (B, S_pad, D)."""
    h = vision_embed(images, p)
    n = _layers_to_run(SELECT_LAYER, VISION_LAYERS)    # skip unused final layers
    if n > 0:
        h = encoder_stack(h, p["layers"], n, num_heads=VISION_HEADS,
                          head_dim=VISION_HEAD_DIM, causal=False,
                          valid_len=VISION_SEQ)
    return h


def text_encoder_forward(instruct, p):
    """instruct (B, S) int ids -> hidden_states[MM_TEXT_SELECT_LAYER] (B, S, Dt)."""
    # TODO(synk): token-id embedding gather stays in plain JAX (data-dependent
    # row gather; no clean BlockSpec form at this scale).
    h = jnp.take(p["token_embedding"], instruct, axis=0) + p["pos_embedding"][None]
    n = _layers_to_run(MM_TEXT_SELECT_LAYER, TEXT_LAYERS)
    if n > 0:
        h = encoder_stack(h, p["layers"], n, num_heads=TEXT_HEADS,
                          head_dim=TEXT_HEAD_DIM, causal=True,
                          valid_len=TEXT_SEQ)
    return h


# ----------------------------------------------------------------------------
# CLIPVisionTower.forward (encoder_version == 'v1')
# ----------------------------------------------------------------------------
def clip_vision_tower_forward(images, instruct, params):
    # text_feature_select
    text_h = text_encoder_forward(instruct, params["text_encoder"])
    if MM_TEXT_SELECT_FEATURE == "patch":
        text_features = text_h[:, 1:]
    elif MM_TEXT_SELECT_FEATURE == "cls":
        text_features = text_h[:, :1]
    else:
        text_features = text_h

    # vision tower + feature_select (drop CLS token and the padding rows)
    vis_h = vision_tower_forward(images, params["vision_tower"])
    if SELECT_FEATURE == "patch":
        image_features = vis_h[:, 1:1 + NUM_PATCHES]
    else:  # 'cls_patch'
        image_features = vis_h[:, :1 + NUM_PATCHES]

    # GELU(text_projection(text)) -> concat along tokens -> Linear over token axis
    infused = fused_projection_infusion(image_features, text_features, params)
    # TODO(synk): the torch.equal runtime assert/print and the 'v3'
    # learnable_tokens addition are skipped (encoder_version == 'v1').
    return infused


# ----------------------------------------------------------------------------
# Deterministic synthetic parameter init (kernel-friendly layouts, bf16 weights)
# ----------------------------------------------------------------------------
def init_params(seed=0):
    base = jax.random.PRNGKey(seed)
    counter = [0]

    def nk():
        counter[0] += 1
        return jax.random.fold_in(base, counter[0])

    def normal(shape, scale=0.02, dtype=jnp.float32):
        return (scale * jax.random.normal(nk(), shape)).astype(dtype)

    def layer_stack(n, d, mlp):
        bf = jnp.bfloat16
        return dict(
            ln1_g=jnp.ones((n, 1, d), jnp.float32),
            ln1_b=jnp.zeros((n, 1, d), jnp.float32),
            wqkv=normal((n, d, 3 * d), dtype=bf),
            bqkv=jnp.zeros((n, 1, 3 * d), jnp.float32),
            wo=normal((n, d, d), dtype=bf),
            bo=jnp.zeros((n, 1, d), jnp.float32),
            ln2_g=jnp.ones((n, 1, d), jnp.float32),
            ln2_b=jnp.zeros((n, 1, d), jnp.float32),
            w_fc1=normal((n, d, mlp), dtype=bf),
            b_fc1=jnp.zeros((n, 1, mlp), jnp.float32),
            w_fc2=normal((n, mlp, d), dtype=bf),
            b_fc2=jnp.zeros((n, 1, d), jnp.float32),
        )

    vision = dict(
        patch_w=normal((CHANNELS * PATCH_SIZE * PATCH_SIZE, VISION_HIDDEN),
                       dtype=jnp.bfloat16),
        class_embedding=normal((1, VISION_HIDDEN)),
        pos_embedding=normal((VISION_SEQ, VISION_HIDDEN)),
        pre_ln_g=jnp.ones((1, VISION_HIDDEN), jnp.float32),
        pre_ln_b=jnp.zeros((1, VISION_HIDDEN), jnp.float32),
        layers=layer_stack(VISION_LAYERS, VISION_HIDDEN, VISION_MLP),
    )
    text = dict(
        token_embedding=normal((TEXT_VOCAB, TEXT_HIDDEN)),
        pos_embedding=normal((TEXT_SEQ, TEXT_HIDDEN)),
        layers=layer_stack(TEXT_LAYERS, TEXT_HIDDEN, TEXT_MLP),
    )

    # image_text_infusion init mirrors create_text_modules(): weight = [I | 0].T,
    # bias = 0; plus a small deterministic perturbation standing in for the
    # checkpoint load_text_modules() would normally read from disk.
    fusion = jnp.zeros((NUM_ADDED_TOKENS, NUM_PATCHES), jnp.float32)
    fusion = fusion.at[:NUM_PATCHES, :NUM_PATCHES].set(
        jnp.eye(NUM_PATCHES, dtype=jnp.float32))
    infusion_w = fusion.T + normal((NUM_PATCHES, NUM_ADDED_TOKENS), scale=0.01)
    infusion_b = normal((NUM_PATCHES, 1), scale=0.01)

    return dict(
        vision_tower=vision,
        text_encoder=text,
        text_projection_w=normal((TEXT_HIDDEN, VISION_HIDDEN), dtype=jnp.bfloat16),
        text_projection_b=jnp.zeros((1, VISION_HIDDEN), jnp.float32),
        infusion_w=infusion_w,
        infusion_b=infusion_b,
    )


if __name__ == "__main__":
    key = jax.random.PRNGKey(0)
    k_img, k_txt = jax.random.split(key)
    images = jax.random.normal(k_img, (BATCH, CHANNELS, IMAGE_SIZE, IMAGE_SIZE),
                               jnp.float32)
    instruct = jax.random.randint(k_txt, (BATCH, TEXT_SEQ), 0, TEXT_VOCAB,
                                  dtype=jnp.int32)

    params = init_params(seed=0)
    out = jax.jit(clip_vision_tower_forward)(images, instruct, params)
    out = jax.block_until_ready(out)

    assert out.shape == (BATCH, NUM_PATCHES, VISION_HIDDEN), out.shape
    assert bool(jnp.isfinite(out).all())
    print("KERNEL_OK")
</pallas_src>

<mosaic_0001>
module attributes {stable_mosaic.version = 11 : i64} {
  func.func @_vision_embed_kernel(%arg0: i32, %arg1: memref<1x8x192xf32, #tpu.memory_space<vmem>>, %arg2: memref<192x32xbf16, #tpu.memory_space<vmem>>, %arg3: memref<8x32xf32, #tpu.memory_space<vmem>>, %arg4: memref<1x32xf32, #tpu.memory_space<vmem>>, %arg5: memref<1x32xf32, #tpu.memory_space<vmem>>, %arg6: memref<1x8x32xf32, #tpu.memory_space<vmem>>) attributes {dimension_semantics = [#tpu.dimension_semantics<parallel>], iteration_bounds = array<i64: 2>, scalar_prefetch = 0 : i64, scratch_operands = 0 : i64, tpu.core_type = #tpu.core_type<tc>, window_params = [{transform_indices = @transform_0, window_bounds = array<i64: 1, 8, 192>}, {pipeline_mode = #tpu.pipeline_mode<synchronous>, transform_indices = @transform_1, window_bounds = array<i64: 192, 32>}, {pipeline_mode = #tpu.pipeline_mode<synchronous>, transform_indices = @transform_2, window_bounds = array<i64: 8, 32>}, {pipeline_mode = #tpu.pipeline_mode<synchronous>, transform_indices = @transform_3, window_bounds = array<i64: 1, 32>}, {pipeline_mode = #tpu.pipeline_mode<synchronous>, transform_indices = @transform_4, window_bounds = array<i64: 1, 32>}, {transform_indices = @transform_5, window_bounds = array<i64: 1, 8, 32>}]} {
    %c0 = arith.constant 0 : index
    %c0_0 = arith.constant 0 : index
    %c0_1 = arith.constant 0 : index
    %0 = vector.load %arg1[%c0, %c0_0, %c0_1] : memref<1x8x192xf32, #tpu.memory_space<vmem>>, vector<1x8x192xf32>
    %1 = vector.shape_cast %0 : vector<1x8x192xf32> to vector<8x192xf32>
    %2 = arith.truncf %1 : vector<8x192xf32> to vector<8x192xbf16>
    %c0_2 = arith.constant 0 : index
    %c0_3 = arith.constant 0 : index
    %3 = vector.load %arg2[%c0_2, %c0_3] : memref<192x32xbf16, #tpu.memory_space<vmem>>, vector<192x32xbf16>
    %cst = arith.constant dense<0.000000e+00> : vector<8x32xf32>
    %4 = tpu.matmul %2, %3, %cst {dimension_numbers = #tpu.dot_dimension_numbers<[1], [0], [0], [1], [0, 0, 1, 1], [], []>} : vector<8x192xbf16>, vector<192x32xbf16>, vector<8x32xf32> -> vector<8x32xf32>
    %c0_4 = arith.constant 0 : index
    %c0_5 = arith.constant 0 : index
    %5 = vector.load %arg3[%c0_4, %c0_5] : memref<8x32xf32, #tpu.memory_space<vmem>>, vector<8x32xf32>
    %6 = arith.addf %4, %5 : vector<8x32xf32>
    %cst_6 = arith.constant dense<0.000000e+00> : vector<8xf32>
    %7 = vector.multi_reduction <add>, %6, %cst_6 [1] : vector<8x32xf32> to vector<8xf32>
    %8 = vector.shape_cast %7 : vector<8xf32> to vector<8x1xf32>
    %cst_7 = arith.constant 3.200000e+01 : f32
    %9 = vector.broadcast %cst_7 : f32 to vector<8x1xf32>
    %10 = arith.divf %8, %9 : vector<8x1xf32>
    %11 = vector.broadcast %10 : vector<8x1xf32> to vector<8x32xf32>
    %12 = arith.subf %6, %11 : vector<8x32xf32>
    %13 = arith.mulf %12, %12 : vector<8x32xf32>
    %cst_8 = arith.constant dense<0.000000e+00> : vector<8xf32>
    %14 = vector.multi_reduction <add>, %13, %cst_8 [1] : vector<8x32xf32> to vector<8xf32>
    %15 = vector.shape_cast %14 : vector<8xf32> to vector<8x1xf32>
    %cst_9 = arith.constant 3.200000e+01 : f32
    %16 = vector.broadcast %cst_9 : f32 to vector<8x1xf32>
    %17 = arith.divf %15, %16 : vector<8x1xf32>
    %18 = vector.broadcast %10 : vector<8x1xf32> to vector<8x32xf32>
    %19 = arith.subf %6, %18 : vector<8x32xf32>
    %cst_10 = arith.constant 9.99999974E-6 : f32
    %20 = vector.broadcast %cst_10 : f32 to vector<8x1xf32>
    %21 = arith.addf %17, %20 : vector<8x1xf32>
    %22 = math.rsqrt %21 : vector<8x1xf32>
    %23 = vector.broadcast %22 : vector<8x1xf32> to vector<8x32xf32>
    %24 = arith.mulf %19, %23 : vector<8x32xf32>
    %c0_11 = arith.constant 0 : index
    %c0_12 = arith.constant 0 : index
    %25 = vector.load %arg4[%c0_11, %c0_12] : memref<1x32xf32, #tpu.memory_space<vmem>>, vector<1x32xf32>
    %26 = vector.broadcast %25 : vector<1x32xf32> to vector<8x32xf32>
    %27 = arith.mulf %24, %26 : vector<8x32xf32>
    %c0_13 = arith.constant 0 : index
    %c0_14 = arith.constant 0 : index
    %28 = vector.load %arg5[%c0_13, %c0_14] : memref<1x32xf32, #tpu.memory_space<vmem>>, vector<1x32xf32>
    %29 = vector.broadcast %28 : vector<1x32xf32> to vector<8x32xf32>
    %30 = arith.addf %27, %29 : vector<8x32xf32>
    %c0_15 = arith.constant 0 : index
    %c0_16 = arith.constant 0 : index
    %c0_17 = arith.constant 0 : index
    %31 = vector.load %arg6[%c0_15, %c0_16, %c0_17] : memref<1x8x32xf32, #tpu.memory_space<vmem>>, vector<1x8x32xf32>
    %32 = vector.shape_cast %31 : vector<1x8x32xf32> to vector<8x32xf32>
    %33 = vector.shape_cast %30 : vector<8x32xf32> to vector<1x8x32xf32>
    tpu.vector_store %arg6[%c0_15, %c0_16, %c0_17], %33 {strides = array<i32>} : memref<1x8x32xf32, #tpu.memory_space<vmem>>, vector<1x8x32xf32>,
    return
  }
  func.func @transform_0(%arg0: i32) -> (i32, i32, i32) {
    %c0_i32 = arith.constant 0 : i32
    %c0_i32_0 = arith.constant 0 : i32
    %c0_i32_1 = arith.constant 0 : i32
    return %arg0, %c0_i32, %c0_i32_0 : i32, i32, i32
  }
  func.func @transform_1(%arg0: i32) -> (i32, i32) {
    %c0_i32 = arith.constant 0 : i32
    %c0_i32_0 = arith.constant 0 : i32
    %c0_i32_1 = arith.constant 0 : i32
    return %c0_i32, %c0_i32_0 : i32, i32
  }
  func.func @transform_2(%arg0: i32) -> (i32, i32) {
    %c0_i32 = arith.constant 0 : i32
    %c0_i32_0 = arith.constant 0 : i32
    %c0_i32_1 = arith.constant 0 : i32
    return %c0_i32, %c0_i32_0 : i32, i32
  }
  func.func @transform_3(%arg0: i32) -> (i32, i32) {
    %c0_i32 = arith.constant 0 : i32
    %c0_i32_0 = arith.constant 0 : i32
    %c0_i32_1 = arith.constant 0 : i32
    return %c0_i32, %c0_i32_0 : i32, i32
  }
  func.func @transform_4(%arg0: i32) -> (i32, i32) {
    %c0_i32 = arith.constant 0 : i32
    %c0_i32_0 = arith.constant 0 : i32
    %c0_i32_1 = arith.constant 0 : i32
    return %c0_i32, %c0_i32_0 : i32, i32
  }
  func.func @transform_5(%arg0: i32) -> (i32, i32, i32) {
    %c0_i32 = arith.constant 0 : i32
    %c0_i32_0 = arith.constant 0 : i32
    %c0_i32_1 = arith.constant 0 : i32
    return %arg0, %c0_i32, %c0_i32_0 : i32, i32, i32
  }
}

module attributes {stable_mosaic.version = 11 : i64} {
  func.func @_encoder_stack_kernel(%arg0: i32, %arg1: i32, %arg2: memref<1x8x32xf32, #tpu.memory_space<vmem>>, %arg3: memref<1x1x32xf32, #tpu.memory_space<vmem>>, %arg4: memref<1x1x32xf32, #tpu.memory_space<vmem>>, %arg5: memref<1x32x96xbf16, #tpu.memory_space<vmem>>, %arg6: memref<1x1x96xf32, #tpu.memory_space<vmem>>, %arg7: memref<1x32x32xbf16, #tpu.memory_space<vmem>>, %arg8: memref<1x1x32xf32, #tpu.memory_space<vmem>>, %arg9: memref<1x1x32xf32, #tpu.memory_space<vmem>>, %arg10: memref<1x1x32xf32, #tpu.memory_space<vmem>>, %arg11: memref<1x32x64xbf16, #tpu.memory_space<vmem>>, %arg12: memref<1x1x64xf32, #tpu.memory_space<vmem>>, %arg13: memref<1x64x32xbf16, #tpu.memory_space<vmem>>, %arg14: memref<1x1x32xf32, #tpu.memory_space<vmem>>, %arg15: memref<1x8x32xf32, #tpu.memory_space<vmem>>, %arg16: memref<8x32xf32, #tpu.memory_space<vmem>>, %arg17: memref<8x96xbf16, #tpu.memory_space<vmem>>, %arg18: memref<8x32xf32, #tpu.memory_space<vmem>>) attributes {dimension_semantics = [#tpu.dimension_semantics<parallel>, #tpu.dimension_semantics<arbitrary>], iteration_bounds = array<i64: 2, 1>, scalar_prefetch = 0 : i64, scratch_operands = 3 : i64, tpu.core_type = #tpu.core_type<tc>, window_params = [{transform_indices = @transform_0, window_bounds = array<i64: 1, 8, 32>}, {transform_indices = @transform_1, window_bounds = array<i64: 1, 1, 32>}, {transform_indices = @transform_2, window_bounds = array<i64: 1, 1, 32>}, {transform_indices = @transform_3, window_bounds = array<i64: 1, 32, 96>}, {transform_indices = @transform_4, window_bounds = array<i64: 1, 1, 96>}, {transform_indices = @transform_5, window_bounds = array<i64: 1, 32, 32>}, {transform_indices = @transform_6, window_bounds = array<i64: 1, 1, 32>}, {transform_indices = @transform_7, window_bounds = array<i64: 1, 1, 32>}, {transform_indices = @transform_8, window_bounds = array<i64: 1, 1, 32>}, {transform_indices = @transform_9, window_bounds = array<i64: 1, 32, 64>}, {transform_indices = @transform_10, window_bounds = array<i64: 1, 1, 64>}, {transform_indices = @transform_11, window_bounds = array<i64: 1, 64, 32>}, {transform_indices = @transform_12, window_bounds = array<i64: 1, 1, 32>}, {transform_indices = @transform_13, window_bounds = array<i64: 1, 8, 32>}]} {
    %c0_i32 = arith.constant 0 : i32
    %0 = arith.cmpi eq, %arg1, %c0_i32 : i32
    %1 = arith.extui %0 : i1 to i32
    %c0_i32_0 = arith.constant 0 : i32
    %2 = arith.cmpi ne, %1, %c0_i32_0 : i32
    scf.if %2 {
      %c0_104 = arith.constant 0 : index
      %c0_105 = arith.constant 0 : index
      %c0_106 = arith.constant 0 : index
      %191 = vector.load %arg2[%c0_104, %c0_105, %c0_106] : memref<1x8x32xf32, #tpu.memory_space<vmem>>, vector<1x8x32xf32>
      %192 = vector.shape_cast %191 : vector<1x8x32xf32> to vector<8x32xf32>
      %c0_107 = arith.constant 0 : index
      %c0_108 = arith.constant 0 : index
      %193 = vector.load %arg16[%c0_107, %c0_108] : memref<8x32xf32, #tpu.memory_space<vmem>>, vector<8x32xf32>
      tpu.vector_store %arg16[%c0_107, %c0_108], %192 {strides = array<i32>} : memref<8x32xf32, #tpu.memory_space<vmem>>, vector<8x32xf32>,
    } else {
    }
    %c0 = arith.constant 0 : index
    %c0_1 = arith.constant 0 : index
    %3 = vector.load %arg16[%c0, %c0_1] : memref<8x32xf32, #tpu.memory_space<vmem>>, vector<8x32xf32>
    %c0_2 = arith.constant 0 : index
    %c0_3 = arith.constant 0 : index
    %c0_4 = arith.constant 0 : index
    %4 = vector.load %arg3[%c0_2, %c0_3, %c0_4] : memref<1x1x32xf32, #tpu.memory_space<vmem>>, vector<1x1x32xf32>
    %5 = vector.shape_cast %4 : vector<1x1x32xf32> to vector<1x32xf32>
    %c0_5 = arith.constant 0 : index
    %c0_6 = arith.constant 0 : index
    %c0_7 = arith.constant 0 : index
    %6 = vector.load %arg4[%c0_5, %c0_6, %c0_7] : memref<1x1x32xf32, #tpu.memory_space<vmem>>, vector<1x1x32xf32>
    %7 = vector.shape_cast %6 : vector<1x1x32xf32> to vector<1x32xf32>
    %cst = arith.constant dense<0.000000e+00> : vector<8xf32>
    %8 = vector.multi_reduction <add>, %3, %cst [1] : vector<8x32xf32> to vector<8xf32>
    %9 = vector.shape_cast %8 : vector<8xf32> to vector<8x1xf32>
    %cst_8 = arith.constant 3.200000e+01 : f32
    %10 = vector.broadcast %cst_8 : f32 to vector<8x1xf32>
    %11 = arith.divf %9, %10 : vector<8x1xf32>
    %12 = vector.broadcast %11 : vector<8x1xf32> to vector<8x32xf32>
    %13 = arith.subf %3, %12 : vector<8x32xf32>
    %14 = arith.mulf %13, %13 : vector<8x32xf32>
    %cst_9 = arith.constant dense<0.000000e+00> : vector<8xf32>
    %15 = vector.multi_reduction <add>, %14, %cst_9 [1] : vector<8x32xf32> to vector<8xf32>
    %16 = vector.shape_cast %15 : vector<8xf32> to vector<8x1xf32>
    %cst_10 = arith.constant 3.200000e+01 : f32
    %17 = vector.broadcast %cst_10 : f32 to vector<8x1xf32>
    %18 = arith.divf %16, %17 : vector<8x1xf32>
    %19 = vector.broadcast %11 : vector<8x1xf32> to vector<8x32xf32>
    %20 = arith.subf %3, %19 : vector<8x32xf32>
    %cst_11 = arith.constant 9.99999974E-6 : f32
    %21 = vector.broadcast %cst_11 : f32 to vector<8x1xf32>
    %22 = arith.addf %18, %21 : vector<8x1xf32>
    %23 = math.rsqrt %22 : vector<8x1xf32>
    %24 = vector.broadcast %23 : vector<8x1xf32> to vector<8x32xf32>
    %25 = arith.mulf %20, %24 : vector<8x32xf32>
    %26 = vector.broadcast %5 : vector<1x32xf32> to vector<8x32xf32>
    %27 = arith.mulf %25, %26 : vector<8x32xf32>
    %28 = vector.broadcast %7 : vector<1x32xf32> to vector<8x32xf32>
    %29 = arith.addf %27, %28 : vector<8x32xf32>
    %30 = arith.truncf %29 : vector<8x32xf32> to vector<8x32xbf16>
    %c0_12 = arith.constant 0 : index
    %c0_13 = arith.constant 0 : index
    %c0_14 = arith.constant 0 : index
    %31 = vector.load %arg5[%c0_12, %c0_13, %c0_14] : memref<1x32x96xbf16, #tpu.memory_space<vmem>>, vector<1x32x96xbf16>
    %32 = vector.shape_cast %31 : vector<1x32x96xbf16> to vector<32x96xbf16>
    %cst_15 = arith.constant dense<0.000000e+00> : vector<8x96xf32>
    %33 = tpu.matmul %30, %32, %cst_15 {dimension_numbers = #tpu.dot_dimension_numbers<[1], [0], [0], [1], [0, 0, 1, 1], [], []>} : vector<8x32xbf16>, vector<32x96xbf16>, vector<8x96xf32> -> vector<8x96xf32>
    %c0_16 = arith.constant 0 : index
    %c0_17 = arith.constant 0 : index
    %c0_18 = arith.constant 0 : index
    %34 = vector.load %arg6[%c0_16, %c0_17, %c0_18] : memref<1x1x96xf32, #tpu.memory_space<vmem>>, vector<1x1x96xf32>
    %35 = vector.shape_cast %34 : vector<1x1x96xf32> to vector<1x96xf32>
    %36 = vector.broadcast %35 : vector<1x96xf32> to vector<8x96xf32>
    %37 = arith.addf %33, %36 : vector<8x96xf32>
    %38 = arith.truncf %37 : vector<8x96xf32> to vector<8x96xbf16>
    %c0_19 = arith.constant 0 : index
    %c0_20 = arith.constant 0 : index
    %39 = vector.load %arg17[%c0_19, %c0_20] : memref<8x96xbf16, #tpu.memory_space<vmem>>, vector<8x96xbf16>
    tpu.vector_store %arg17[%c0_19, %c0_20], %38 {strides = array<i32>} : memref<8x96xbf16, #tpu.memory_space<vmem>>, vector<8x96xbf16>,
    %40 = tpu.iota {dimensions = array<i32: 1>} : vector<8x8xi32>
    %cst_21 = arith.constant 0.000000e+00 : f32
    %41 = vector.broadcast %cst_21 : f32 to vector<8x8xf32>
    %c5_i32 = arith.constant 5 : i32
    %42 = vector.broadcast %c5_i32 : i32 to vector<8x8xi32>
    %43 = arith.cmpi sge, %40, %42 : vector<8x8xi32>
    %cst_22 = arith.constant -1.000000e+09 : f32
    %44 = vector.broadcast %cst_22 : f32 to vector<8x8xf32>
    %45 = arith.select %43, %44, %41 : vector<8x8xi1>, vector<8x8xf32>
    %c0_23 = arith.constant 0 : index
    %c0_24 = arith.constant 0 : index
    %46 = vector.load %arg17[%c0_23, %c0_24] : memref<8x96xbf16, #tpu.memory_space<vmem>>, vector<8x8xbf16>
    %c0_25 = arith.constant 0 : index
    %c32 = arith.constant 32 : index
    %47 = vector.load %arg17[%c0_25, %c32] : memref<8x96xbf16, #tpu.memory_space<vmem>>, vector<8x8xbf16>
    %c0_26 = arith.constant 0 : index
    %c64 = arith.constant 64 : index
    %48 = vector.load %arg17[%c0_26, %c64] : memref<8x96xbf16, #tpu.memory_space<vmem>>, vector<8x8xbf16>
    %cst_27 = arith.constant dense<0.000000e+00> : vector<8x8xf32>
    %49 = tpu.matmul %46, %47, %cst_27 {dimension_numbers = #tpu.dot_dimension_numbers<[1], [1], [0], [0], [0, 0, 1, 0], [], []>} : vector<8x8xbf16>, vector<8x8xbf16>, vector<8x8xf32> -> vector<8x8xf32>
    %cst_28 = arith.constant 0.353553385 : f32
    %50 = vector.broadcast %cst_28 : f32 to vector<8x8xf32>
    %51 = arith.mulf %49, %50 : vector<8x8xf32>
    %52 = arith.addf %51, %45 : vector<8x8xf32>
    %cst_29 = arith.constant dense<0xFF800000> : vector<8xf32>
    %53 = vector.multi_reduction <maximumf>, %52, %cst_29 [1] : vector<8x8xf32> to vector<8xf32>
    %54 = vector.shape_cast %53 : vector<8xf32> to vector<8x1xf32>
    %55 = vector.broadcast %54 : vector<8x1xf32> to vector<8x8xf32>
    %56 = arith.subf %52, %55 : vector<8x8xf32>
    %57 = math.exp %56 : vector<8x8xf32>
    %cst_30 = arith.constant dense<0.000000e+00> : vector<8xf32>
    %58 = vector.multi_reduction <add>, %57, %cst_30 [1] : vector<8x8xf32> to vector<8xf32>
    %59 = vector.shape_cast %58 : vector<8xf32> to vector<8x1xf32>
    %60 = tpu.reciprocal %59 {approx = true} : vector<8x1xf32> -> vector<8x1xf32>
    %61 = vector.broadcast %60 : vector<8x1xf32> to vector<8x8xf32>
    %62 = arith.mulf %57, %61 : vector<8x8xf32>
    %63 = arith.truncf %62 : vector<8x8xf32> to vector<8x8xbf16>
    %cst_31 = arith.constant dense<0.000000e+00> : vector<8x8xf32>
    %64 = tpu.matmul %63, %48, %cst_31 {dimension_numbers = #tpu.dot_dimension_numbers<[1], [0], [0], [1], [0, 0, 1, 1], [], []>} : vector<8x8xbf16>, vector<8x8xbf16>, vector<8x8xf32> -> vector<8x8xf32>
    %c0_32 = arith.constant 0 : index
    %c0_33 = arith.constant 0 : index
    %65 = vector.load %arg18[%c0_32, %c0_33] : memref<8x32xf32, #tpu.memory_space<vmem>>, vector<8x8xf32>
    tpu.vector_store %arg18[%c0_32, %c0_33], %64 {strides = array<i32>} : memref<8x32xf32, #tpu.memory_space<vmem>>, vector<8x8xf32>,
    %c0_34 = arith.constant 0 : index
    %c8 = arith.constant 8 : index
    %66 = vector.load %arg17[%c0_34, %c8] : memref<8x96xbf16, #tpu.memory_space<vmem>>, vector<8x8xbf16>
    %c0_35 = arith.constant 0 : index
    %c40 = arith.constant 40 : index
    %67 = vector.load %arg17[%c0_35, %c40] : memref<8x96xbf16, #tpu.memory_space<vmem>>, vector<8x8xbf16>
    %c0_36 = arith.constant 0 : index
    %c72 = arith.constant 72 : index
    %68 = vector.load %arg17[%c0_36, %c72] : memref<8x96xbf16, #tpu.memory_space<vmem>>, vector<8x8xbf16>
    %cst_37 = arith.constant dense<0.000000e+00> : vector<8x8xf32>
    %69 = tpu.matmul %66, %67, %cst_37 {dimension_numbers = #tpu.dot_dimension_numbers<[1], [1], [0], [0], [0, 0, 1, 0], [], []>} : vector<8x8xbf16>, vector<8x8xbf16>, vector<8x8xf32> -> vector<8x8xf32>
    %cst_38 = arith.constant 0.353553385 : f32
    %70 = vector.broadcast %cst_38 : f32 to vector<8x8xf32>
    %71 = arith.mulf %69, %70 : vector<8x8xf32>
    %72 = arith.addf %71, %45 : vector<8x8xf32>
    %cst_39 = arith.constant dense<0xFF800000> : vector<8xf32>
    %73 = vector.multi_reduction <maximumf>, %72, %cst_39 [1] : vector<8x8xf32> to vector<8xf32>
    %74 = vector.shape_cast %73 : vector<8xf32> to vector<8x1xf32>
    %75 = vector.broadcast %74 : vector<8x1xf32> to vector<8x8xf32>
    %76 = arith.subf %72, %75 : vector<8x8xf32>
    %77 = math.exp %76 : vector<8x8xf32>
    %cst_40 = arith.constant dense<0.000000e+00> : vector<8xf32>
    %78 = vector.multi_reduction <add>, %77, %cst_40 [1] : vector<8x8xf32> to vector<8xf32>
    %79 = vector.shape_cast %78 : vector<8xf32> to vector<8x1xf32>
    %80 = tpu.reciprocal %79 {approx = true} : vector<8x1xf32> -> vector<8x1xf32>
    %81 = vector.broadcast %80 : vector<8x1xf32> to vector<8x8xf32>
    %82 = arith.mulf %77, %81 : vector<8x8xf32>
    %83 = arith.truncf %82 : vector<8x8xf32> to vector<8x8xbf16>
    %cst_41 = arith.constant dense<0.000000e+00> : vector<8x8xf32>
    %84 = tpu.matmul %83, %68, %cst_41 {dimension_numbers = #tpu.dot_dimension_numbers<[1], [0], [0], [1], [0, 0, 1, 1], [], []>} : vector<8x8xbf16>, vector<8x8xbf16>, vector<8x8xf32> -> vector<8x8xf32>
    %c0_42 = arith.constant 0 : index
    %c8_43 = arith.constant 8 : index
    %85 = vector.load %arg18[%c0_42, %c8_43] : memref<8x32xf32, #tpu.memory_space<vmem>>, vector<8x8xf32>
    tpu.vector_store %arg18[%c0_42, %c8_43], %84 {strides = array<i32>} : memref<8x32xf32, #tpu.memory_space<vmem>>, vector<8x8xf32>,
    %c0_44 = arith.constant 0 : index
    %c16 = arith.constant 16 : index
    %86 = vector.load %arg17[%c0_44, %c16] : memref<8x96xbf16, #tpu.memory_space<vmem>>, vector<8x8xbf16>
    %c0_45 = arith.constant 0 : index
    %c48 = arith.constant 48 : index
    %87 = vector.load %arg17[%c0_45, %c48] : memref<8x96xbf16, #tpu.memory_space<vmem>>, vector<8x8xbf16>
    %c0_46 = arith.constant 0 : index
    %c80 = arith.constant 80 : index
    %88 = vector.load %arg17[%c0_46, %c80] : memref<8x96xbf16, #tpu.memory_space<vmem>>, vector<8x8xbf16>
    %cst_47 = arith.constant dense<0.000000e+00> : vector<8x8xf32>
    %89 = tpu.matmul %86, %87, %cst_47 {dimension_numbers = #tpu.dot_dimension_numbers<[1], [1], [0], [0], [0, 0, 1, 0], [], []>} : vector<8x8xbf16>, vector<8x8xbf16>, vector<8x8xf32> -> vector<8x8xf32>
    %cst_48 = arith.constant 0.353553385 : f32
    %90 = vector.broadcast %cst_48 : f32 to vector<8x8xf32>
    %91 = arith.mulf %89, %90 : vector<8x8xf32>
    %92 = arith.addf %91, %45 : vector<8x8xf32>
    %cst_49 = arith.constant dense<0xFF800000> : vector<8xf32>
    %93 = vector.multi_reduction <maximumf>, %92, %cst_49 [1] : vector<8x8xf32> to vector<8xf32>
    %94 = vector.shape_cast %93 : vector<8xf32> to vector<8x1xf32>
    %95 = vector.broadcast %94 : vector<8x1xf32> to vector<8x8xf32>
    %96 = arith.subf %92, %95 : vector<8x8xf32>
    %97 = math.exp %96 : vector<8x8xf32>
    %cst_50 = arith.constant dense<0.000000e+00> : vector<8xf32>
    %98 = vector.multi_reduction <add>, %97, %cst_50 [1] : vector<8x8xf32> to vector<8xf32>
    %99 = vector.shape_cast %98 : vector<8xf32> to vector<8x1xf32>
    %100 = tpu.reciprocal %99 {approx = true} : vector<8x1xf32> -> vector<8x1xf32>
    %101 = vector.broadcast %100 : vector<8x1xf32> to vector<8x8xf32>
    %102 = arith.mulf %97, %101 : vector<8x8xf32>
    %103 = arith.truncf %102 : vector<8x8xf32> to vector<8x8xbf16>
    %cst_51 = arith.constant dense<0.000000e+00> : vector<8x8xf32>
    %104 = tpu.matmul %103, %88, %cst_51 {dimension_numbers = #tpu.dot_dimension_numbers<[1], [0], [0], [1], [0, 0, 1, 1], [], []>} : vector<8x8xbf16>, vector<8x8xbf16>, vector<8x8xf32> -> vector<8x8xf32>
    %c0_52 = arith.constant 0 : index
    %c16_53 = arith.constant 16 : index
    %105 = vector.load %arg18[%c0_52, %c16_53] : memref<8x32xf32, #tpu.memory_space<vmem>>, vector<8x8xf32>
    tpu.vector_store %arg18[%c0_52, %c16_53], %104 {strides = array<i32>} : memref<8x32xf32, #tpu.memory_space<vmem>>, vector<8x8xf32>,
    %c0_54 = arith.constant 0 : index
    %c24 = arith.constant 24 : index
    %106 = vector.load %arg17[%c0_54, %c24] : memref<8x96xbf16, #tpu.memory_space<vmem>>, vector<8x8xbf16>
    %c0_55 = arith.constant 0 : index
    %c56 = arith.constant 56 : index
    %107 = vector.load %arg17[%c0_55, %c56] : memref<8x96xbf16, #tpu.memory_space<vmem>>, vector<8x8xbf16>
    %c0_56 = arith.constant 0 : index
    %c88 = arith.constant 88 : index
    %108 = vector.load %arg17[%c0_56, %c88] : memref<8x96xbf16, #tpu.memory_space<vmem>>, vector<8x8xbf16>
    %cst_57 = arith.constant dense<0.000000e+00> : vector<8x8xf32>
    %109 = tpu.matmul %106, %107, %cst_57 {dimension_numbers = #tpu.dot_dimension_numbers<[1], [1], [0], [0], [0, 0, 1, 0], [], []>} : vector<8x8xbf16>, vector<8x8xbf16>, vector<8x8xf32> -> vector<8x8xf32>
    %cst_58 = arith.constant 0.353553385 : f32
    %110 = vector.broadcast %cst_58 : f32 to vector<8x8xf32>
    %111 = arith.mulf %109, %110 : vector<8x8xf32>
    %112 = arith.addf %111, %45 : vector<8x8xf32>
    %cst_59 = arith.constant dense<0xFF800000> : vector<8xf32>
    %113 = vector.multi_reduction <maximumf>, %112, %cst_59 [1] : vector<8x8xf32> to vector<8xf32>
    %114 = vector.shape_cast %113 : vector<8xf32> to vector<8x1xf32>
    %115 = vector.broadcast %114 : vector<8x1xf32> to vector<8x8xf32>
    %116 = arith.subf %112, %115 : vector<8x8xf32>
    %117 = math.exp %116 : vector<8x8xf32>
    %cst_60 = arith.constant dense<0.000000e+00> : vector<8xf32>
    %118 = vector.multi_reduction <add>, %117, %cst_60 [1] : vector<8x8xf32> to vector<8xf32>
    %119 = vector.shape_cast %118 : vector<8xf32> to vector<8x1xf32>
    %120 = tpu.reciprocal %119 {approx = true} : vector<8x1xf32> -> vector<8x1xf32>
    %121 = vector.broadcast %120 : vector<8x1xf32> to vector<8x8xf32>
    %122 = arith.mulf %117, %121 : vector<8x8xf32>
    %123 = arith.truncf %122 : vector<8x8xf32> to vector<8x8xbf16>
    %cst_61 = arith.constant dense<0.000000e+00> : vector<8x8xf32>
    %124 = tpu.matmul %123, %108, %cst_61 {dimension_numbers = #tpu.dot_dimension_numbers<[1], [0], [0], [1], [0, 0, 1, 1], [], []>} : vector<8x8xbf16>, vector<8x8xbf16>, vector<8x8xf32> -> vector<8x8xf32>
    %c0_62 = arith.constant 0 : index
    %c24_63 = arith.constant 24 : index
    %125 = vector.load %arg18[%c0_62, %c24_63] : memref<8x32xf32, #tpu.memory_space<vmem>>, vector<8x8xf32>
    tpu.vector_store %arg18[%c0_62, %c24_63], %124 {strides = array<i32>} : memref<8x32xf32, #tpu.memory_space<vmem>>, vector<8x8xf32>,
    %c0_64 = arith.constant 0 : index
    %c0_65 = arith.constant 0 : index
    %126 = vector.load %arg18[%c0_64, %c0_65] : memref<8x32xf32, #tpu.memory_space<vmem>>, vector<8x32xf32>
    %127 = arith.truncf %126 : vector<8x32xf32> to vector<8x32xbf16>
    %c0_66 = arith.constant 0 : index
    %c0_67 = arith.constant 0 : index
    %c0_68 = arith.constant 0 : index
    %128 = vector.load %arg7[%c0_66, %c0_67, %c0_68] : memref<1x32x32xbf16, #tpu.memory_space<vmem>>, vector<1x32x32xbf16>
    %129 = vector.shape_cast %128 : vector<1x32x32xbf16> to vector<32x32xbf16>
    %cst_69 = arith.constant dense<0.000000e+00> : vector<8x32xf32>
    %130 = tpu.matmul %127, %129, %cst_69 {dimension_numbers = #tpu.dot_dimension_numbers<[1], [0], [0], [1], [0, 0, 1, 1], [], []>} : vector<8x32xbf16>, vector<32x32xbf16>, vector<8x32xf32> -> vector<8x32xf32>
    %c0_70 = arith.constant 0 : index
    %c0_71 = arith.constant 0 : index
    %c0_72 = arith.constant 0 : index
    %131 = vector.load %arg8[%c0_70, %c0_71, %c0_72] : memref<1x1x32xf32, #tpu.memory_space<vmem>>, vector<1x1x32xf32>
    %132 = vector.shape_cast %131 : vector<1x1x32xf32> to vector<1x32xf32>
    %133 = vector.broadcast %132 : vector<1x32xf32> to vector<8x32xf32>
    %134 = arith.addf %130, %133 : vector<8x32xf32>
    %135 = arith.addf %3, %134 : vector<8x32xf32>
    %c0_73 = arith.constant 0 : index
    %c0_74 = arith.constant 0 : index
    %c0_75 = arith.constant 0 : index
    %136 = vector.load %arg9[%c0_73, %c0_74, %c0_75] : memref<1x1x32xf32, #tpu.memory_space<vmem>>, vector<1x1x32xf32>
    %137 = vector.shape_cast %136 : vector<1x1x32xf32> to vector<1x32xf32>
    %c0_76 = arith.constant 0 : index
    %c0_77 = arith.constant 0 : index
    %c0_78 = arith.constant 0 : index
    %138 = vector.load %arg10[%c0_76, %c0_77, %c0_78] : memref<1x1x32xf32, #tpu.memory_space<vmem>>, vector<1x1x32xf32>
    %139 = vector.shape_cast %138 : vector<1x1x32xf32> to vector<1x32xf32>
    %cst_79 = arith.constant dense<0.000000e+00> : vector<8xf32>
    %140 = vector.multi_reduction <add>, %135, %cst_79 [1] : vector<8x32xf32> to vector<8xf32>
    %141 = vector.shape_cast %140 : vector<8xf32> to vector<8x1xf32>
    %cst_80 = arith.constant 3.200000e+01 : f32
    %142 = vector.broadcast %cst_80 : f32 to vector<8x1xf32>
    %143 = arith.divf %141, %142 : vector<8x1xf32>
    %144 = vector.broadcast %143 : vector<8x1xf32> to vector<8x32xf32>
    %145 = arith.subf %135, %144 : vector<8x32xf32>
    %146 = arith.mulf %145, %145 : vector<8x32xf32>
    %cst_81 = arith.constant dense<0.000000e+00> : vector<8xf32>
    %147 = vector.multi_reduction <add>, %146, %cst_81 [1] : vector<8x32xf32> to vector<8xf32>
    %148 = vector.shape_cast %147 : vector<8xf32> to vector<8x1xf32>
    %cst_82 = arith.constant 3.200000e+01 : f32
    %149 = vector.broadcast %cst_82 : f32 to vector<8x1xf32>
    %150 = arith.divf %148, %149 : vector<8x1xf32>
    %151 = vector.broadcast %143 : vector<8x1xf32> to vector<8x32xf32>
    %152 = arith.subf %135, %151 : vector<8x32xf32>
    %cst_83 = arith.constant 9.99999974E-6 : f32
    %153 = vector.broadcast %cst_83 : f32 to vector<8x1xf32>
    %154 = arith.addf %150, %153 : vector<8x1xf32>
    %155 = math.rsqrt %154 : vector<8x1xf32>
    %156 = vector.broadcast %155 : vector<8x1xf32> to vector<8x32xf32>
    %157 = arith.mulf %152, %156 : vector<8x32xf32>
    %158 = vector.broadcast %137 : vector<1x32xf32> to vector<8x32xf32>
    %159 = arith.mulf %157, %158 : vector<8x32xf32>
    %160 = vector.broadcast %139 : vector<1x32xf32> to vector<8x32xf32>
    %161 = arith.addf %159, %160 : vector<8x32xf32>
    %162 = arith.truncf %161 : vector<8x32xf32> to vector<8x32xbf16>
    %c0_84 = arith.constant 0 : index
    %c0_85 = arith.constant 0 : index
    %c0_86 = arith.constant 0 : index
    %163 = vector.load %arg11[%c0_84, %c0_85, %c0_86] : memref<1x32x64xbf16, #tpu.memory_space<vmem>>, vector<1x32x64xbf16>
    %164 = vector.shape_cast %163 : vector<1x32x64xbf16> to vector<32x64xbf16>
    %cst_87 = arith.constant dense<0.000000e+00> : vector<8x64xf32>
    %165 = tpu.matmul %162, %164, %cst_87 {dimension_numbers = #tpu.dot_dimension_numbers<[1], [0], [0], [1], [0, 0, 1, 1], [], []>} : vector<8x32xbf16>, vector<32x64xbf16>, vector<8x64xf32> -> vector<8x64xf32>
    %c0_88 = arith.constant 0 : index
    %c0_89 = arith.constant 0 : index
    %c0_90 = arith.constant 0 : index
    %166 = vector.load %arg12[%c0_88, %c0_89, %c0_90] : memref<1x1x64xf32, #tpu.memory_space<vmem>>, vector<1x1x64xf32>
    %167 = vector.shape_cast %166 : vector<1x1x64xf32> to vector<1x64xf32>
    %168 = vector.broadcast %167 : vector<1x64xf32> to vector<8x64xf32>
    %169 = arith.addf %165, %168 : vector<8x64xf32>
    %cst_91 = arith.constant 1.702000e+00 : f32
    %170 = vector.broadcast %cst_91 : f32 to vector<8x64xf32>
    %171 = arith.mulf %170, %169 : vector<8x64xf32>
    %172 = arith.negf %171 : vector<8x64xf32>
    %173 = math.exp %172 : vector<8x64xf32>
    %cst_92 = arith.constant 1.000000e+00 : f32
    %174 = vector.broadcast %cst_92 : f32 to vector<8x64xf32>
    %175 = arith.addf %174, %173 : vector<8x64xf32>
    %176 = arith.divf %174, %175 : vector<8x64xf32>
    %177 = arith.mulf %169, %176 : vector<8x64xf32>
    %178 = arith.truncf %177 : vector<8x64xf32> to vector<8x64xbf16>
    %c0_93 = arith.constant 0 : index
    %c0_94 = arith.constant 0 : index
    %c0_95 = arith.constant 0 : index
    %179 = vector.load %arg13[%c0_93, %c0_94, %c0_95] : memref<1x64x32xbf16, #tpu.memory_space<vmem>>, vector<1x64x32xbf16>
    %180 = vector.shape_cast %179 : vector<1x64x32xbf16> to vector<64x32xbf16>
    %cst_96 = arith.constant dense<0.000000e+00> : vector<8x32xf32>
    %181 = tpu.matmul %178, %180, %cst_96 {dimension_numbers = #tpu.dot_dimension_numbers<[1], [0], [0], [1], [0, 0, 1, 1], [], []>} : vector<8x64xbf16>, vector<64x32xbf16>, vector<8x32xf32> -> vector<8x32xf32>
    %c0_97 = arith.constant 0 : index
    %c0_98 = arith.constant 0 : index
    %c0_99 = arith.constant 0 : index
    %182 = vector.load %arg14[%c0_97, %c0_98, %c0_99] : memref<1x1x32xf32, #tpu.memory_space<vmem>>, vector<1x1x32xf32>
    %183 = vector.shape_cast %182 : vector<1x1x32xf32> to vector<1x32xf32>
    %184 = vector.broadcast %183 : vector<1x32xf32> to vector<8x32xf32>
    %185 = arith.addf %181, %184 : vector<8x32xf32>
    %186 = arith.addf %135, %185 : vector<8x32xf32>
    %c0_100 = arith.constant 0 : index
    %c0_101 = arith.constant 0 : index
    %187 = vector.load %arg16[%c0_100, %c0_101] : memref<8x32xf32, #tpu.memory_space<vmem>>, vector<8x32xf32>
    tpu.vector_store %arg16[%c0_100, %c0_101], %186 {strides = array<i32>} : memref<8x32xf32, #tpu.memory_space<vmem>>, vector<8x32xf32>,
    %c0_i32_102 = arith.constant 0 : i32
    %188 = arith.cmpi eq, %arg1, %c0_i32_102 : i32
    %189 = arith.extui %188 : i1 to i32
    %c0_i32_103 = arith.constant 0 : i32
    %190 = arith.cmpi ne, %189, %c0_i32_103 : i32
    scf.if %190 {
      %c0_104 = arith.constant 0 : index
      %c0_105 = arith.constant 0 : index
      %c0_106 = arith.constant 0 : index
      %191 = vector.load %arg15[%c0_104, %c0_105, %c0_106] : memref<1x8x32xf32, #tpu.memory_space<vmem>>, vector<1x8x32xf32>
      %192 = vector.shape_cast %191 : vector<1x8x32xf32> to vector<8x32xf32>
      %193 = vector.shape_cast %186 : vector<8x32xf32> to vector<1x8x32xf32>
      tpu.vector_store %arg15[%c0_104, %c0_105, %c0_106], %193 {strides = array<i32>} : memref<1x8x32xf32, #tpu.memory_space<vmem>>, vector<1x8x32xf32>,
    } else {
    }
    return
  }
  func.func @transform_0(%arg0: i32, %arg1: i32) -> (i32, i32, i32) {
    %c0_i32 = arith.constant 0 : i32
    %c0_i32_0 = arith.constant 0 : i32
    %c0_i32_1 = arith.constant 0 : i32
    return %arg0, %c0_i32, %c0_i32_0 : i32, i32, i32
  }
  func.func @transform_1(%arg0: i32, %arg1: i32) -> (i32, i32, i32) {
    %c0_i32 = arith.constant 0 : i32
    %c0_i32_0 = arith.constant 0 : i32
    %c0_i32_1 = arith.constant 0 : i32
    return %arg1, %c0_i32, %c0_i32_0 : i32, i32, i32
  }
  func.func @transform_2(%arg0: i32, %arg1: i32) -> (i32, i32, i32) {
    %c0_i32 = arith.constant 0 : i32
    %c0_i32_0 = arith.constant 0 : i32
    %c0_i32_1 = arith.constant 0 : i32
    return %arg1, %c0_i32, %c0_i32_0 : i32, i32, i32
  }
  func.func @transform_3(%arg0: i32, %arg1: i32) -> (i32, i32, i32) {
    %c0_i32 = arith.constant 0 : i32
    %c0_i32_0 = arith.constant 0 : i32
    %c0_i32_1 = arith.constant 0 : i32
    return %arg1, %c0_i32, %c0_i32_0 : i32, i32, i32
  }
  func.func @transform_4(%arg0: i32, %arg1: i32) -> (i32, i32, i32) {
    %c0_i32 = arith.constant 0 : i32
    %c0_i32_0 = arith.constant 0 : i32
    %c0_i32_1 = arith.constant 0 : i32
    return %arg1, %c0_i32, %c0_i32_0 : i32, i32, i32
  }
  func.func @transform_5(%arg0: i32, %arg1: i32) -> (i32, i32, i32) {
    %c0_i32 = arith.constant 0 : i32
    %c0_i32_0 = arith.constant 0 : i32
    %c0_i32_1 = arith.constant 0 : i32
    return %arg1, %c0_i32, %c0_i32_0 : i32, i32, i32
  }
  func.func @transform_6(%arg0: i32, %arg1: i32) -> (i32, i32, i32) {
    %c0_i32 = arith.constant 0 : i32
    %c0_i32_0 = arith.constant 0 : i32
    %c0_i32_1 = arith.constant 0 : i32
    return %arg1, %c0_i32, %c0_i32_0 : i32, i32, i32
  }
  func.func @transform_7(%arg0: i32, %arg1: i32) -> (i32, i32, i32) {
    %c0_i32 = arith.constant 0 : i32
    %c0_i32_0 = arith.constant 0 : i32
    %c0_i32_1 = arith.constant 0 : i32
    return %arg1, %c0_i32, %c0_i32_0 : i32, i32, i32
  }
  func.func @transform_8(%arg0: i32, %arg1: i32) -> (i32, i32, i32) {
    %c0_i32 = arith.constant 0 : i32
    %c0_i32_0 = arith.constant 0 : i32
    %c0_i32_1 = arith.constant 0 : i32
    return %arg1, %c0_i32, %c0_i32_0 : i32, i32, i32
  }
  func.func @transform_9(%arg0: i32, %arg1: i32) -> (i32, i32, i32) {
    %c0_i32 = arith.constant 0 : i32
    %c0_i32_0 = arith.constant 0 : i32
    %c0_i32_1 = arith.constant 0 : i32
    return %arg1, %c0_i32, %c0_i32_0 : i32, i32, i32
  }
  func.func @transform_10(%arg0: i32, %arg1: i32) -> (i32, i32, i32) {
    %c0_i32 = arith.constant 0 : i32
    %c0_i32_0 = arith.constant 0 : i32
    %c0_i32_1 = arith.constant 0 : i32
    return %arg1, %c0_i32, %c0_i32_0 : i32, i32, i32
  }
  func.func @transform_11(%arg0: i32, %arg1: i32) -> (i32, i32, i32) {
    %c0_i32 = arith.constant 0 : i32
    %c0_i32_0 = arith.constant 0 : i32
    %c0_i32_1 = arith.constant 0 : i32
    return %arg1, %c0_i32, %c0_i32_0 : i32, i32, i32
  }
  func.func @transform_12(%arg0: i32, %arg1: i32) -> (i32, i32, i32) {
    %c0_i32 = arith.constant 0 : i32
    %c0_i32_0 = arith.constant 0 : i32
    %c0_i32_1 = arith.constant 0 : i32
    return %arg1, %c0_i32, %c0_i32_0 : i32, i32, i32
  }
  func.func @transform_13(%arg0: i32, %arg1: i32) -> (i32, i32, i32) {
    %c0_i32 = arith.constant 0 : i32
    %c0_i32_0 = arith.constant 0 : i32
    %c0_i32_1 = arith.constant 0 : i32
    return %arg0, %c0_i32, %c0_i32_0 : i32, i32, i32
  }
}

module attributes {stable_mosaic.version = 11 : i64} {
  func.func @_encoder_stack_kernel(%arg0: i32, %arg1: i32, %arg2: memref<1x8x16xf32, #tpu.memory_space<vmem>>, %arg3: memref<1x1x16xf32, #tpu.memory_space<vmem>>, %arg4: memref<1x1x16xf32, #tpu.memory_space<vmem>>, %arg5: memref<1x16x48xbf16, #tpu.memory_space<vmem>>, %arg6: memref<1x1x48xf32, #tpu.memory_space<vmem>>, %arg7: memref<1x16x16xbf16, #tpu.memory_space<vmem>>, %arg8: memref<1x1x16xf32, #tpu.memory_space<vmem>>, %arg9: memref<1x1x16xf32, #tpu.memory_space<vmem>>, %arg10: memref<1x1x16xf32, #tpu.memory_space<vmem>>, %arg11: memref<1x16x32xbf16, #tpu.memory_space<vmem>>, %arg12: memref<1x1x32xf32, #tpu.memory_space<vmem>>, %arg13: memref<1x32x16xbf16, #tpu.memory_space<vmem>>, %arg14: memref<1x1x16xf32, #tpu.memory_space<vmem>>, %arg15: memref<1x8x16xf32, #tpu.memory_space<vmem>>, %arg16: memref<8x16xf32, #tpu.memory_space<vmem>>, %arg17: memref<8x48xbf16, #tpu.memory_space<vmem>>, %arg18: memref<8x16xf32, #tpu.memory_space<vmem>>) attributes {dimension_semantics = [#tpu.dimension_semantics<parallel>, #tpu.dimension_semantics<arbitrary>], iteration_bounds = array<i64: 2, 1>, scalar_prefetch = 0 : i64, scratch_operands = 3 : i64, tpu.core_type = #tpu.core_type<tc>, window_params = [{transform_indices = @transform_0, window_bounds = array<i64: 1, 8, 16>}, {transform_indices = @transform_1, window_bounds = array<i64: 1, 1, 16>}, {transform_indices = @transform_2, window_bounds = array<i64: 1, 1, 16>}, {transform_indices = @transform_3, window_bounds = array<i64: 1, 16, 48>}, {transform_indices = @transform_4, window_bounds = array<i64: 1, 1, 48>}, {transform_indices = @transform_5, window_bounds = array<i64: 1, 16, 16>}, {transform_indices = @transform_6, window_bounds = array<i64: 1, 1, 16>}, {transform_indices = @transform_7, window_bounds = array<i64: 1, 1, 16>}, {transform_indices = @transform_8, window_bounds = array<i64: 1, 1, 16>}, {transform_indices = @transform_9, window_bounds = array<i64: 1, 16, 32>}, {transform_indices = @transform_10, window_bounds = array<i64: 1, 1, 32>}, {transform_indices = @transform_11, window_bounds = array<i64: 1, 32, 16>}, {transform_indices = @transform_12, window_bounds = array<i64: 1, 1, 16>}, {transform_indices = @transform_13, window_bounds = array<i64: 1, 8, 16>}]} {
    %c0_i32 = arith.constant 0 : i32
    %0 = arith.cmpi eq, %arg1, %c0_i32 : i32
    %1 = arith.extui %0 : i1 to i32
    %c0_i32_0 = arith.constant 0 : i32
    %2 = arith.cmpi ne, %1, %c0_i32_0 : i32
    scf.if %2 {
      %c0_85 = arith.constant 0 : index
      %c0_86 = arith.constant 0 : index
      %c0_87 = arith.constant 0 : index
      %153 = vector.load %arg2[%c0_85, %c0_86, %c0_87] : memref<1x8x16xf32, #tpu.memory_space<vmem>>, vector<1x8x16xf32>
      %154 = vector.shape_cast %153 : vector<1x8x16xf32> to vector<8x16xf32>
      %c0_88 = arith.constant 0 : index
      %c0_89 = arith.constant 0 : index
      %155 = vector.load %arg16[%c0_88, %c0_89] : memref<8x16xf32, #tpu.memory_space<vmem>>, vector<8x16xf32>
      tpu.vector_store %arg16[%c0_88, %c0_89], %154 {strides = array<i32>} : memref<8x16xf32, #tpu.memory_space<vmem>>, vector<8x16xf32>,
    } else {
    }
    %c0 = arith.constant 0 : index
    %c0_1 = arith.constant 0 : index
    %3 = vector.load %arg16[%c0, %c0_1] : memref<8x16xf32, #tpu.memory_space<vmem>>, vector<8x16xf32>
    %c0_2 = arith.constant 0 : index
    %c0_3 = arith.constant 0 : index
    %c0_4 = arith.constant 0 : index
    %4 = vector.load %arg3[%c0_2, %c0_3, %c0_4] : memref<1x1x16xf32, #tpu.memory_space<vmem>>, vector<1x1x16xf32>
    %5 = vector.shape_cast %4 : vector<1x1x16xf32> to vector<1x16xf32>
    %c0_5 = arith.constant 0 : index
    %c0_6 = arith.constant 0 : index
    %c0_7 = arith.constant 0 : index
    %6 = vector.load %arg4[%c0_5, %c0_6, %c0_7] : memref<1x1x16xf32, #tpu.memory_space<vmem>>, vector<1x1x16xf32>
    %7 = vector.shape_cast %6 : vector<1x1x16xf32> to vector<1x16xf32>
    %cst = arith.constant dense<0.000000e+00> : vector<8xf32>
    %8 = vector.multi_reduction <add>, %3, %cst [1] : vector<8x16xf32> to vector<8xf32>
    %9 = vector.shape_cast %8 : vector<8xf32> to vector<8x1xf32>
    %cst_8 = arith.constant 1.600000e+01 : f32
    %10 = vector.broadcast %cst_8 : f32 to vector<8x1xf32>
    %11 = arith.divf %9, %10 : vector<8x1xf32>
    %12 = vector.broadcast %11 : vector<8x1xf32> to vector<8x16xf32>
    %13 = arith.subf %3, %12 : vector<8x16xf32>
    %14 = arith.mulf %13, %13 : vector<8x16xf32>
    %cst_9 = arith.constant dense<0.000000e+00> : vector<8xf32>
    %15 = vector.multi_reduction <add>, %14, %cst_9 [1] : vector<8x16xf32> to vector<8xf32>
    %16 = vector.shape_cast %15 : vector<8xf32> to vector<8x1xf32>
    %cst_10 = arith.constant 1.600000e+01 : f32
    %17 = vector.broadcast %cst_10 : f32 to vector<8x1xf32>
    %18 = arith.divf %16, %17 : vector<8x1xf32>
    %19 = vector.broadcast %11 : vector<8x1xf32> to vector<8x16xf32>
    %20 = arith.subf %3, %19 : vector<8x16xf32>
    %cst_11 = arith.constant 9.99999974E-6 : f32
    %21 = vector.broadcast %cst_11 : f32 to vector<8x1xf32>
    %22 = arith.addf %18, %21 : vector<8x1xf32>
    %23 = math.rsqrt %22 : vector<8x1xf32>
    %24 = vector.broadcast %23 : vector<8x1xf32> to vector<8x16xf32>
    %25 = arith.mulf %20, %24 : vector<8x16xf32>
    %26 = vector.broadcast %5 : vector<1x16xf32> to vector<8x16xf32>
    %27 = arith.mulf %25, %26 : vector<8x16xf32>
    %28 = vector.broadcast %7 : vector<1x16xf32> to vector<8x16xf32>
    %29 = arith.addf %27, %28 : vector<8x16xf32>
    %30 = arith.truncf %29 : vector<8x16xf32> to vector<8x16xbf16>
    %c0_12 = arith.constant 0 : index
    %c0_13 = arith.constant 0 : index
    %c0_14 = arith.constant 0 : index
    %31 = vector.load %arg5[%c0_12, %c0_13, %c0_14] : memref<1x16x48xbf16, #tpu.memory_space<vmem>>, vector<1x16x48xbf16>
    %32 = vector.shape_cast %31 : vector<1x16x48xbf16> to vector<16x48xbf16>
    %cst_15 = arith.constant dense<0.000000e+00> : vector<8x48xf32>
    %33 = tpu.matmul %30, %32, %cst_15 {dimension_numbers = #tpu.dot_dimension_numbers<[1], [0], [0], [1], [0, 0, 1, 1], [], []>} : vector<8x16xbf16>, vector<16x48xbf16>, vector<8x48xf32> -> vector<8x48xf32>
    %c0_16 = arith.constant 0 : index
    %c0_17 = arith.constant 0 : index
    %c0_18 = arith.constant 0 : index
    %34 = vector.load %arg6[%c0_16, %c0_17, %c0_18] : memref<1x1x48xf32, #tpu.memory_space<vmem>>, vector<1x1x48xf32>
    %35 = vector.shape_cast %34 : vector<1x1x48xf32> to vector<1x48xf32>
    %36 = vector.broadcast %35 : vector<1x48xf32> to vector<8x48xf32>
    %37 = arith.addf %33, %36 : vector<8x48xf32>
    %38 = arith.truncf %37 : vector<8x48xf32> to vector<8x48xbf16>
    %c0_19 = arith.constant 0 : index
    %c0_20 = arith.constant 0 : index
    %39 = vector.load %arg17[%c0_19, %c0_20] : memref<8x48xbf16, #tpu.memory_space<vmem>>, vector<8x48xbf16>
    tpu.vector_store %arg17[%c0_19, %c0_20], %38 {strides = array<i32>} : memref<8x48xbf16, #tpu.memory_space<vmem>>, vector<8x48xbf16>,
    %40 = tpu.iota {dimensions = array<i32: 1>} : vector<8x8xi32>
    %cst_21 = arith.constant 0.000000e+00 : f32
    %41 = vector.broadcast %cst_21 : f32 to vector<8x8xf32>
    %42 = tpu.iota {dimensions = array<i32: 0>} : vector<8x8xi32>
    %43 = arith.cmpi sgt, %40, %42 : vector<8x8xi32>
    %cst_22 = arith.constant -1.000000e+09 : f32
    %cst_23 = arith.constant 0.000000e+00 : f32
    %44 = vector.broadcast %cst_22 : f32 to vector<8x8xf32>
    %45 = vector.broadcast %cst_23 : f32 to vector<8x8xf32>
    %46 = arith.select %43, %44, %45 : vector<8x8xi1>, vector<8x8xf32>
    %47 = arith.addf %41, %46 : vector<8x8xf32>
    %c0_24 = arith.constant 0 : index
    %c0_25 = arith.constant 0 : index
    %48 = vector.load %arg17[%c0_24, %c0_25] : memref<8x48xbf16, #tpu.memory_space<vmem>>, vector<8x8xbf16>
    %c0_26 = arith.constant 0 : index
    %c16 = arith.constant 16 : index
    %49 = vector.load %arg17[%c0_26, %c16] : memref<8x48xbf16, #tpu.memory_space<vmem>>, vector<8x8xbf16>
    %c0_27 = arith.constant 0 : index
    %c32 = arith.constant 32 : index
    %50 = vector.load %arg17[%c0_27, %c32] : memref<8x48xbf16, #tpu.memory_space<vmem>>, vector<8x8xbf16>
    %cst_28 = arith.constant dense<0.000000e+00> : vector<8x8xf32>
    %51 = tpu.matmul %48, %49, %cst_28 {dimension_numbers = #tpu.dot_dimension_numbers<[1], [1], [0], [0], [0, 0, 1, 0], [], []>} : vector<8x8xbf16>, vector<8x8xbf16>, vector<8x8xf32> -> vector<8x8xf32>
    %cst_29 = arith.constant 0.353553385 : f32
    %52 = vector.broadcast %cst_29 : f32 to vector<8x8xf32>
    %53 = arith.mulf %51, %52 : vector<8x8xf32>
    %54 = arith.addf %53, %47 : vector<8x8xf32>
    %cst_30 = arith.constant dense<0xFF800000> : vector<8xf32>
    %55 = vector.multi_reduction <maximumf>, %54, %cst_30 [1] : vector<8x8xf32> to vector<8xf32>
    %56 = vector.shape_cast %55 : vector<8xf32> to vector<8x1xf32>
    %57 = vector.broadcast %56 : vector<8x1xf32> to vector<8x8xf32>
    %58 = arith.subf %54, %57 : vector<8x8xf32>
    %59 = math.exp %58 : vector<8x8xf32>
    %cst_31 = arith.constant dense<0.000000e+00> : vector<8xf32>
    %60 = vector.multi_reduction <add>, %59, %cst_31 [1] : vector<8x8xf32> to vector<8xf32>
    %61 = vector.shape_cast %60 : vector<8xf32> to vector<8x1xf32>
    %62 = tpu.reciprocal %61 {approx = true} : vector<8x1xf32> -> vector<8x1xf32>
    %63 = vector.broadcast %62 : vector<8x1xf32> to vector<8x8xf32>
    %64 = arith.mulf %59, %63 : vector<8x8xf32>
    %65 = arith.truncf %64 : vector<8x8xf32> to vector<8x8xbf16>
    %cst_32 = arith.constant dense<0.000000e+00> : vector<8x8xf32>
    %66 = tpu.matmul %65, %50, %cst_32 {dimension_numbers = #tpu.dot_dimension_numbers<[1], [0], [0], [1], [0, 0, 1, 1], [], []>} : vector<8x8xbf16>, vector<8x8xbf16>, vector<8x8xf32> -> vector<8x8xf32>
    %c0_33 = arith.constant 0 : index
    %c0_34 = arith.constant 0 : index
    %67 = vector.load %arg18[%c0_33, %c0_34] : memref<8x16xf32, #tpu.memory_space<vmem>>, vector<8x8xf32>
    tpu.vector_store %arg18[%c0_33, %c0_34], %66 {strides = array<i32>} : memref<8x16xf32, #tpu.memory_space<vmem>>, vector<8x8xf32>,
    %c0_35 = arith.constant 0 : index
    %c8 = arith.constant 8 : index
    %68 = vector.load %arg17[%c0_35, %c8] : memref<8x48xbf16, #tpu.memory_space<vmem>>, vector<8x8xbf16>
    %c0_36 = arith.constant 0 : index
    %c24 = arith.constant 24 : index
    %69 = vector.load %arg17[%c0_36, %c24] : memref<8x48xbf16, #tpu.memory_space<vmem>>, vector<8x8xbf16>
    %c0_37 = arith.constant 0 : index
    %c40 = arith.constant 40 : index
    %70 = vector.load %arg17[%c0_37, %c40] : memref<8x48xbf16, #tpu.memory_space<vmem>>, vector<8x8xbf16>
    %cst_38 = arith.constant dense<0.000000e+00> : vector<8x8xf32>
    %71 = tpu.matmul %68, %69, %cst_38 {dimension_numbers = #tpu.dot_dimension_numbers<[1], [1], [0], [0], [0, 0, 1, 0], [], []>} : vector<8x8xbf16>, vector<8x8xbf16>, vector<8x8xf32> -> vector<8x8xf32>
    %cst_39 = arith.constant 0.353553385 : f32
    %72 = vector.broadcast %cst_39 : f32 to vector<8x8xf32>
    %73 = arith.mulf %71, %72 : vector<8x8xf32>
    %74 = arith.addf %73, %47 : vector<8x8xf32>
    %cst_40 = arith.constant dense<0xFF800000> : vector<8xf32>
    %75 = vector.multi_reduction <maximumf>, %74, %cst_40 [1] : vector<8x8xf32> to vector<8xf32>
    %76 = vector.shape_cast %75 : vector<8xf32> to vector<8x1xf32>
    %77 = vector.broadcast %76 : vector<8x1xf32> to vector<8x8xf32>
    %78 = arith.subf %74, %77 : vector<8x8xf32>
    %79 = math.exp %78 : vector<8x8xf32>
    %cst_41 = arith.constant dense<0.000000e+00> : vector<8xf32>
    %80 = vector.multi_reduction <add>, %79, %cst_41 [1] : vector<8x8xf32> to vector<8xf32>
    %81 = vector.shape_cast %80 : vector<8xf32> to vector<8x1xf32>
    %82 = tpu.reciprocal %81 {approx = true} : vector<8x1xf32> -> vector<8x1xf32>
    %83 = vector.broadcast %82 : vector<8x1xf32> to vector<8x8xf32>
    %84 = arith.mulf %79, %83 : vector<8x8xf32>
    %85 = arith.truncf %84 : vector<8x8xf32> to vector<8x8xbf16>
    %cst_42 = arith.constant dense<0.000000e+00> : vector<8x8xf32>
    %86 = tpu.matmul %85, %70, %cst_42 {dimension_numbers = #tpu.dot_dimension_numbers<[1], [0], [0], [1], [0, 0, 1, 1], [], []>} : vector<8x8xbf16>, vector<8x8xbf16>, vector<8x8xf32> -> vector<8x8xf32>
    %c0_43 = arith.constant 0 : index
    %c8_44 = arith.constant 8 : index
    %87 = vector.load %arg18[%c0_43, %c8_44] : memref<8x16xf32, #tpu.memory_space<vmem>>, vector<8x8xf32>
    tpu.vector_store %arg18[%c0_43, %c8_44], %86 {strides = array<i32>} : memref<8x16xf32, #tpu.memory_space<vmem>>, vector<8x8xf32>,
    %c0_45 = arith.constant 0 : index
    %c0_46 = arith.constant 0 : index
    %88 = vector.load %arg18[%c0_45, %c0_46] : memref<8x16xf32, #tpu.memory_space<vmem>>, vector<8x16xf32>
    %89 = arith.truncf %88 : vector<8x16xf32> to vector<8x16xbf16>
    %c0_47 = arith.constant 0 : index
    %c0_48 = arith.constant 0 : index
    %c0_49 = arith.constant 0 : index
    %90 = vector.load %arg7[%c0_47, %c0_48, %c0_49] : memref<1x16x16xbf16, #tpu.memory_space<vmem>>, vector<1x16x16xbf16>
    %91 = vector.shape_cast %90 : vector<1x16x16xbf16> to vector<16x16xbf16>
    %cst_50 = arith.constant dense<0.000000e+00> : vector<8x16xf32>
    %92 = tpu.matmul %89, %91, %cst_50 {dimension_numbers = #tpu.dot_dimension_numbers<[1], [0], [0], [1], [0, 0, 1, 1], [], []>} : vector<8x16xbf16>, vector<16x16xbf16>, vector<8x16xf32> -> vector<8x16xf32>
    %c0_51 = arith.constant 0 : index
    %c0_52 = arith.constant 0 : index
    %c0_53 = arith.constant 0 : index
    %93 = vector.load %arg8[%c0_51, %c0_52, %c0_53] : memref<1x1x16xf32, #tpu.memory_space<vmem>>, vector<1x1x16xf32>
    %94 = vector.shape_cast %93 : vector<1x1x16xf32> to vector<1x16xf32>
    %95 = vector.broadcast %94 : vector<1x16xf32> to vector<8x16xf32>
    %96 = arith.addf %92, %95 : vector<8x16xf32>
    %97 = arith.addf %3, %96 : vector<8x16xf32>
    %c0_54 = arith.constant 0 : index
    %c0_55 = arith.constant 0 : index
    %c0_56 = arith.constant 0 : index
    %98 = vector.load %arg9[%c0_54, %c0_55, %c0_56] : memref<1x1x16xf32, #tpu.memory_space<vmem>>, vector<1x1x16xf32>
    %99 = vector.shape_cast %98 : vector<1x1x16xf32> to vector<1x16xf32>
    %c0_57 = arith.constant 0 : index
    %c0_58 = arith.constant 0 : index
    %c0_59 = arith.constant 0 : index
    %100 = vector.load %arg10[%c0_57, %c0_58, %c0_59] : memref<1x1x16xf32, #tpu.memory_space<vmem>>, vector<1x1x16xf32>
    %101 = vector.shape_cast %100 : vector<1x1x16xf32> to vector<1x16xf32>
    %cst_60 = arith.constant dense<0.000000e+00> : vector<8xf32>
    %102 = vector.multi_reduction <add>, %97, %cst_60 [1] : vector<8x16xf32> to vector<8xf32>
    %103 = vector.shape_cast %102 : vector<8xf32> to vector<8x1xf32>
    %cst_61 = arith.constant 1.600000e+01 : f32
    %104 = vector.broadcast %cst_61 : f32 to vector<8x1xf32>
    %105 = arith.divf %103, %104 : vector<8x1xf32>
    %106 = vector.broadcast %105 : vector<8x1xf32> to vector<8x16xf32>
    %107 = arith.subf %97, %106 : vector<8x16xf32>
    %108 = arith.mulf %107, %107 : vector<8x16xf32>
    %cst_62 = arith.constant dense<0.000000e+00> : vector<8xf32>
    %109 = vector.multi_reduction <add>, %108, %cst_62 [1] : vector<8x16xf32> to vector<8xf32>
    %110 = vector.shape_cast %109 : vector<8xf32> to vector<8x1xf32>
    %cst_63 = arith.constant 1.600000e+01 : f32
    %111 = vector.broadcast %cst_63 : f32 to vector<8x1xf32>
    %112 = arith.divf %110, %111 : vector<8x1xf32>
    %113 = vector.broadcast %105 : vector<8x1xf32> to vector<8x16xf32>
    %114 = arith.subf %97, %113 : vector<8x16xf32>
    %cst_64 = arith.constant 9.99999974E-6 : f32
    %115 = vector.broadcast %cst_64 : f32 to vector<8x1xf32>
    %116 = arith.addf %112, %115 : vector<8x1xf32>
    %117 = math.rsqrt %116 : vector<8x1xf32>
    %118 = vector.broadcast %117 : vector<8x1xf32> to vector<8x16xf32>
    %119 = arith.mulf %114, %118 : vector<8x16xf32>
    %120 = vector.broadcast %99 : vector<1x16xf32> to vector<8x16xf32>
    %121 = arith.mulf %119, %120 : vector<8x16xf32>
    %122 = vector.broadcast %101 : vector<1x16xf32> to vector<8x16xf32>
    %123 = arith.addf %121, %122 : vector<8x16xf32>
    %124 = arith.truncf %123 : vector<8x16xf32> to vector<8x16xbf16>
    %c0_65 = arith.constant 0 : index
    %c0_66 = arith.constant 0 : index
    %c0_67 = arith.constant 0 : index
    %125 = vector.load %arg11[%c0_65, %c0_66, %c0_67] : memref<1x16x32xbf16, #tpu.memory_space<vmem>>, vector<1x16x32xbf16>
    %126 = vector.shape_cast %125 : vector<1x16x32xbf16> to vector<16x32xbf16>
    %cst_68 = arith.constant dense<0.000000e+00> : vector<8x32xf32>
    %127 = tpu.matmul %124, %126, %cst_68 {dimension_numbers = #tpu.dot_dimension_numbers<[1], [0], [0], [1], [0, 0, 1, 1], [], []>} : vector<8x16xbf16>, vector<16x32xbf16>, vector<8x32xf32> -> vector<8x32xf32>
    %c0_69 = arith.constant 0 : index
    %c0_70 = arith.constant 0 : index
    %c0_71 = arith.constant 0 : index
    %128 = vector.load %arg12[%c0_69, %c0_70, %c0_71] : memref<1x1x32xf32, #tpu.memory_space<vmem>>, vector<1x1x32xf32>
    %129 = vector.shape_cast %128 : vector<1x1x32xf32> to vector<1x32xf32>
    %130 = vector.broadcast %129 : vector<1x32xf32> to vector<8x32xf32>
    %131 = arith.addf %127, %130 : vector<8x32xf32>
    %cst_72 = arith.constant 1.702000e+00 : f32
    %132 = vector.broadcast %cst_72 : f32 to vector<8x32xf32>
    %133 = arith.mulf %132, %131 : vector<8x32xf32>
    %134 = arith.negf %133 : vector<8x32xf32>
    %135 = math.exp %134 : vector<8x32xf32>
    %cst_73 = arith.constant 1.000000e+00 : f32
    %136 = vector.broadcast %cst_73 : f32 to vector<8x32xf32>
    %137 = arith.addf %136, %135 : vector<8x32xf32>
    %138 = arith.divf %136, %137 : vector<8x32xf32>
    %139 = arith.mulf %131, %138 : vector<8x32xf32>
    %140 = arith.truncf %139 : vector<8x32xf32> to vector<8x32xbf16>
    %c0_74 = arith.constant 0 : index
    %c0_75 = arith.constant 0 : index
    %c0_76 = arith.constant 0 : index
    %141 = vector.load %arg13[%c0_74, %c0_75, %c0_76] : memref<1x32x16xbf16, #tpu.memory_space<vmem>>, vector<1x32x16xbf16>
    %142 = vector.shape_cast %141 : vector<1x32x16xbf16> to vector<32x16xbf16>
    %cst_77 = arith.constant dense<0.000000e+00> : vector<8x16xf32>
    %143 = tpu.matmul %140, %142, %cst_77 {dimension_numbers = #tpu.dot_dimension_numbers<[1], [0], [0], [1], [0, 0, 1, 1], [], []>} : vector<8x32xbf16>, vector<32x16xbf16>, vector<8x16xf32> -> vector<8x16xf32>
    %c0_78 = arith.constant 0 : index
    %c0_79 = arith.constant 0 : index
    %c0_80 = arith.constant 0 : index
    %144 = vector.load %arg14[%c0_78, %c0_79, %c0_80] : memref<1x1x16xf32, #tpu.memory_space<vmem>>, vector<1x1x16xf32>
    %145 = vector.shape_cast %144 : vector<1x1x16xf32> to vector<1x16xf32>
    %146 = vector.broadcast %145 : vector<1x16xf32> to vector<8x16xf32>
    %147 = arith.addf %143, %146 : vector<8x16xf32>
    %148 = arith.addf %97, %147 : vector<8x16xf32>
    %c0_81 = arith.constant 0 : index
    %c0_82 = arith.constant 0 : index
    %149 = vector.load %arg16[%c0_81, %c0_82] : memref<8x16xf32, #tpu.memory_space<vmem>>, vector<8x16xf32>
    tpu.vector_store %arg16[%c0_81, %c0_82], %148 {strides = array<i32>} : memref<8x16xf32, #tpu.memory_space<vmem>>, vector<8x16xf32>,
    %c0_i32_83 = arith.constant 0 : i32
    %150 = arith.cmpi eq, %arg1, %c0_i32_83 : i32
    %151 = arith.extui %150 : i1 to i32
    %c0_i32_84 = arith.constant 0 : i32
    %152 = arith.cmpi ne, %151, %c0_i32_84 : i32
    scf.if %152 {
      %c0_85 = arith.constant 0 : index
      %c0_86 = arith.constant 0 : index
      %c0_87 = arith.constant 0 : index
      %153 = vector.load %arg15[%c0_85, %c0_86, %c0_87] : memref<1x8x16xf32, #tpu.memory_space<vmem>>, vector<1x8x16xf32>
      %154 = vector.shape_cast %153 : vector<1x8x16xf32> to vector<8x16xf32>
      %155 = vector.shape_cast %148 : vector<8x16xf32> to vector<1x8x16xf32>
      tpu.vector_store %arg15[%c0_85, %c0_86, %c0_87], %155 {strides = array<i32>} : memref<1x8x16xf32, #tpu.memory_space<vmem>>, vector<1x8x16xf32>,
    } else {
    }
    return
  }
  func.func @transform_0(%arg0: i32, %arg1: i32) -> (i32, i32, i32) {
    %c0_i32 = arith.constant 0 : i32
    %c0_i32_0 = arith.constant 0 : i32
    %c0_i32_1 = arith.constant 0 : i32
    return %arg0, %c0_i32, %c0_i32_0 : i32, i32, i32
  }
  func.func @transform_1(%arg0: i32, %arg1: i32) -> (i32, i32, i32) {
    %c0_i32 = arith.constant 0 : i32
    %c0_i32_0 = arith.constant 0 : i32
    %c0_i32_1 = arith.constant 0 : i32
    return %arg1, %c0_i32, %c0_i32_0 : i32, i32, i32
  }
  func.func @transform_2(%arg0: i32, %arg1: i32) -> (i32, i32, i32) {
    %c0_i32 = arith.constant 0 : i32
    %c0_i32_0 = arith.constant 0 : i32
    %c0_i32_1 = arith.constant 0 : i32
    return %arg1, %c0_i32, %c0_i32_0 : i32, i32, i32
  }
  func.func @transform_3(%arg0: i32, %arg1: i32) -> (i32, i32, i32) {
    %c0_i32 = arith.constant 0 : i32
    %c0_i32_0 = arith.constant 0 : i32
    %c0_i32_1 = arith.constant 0 : i32
    return %arg1, %c0_i32, %c0_i32_0 : i32, i32, i32
  }
  func.func @transform_4(%arg0: i32, %arg1: i32) -> (i32, i32, i32) {
    %c0_i32 = arith.constant 0 : i32
    %c0_i32_0 = arith.constant 0 : i32
    %c0_i32_1 = arith.constant 0 : i32
    return %arg1, %c0_i32, %c0_i32_0 : i32, i32, i32
  }
  func.func @transform_5(%arg0: i32, %arg1: i32) -> (i32, i32, i32) {
    %c0_i32 = arith.constant 0 : i32
    %c0_i32_0 = arith.constant 0 : i32
    %c0_i32_1 = arith.constant 0 : i32
    return %arg1, %c0_i32, %c0_i32_0 : i32, i32, i32
  }
  func.func @transform_6(%arg0: i32, %arg1: i32) -> (i32, i32, i32) {
    %c0_i32 = arith.constant 0 : i32
    %c0_i32_0 = arith.constant 0 : i32
    %c0_i32_1 = arith.constant 0 : i32
    return %arg1, %c0_i32, %c0_i32_0 : i32, i32, i32
  }
  func.func @transform_7(%arg0: i32, %arg1: i32) -> (i32, i32, i32) {
    %c0_i32 = arith.constant 0 : i32
    %c0_i32_0 = arith.constant 0 : i32
    %c0_i32_1 = arith.constant 0 : i32
    return %arg1, %c0_i32, %c0_i32_0 : i32, i32, i32
  }
  func.func @transform_8(%arg0: i32, %arg1: i32) -> (i32, i32, i32) {
    %c0_i32 = arith.constant 0 : i32
    %c0_i32_0 = arith.constant 0 : i32
    %c0_i32_1 = arith.constant 0 : i32
    return %arg1, %c0_i32, %c0_i32_0 : i32, i32, i32
  }
  func.func @transform_9(%arg0: i32, %arg1: i32) -> (i32, i32, i32) {
    %c0_i32 = arith.constant 0 : i32
    %c0_i32_0 = arith.constant 0 : i32
    %c0_i32_1 = arith.constant 0 : i32
    return %arg1, %c0_i32, %c0_i32_0 : i32, i32, i32
  }
  func.func @transform_10(%arg0: i32, %arg1: i32) -> (i32, i32, i32) {
    %c0_i32 = arith.constant 0 : i32
    %c0_i32_0 = arith.constant 0 : i32
    %c0_i32_1 = arith.constant 0 : i32
    return %arg1, %c0_i32, %c0_i32_0 : i32, i32, i32
  }
  func.func @transform_11(%arg0: i32, %arg1: i32) -> (i32, i32, i32) {
    %c0_i32 = arith.constant 0 : i32
    %c0_i32_0 = arith.constant 0 : i32
    %c0_i32_1 = arith.constant 0 : i32
    return %arg1, %c0_i32, %c0_i32_0 : i32, i32, i32
  }
  func.func @transform_12(%arg0: i32, %arg1: i32) -> (i32, i32, i32) {
    %c0_i32 = arith.constant 0 : i32
    %c0_i32_0 = arith.constant 0 : i32
    %c0_i32_1 = arith.constant 0 : i32
    return %arg1, %c0_i32, %c0_i32_0 : i32, i32, i32
  }
  func.func @transform_13(%arg0: i32, %arg1: i32) -> (i32, i32, i32) {
    %c0_i32 = arith.constant 0 : i32
    %c0_i32_0 = arith.constant 0 : i32
    %c0_i32_1 = arith.constant 0 : i32
    return %arg0, %c0_i32, %c0_i32_0 : i32, i32, i32
  }
}

module attributes {stable_mosaic.version = 11 : i64} {
  func.func @_head_kernel(%arg0: i32, %arg1: memref<1x4x32xf32, #tpu.memory_space<vmem>>, %arg2: memref<1x7x16xf32, #tpu.memory_space<vmem>>, %arg3: memref<16x32xbf16, #tpu.memory_space<vmem>>, %arg4: memref<1x32xf32, #tpu.memory_space<vmem>>, %arg5: memref<4x4xf32, #tpu.memory_space<vmem>>, %arg6: memref<4x7xf32, #tpu.memory_space<vmem>>, %arg7: memref<4x1xf32, #tpu.memory_space<vmem>>, %arg8: memref<1x4x32xf32, #tpu.memory_space<vmem>>) attributes {dimension_semantics = [#tpu.dimension_semantics<parallel>], iteration_bounds = array<i64: 2>, scalar_prefetch = 0 : i64, scratch_operands = 0 : i64, tpu.core_type = #tpu.core_type<tc>, window_params = [{transform_indices = @transform_0, window_bounds = array<i64: 1, 4, 32>}, {transform_indices = @transform_1, window_bounds = array<i64: 1, 7, 16>}, {pipeline_mode = #tpu.pipeline_mode<synchronous>, transform_indices = @transform_2, window_bounds = array<i64: 16, 32>}, {pipeline_mode = #tpu.pipeline_mode<synchronous>, transform_indices = @transform_3, window_bounds = array<i64: 1, 32>}, {pipeline_mode = #tpu.pipeline_mode<synchronous>, transform_indices = @transform_4, window_bounds = array<i64: 4, 4>}, {pipeline_mode = #tpu.pipeline_mode<synchronous>, transform_indices = @transform_5, window_bounds = array<i64: 4, 7>}, {pipeline_mode = #tpu.pipeline_mode<synchronous>, transform_indices = @transform_6, window_bounds = array<i64: 4, 1>}, {transform_indices = @transform_7, window_bounds = array<i64: 1, 4, 32>}]} {
    %c0 = arith.constant 0 : index
    %c0_0 = arith.constant 0 : index
    %c0_1 = arith.constant 0 : index
    %0 = vector.load %arg2[%c0, %c0_0, %c0_1] : memref<1x7x16xf32, #tpu.memory_space<vmem>>, vector<1x7x16xf32>
    %1 = vector.shape_cast %0 : vector<1x7x16xf32> to vector<7x16xf32>
    %2 = arith.truncf %1 : vector<7x16xf32> to vector<7x16xbf16>
    %c0_2 = arith.constant 0 : index
    %c0_3 = arith.constant 0 : index
    %3 = vector.load %arg3[%c0_2, %c0_3] : memref<16x32xbf16, #tpu.memory_space<vmem>>, vector<16x32xbf16>
    %cst = arith.constant dense<0.000000e+00> : vector<7x32xf32>
    %4 = tpu.matmul %2, %3, %cst {dimension_numbers = #tpu.dot_dimension_numbers<[1], [0], [0], [1], [0, 0, 1, 1], [], []>} : vector<7x16xbf16>, vector<16x32xbf16>, vector<7x32xf32> -> vector<7x32xf32>
    %c0_4 = arith.constant 0 : index
    %c0_5 = arith.constant 0 : index
    %5 = vector.load %arg4[%c0_4, %c0_5] : memref<1x32xf32, #tpu.memory_space<vmem>>, vector<1x32xf32>
    %6 = vector.broadcast %5 : vector<1x32xf32> to vector<7x32xf32>
    %7 = arith.addf %4, %6 : vector<7x32xf32>
    %cst_6 = arith.constant 5.000000e-01 : f32
    %8 = vector.broadcast %cst_6 : f32 to vector<7x32xf32>
    %9 = arith.mulf %8, %7 : vector<7x32xf32>
    %cst_7 = arith.constant 0.707106769 : f32
    %10 = vector.broadcast %cst_7 : f32 to vector<7x32xf32>
    %11 = arith.mulf %7, %10 : vector<7x32xf32>
    %12 = math.erf %11 : vector<7x32xf32>
    %cst_8 = arith.constant 1.000000e+00 : f32
    %13 = vector.broadcast %cst_8 : f32 to vector<7x32xf32>
    %14 = arith.addf %13, %12 : vector<7x32xf32>
    %15 = arith.mulf %9, %14 : vector<7x32xf32>
    %c0_9 = arith.constant 0 : index
    %c0_10 = arith.constant 0 : index
    %c0_11 = arith.constant 0 : index
    %16 = vector.load %arg1[%c0_9, %c0_10, %c0_11] : memref<1x4x32xf32, #tpu.memory_space<vmem>>, vector<1x4x32xf32>
    %17 = vector.shape_cast %16 : vector<1x4x32xf32> to vector<4x32xf32>
    %c0_12 = arith.constant 0 : index
    %c0_13 = arith.constant 0 : index
    %18 = vector.load %arg5[%c0_12, %c0_13] : memref<4x4xf32, #tpu.memory_space<vmem>>, vector<4x4xf32>
    %cst_14 = arith.constant dense<0.000000e+00> : vector<4x32xf32>
    %19 = tpu.matmul %18, %17, %cst_14 {dimension_numbers = #tpu.dot_dimension_numbers<[1], [0], [0], [1], [0, 0, 1, 1], [], []>} : vector<4x4xf32>, vector<4x32xf32>, vector<4x32xf32> -> vector<4x32xf32>
    %c0_15 = arith.constant 0 : index
    %c0_16 = arith.constant 0 : index
    %20 = vector.load %arg6[%c0_15, %c0_16] : memref<4x7xf32, #tpu.memory_space<vmem>>, vector<4x7xf32>
    %cst_17 = arith.constant dense<0.000000e+00> : vector<4x32xf32>
    %21 = tpu.matmul %20, %15, %cst_17 {dimension_numbers = #tpu.dot_dimension_numbers<[1], [0], [0], [1], [0, 0, 1, 1], [], []>} : vector<4x7xf32>, vector<7x32xf32>, vector<4x32xf32> -> vector<4x32xf32>
    %22 = arith.addf %19, %21 : vector<4x32xf32>
    %c0_18 = arith.constant 0 : index
    %c0_19 = arith.constant 0 : index
    %23 = vector.load %arg7[%c0_18, %c0_19] : memref<4x1xf32, #tpu.memory_space<vmem>>, vector<4x1xf32>
    %24 = vector.broadcast %23 : vector<4x1xf32> to vector<4x32xf32>
    %25 = arith.addf %22, %24 : vector<4x32xf32>
    %c0_20 = arith.constant 0 : index
    %c0_21 = arith.constant 0 : index
    %c0_22 = arith.constant 0 : index
    %26 = vector.load %arg8[%c0_20, %c0_21, %c0_22] : memref<1x4x32xf32, #tpu.memory_space<vmem>>, vector<1x4x32xf32>
    %27 = vector.shape_cast %26 : vector<1x4x32xf32> to vector<4x32xf32>
    %28 = vector.shape_cast %25 : vector<4x32xf32> to vector<1x4x32xf32>
    tpu.vector_store %arg8[%c0_20, %c0_21, %c0_22], %28 {strides = array<i32>} : memref<1x4x32xf32, #tpu.memory_space<vmem>>, vector<1x4x32xf32>,
    return
  }
  func.func @transform_0(%arg0: i32) -> (i32, i32, i32) {
    %c0_i32 = arith.constant 0 : i32
    %c0_i32_0 = arith.constant 0 : i32
    %c0_i32_1 = arith.constant 0 : i32
    return %arg0, %c0_i32, %c0_i32_0 : i32, i32, i32
  }
  func.func @transform_1(%arg0: i32) -> (i32, i32, i32) {
    %c0_i32 = arith.constant 0 : i32
    %c0_i32_0 = arith.constant 0 : i32
    %c0_i32_1 = arith.constant 0 : i32
    return %arg0, %c0_i32, %c0_i32_0 : i32, i32, i32
  }
  func.func @transform_2(%arg0: i32) -> (i32, i32) {
    %c0_i32 = arith.constant 0 : i32
    %c0_i32_0 = arith.constant 0 : i32
    %c0_i32_1 = arith.constant 0 : i32
    return %c0_i32, %c0_i32_0 : i32, i32
  }
  func.func @transform_3(%arg0: i32) -> (i32, i32) {
    %c0_i32 = arith.constant 0 : i32
    %c0_i32_0 = arith.constant 0 : i32
    %c0_i32_1 = arith.constant 0 : i32
    return %c0_i32, %c0_i32_0 : i32, i32
  }
  func.func @transform_4(%arg0: i32) -> (i32, i32) {
    %c0_i32 = arith.constant 0 : i32
    %c0_i32_0 = arith.constant 0 : i32
    %c0_i32_1 = arith.constant 0 : i32
    return %c0_i32, %c0_i32_0 : i32, i32
  }
  func.func @transform_5(%arg0: i32) -> (i32, i32) {
    %c0_i32 = arith.constant 0 : i32
    %c0_i32_0 = arith.constant 0 : i32
    %c0_i32_1 = arith.constant 0 : i32
    return %c0_i32, %c0_i32_0 : i32, i32
  }
  func.func @transform_6(%arg0: i32) -> (i32, i32) {
    %c0_i32 = arith.constant 0 : i32
    %c0_i32_0 = arith.constant 0 : i32
    %c0_i32_1 = arith.constant 0 : i32
    return %c0_i32, %c0_i32_0 : i32, i32
  }
  func.func @transform_7(%arg0: i32) -> (i32, i32, i32) {
    %c0_i32 = arith.constant 0 : i32
    %c0_i32_0 = arith.constant 0 : i32
    %c0_i32_1 = arith.constant 0 : i32
    return %arg0, %c0_i32, %c0_i32_0 : i32, i32, i32
  }
}

</mosaic_0001>

<llo_original>
// kernel: clip_vision_tower_forward.5
$region0: #{clip_vision_tower_forward.5}
  #allocation0 [shape = 'u32[]', space=smem, size = 0x4, offset = 0x4, fixed_abs, tag = 'smem constant byte address 0x4 - core index']
  #allocation1 [shape = 'u32[144,128]{1,0:T(1,128)}', space=vmem, size = 0x12000, scoped, tag = 'internal scratch']
  %s0 = inlined_call_operand.vmem [shape: f32[2,8,192], index: 0, kind: input, shape index: {}]
  %s1 = inlined_call_operand.vmem [shape: bf16[192,32], index: 1, kind: input, shape index: {}]
  %s2 = inlined_call_operand.vmem [shape: f32[8,32], index: 2, kind: input, shape index: {}]
  %s3 = inlined_call_operand.vmem [shape: f32[1,32], index: 3, kind: input, shape index: {}]
  %s4 = inlined_call_operand.vmem [shape: f32[1,32], index: 4, kind: input, shape index: {}]
  %s5 = inlined_call_operand.vmem [shape: f32[2,8,32], index: 5, kind: output, shape index: {}]
  %s6 = sld [smem:[#allocation0]]
  $region53: #{clip_vision_tower_forward.5} parent=0
    _
  %s8 = ssub.s32 1, %s6
  %s9 = scalar_select 0, %s8, %s6
  loop: start=0, step=1, limit=4
  $region2: #{clip_vision_tower_forward.5} parent=0 // loop_pre_header
    _
  $region3: #{clip_vision_tower_forward.5} parent=0 // loop_header
    %s11 = sphi 0, %s15
    %p12 = scmp.ge.s32.totalorder %s11, 4
    %s21 = sphi 0, %s23
    %s24 = sphi 0, %s21
    %s25 = sphi 0, %s24
    %s41 = sphi 0, %s25
    %s45 = sphi 0, %s45
    %s47 = sphi 0, %s45
    %s48 = sphi 0, %s47
    %s62 = sphi 0, %s48
    %s66 = sphi 0, %s66
    %s68 = sphi 0, %s66
    %s69 = sphi 0, %s68
    %s83 = sphi 0, %s69
    %s87 = sphi 0, %s87
    %s89 = sphi 0, %s87
    %s90 = sphi 0, %s89
    %s104 = sphi 0, %s90
    %s108 = sphi 0, %s108
    %s110 = sphi 0, %s108
    %s111 = sphi 0, %s110
    %s125 = sphi 0, %s111
    %s131 = sphi 0, %s133
    %s134 = sphi 0, %s131
    %s135 = sphi 0, %s134
    %s151 = sphi 0, %s135
  $region4: #{clip_vision_tower_forward.5} parent=0 // loop_header_branch
    %14 = sbr.rel (%p12) target = $region8
  $region5: #{clip_vision_tower_forward.5} parent=0 // loop_body
    %s16 = ssub.s32 %s11, 1
    %s17 = ssub.s32 %s11, 2
    %s18 = sadd.s32 %s11, 1
    %s19 = ssub.s32 %s11, %s18
    %p20 = scmp.eq.s32.totalorder %s19, 0
    %s22 = sadd.s32 %s21, 1
    %s23 = scalar_select %p20, %s21, %s22
    %p26 = pneg %p20
    %p27 = scmp.eq.s32.totalorder %s11, 1
    %p28 = por %p26, %p27
    %p29 = scmp.ne.s32.totalorder %s21, %s24
    %p30 = scmp.eq.s32.totalorder %s11, 0
    %p31 = por %p29, %p30
    %p32 = scmp.ne.s32.totalorder %s21, %s24
    %p33 = scmp.eq.s32.totalorder %s16, 1
    %p34 = por %p32, %p33
    %p35 = scmp.ne.s32.totalorder %s24, %s25
    %p36 = scmp.eq.s32.totalorder %s16, 0
    %p37 = por %p35, %p36
    %p38 = scmp.ne.s32.totalorder %s24, %s25
    %p39 = scmp.eq.s32.totalorder %s17, 1
    %p40 = por %p38, %p39
    %p42 = scmp.ne.s32.totalorder %s25, %s41
    %p43 = scmp.eq.s32.totalorder %s17, 0
    %p44 = por %p42, %p43
    %s46 = sadd.s32 %s45, 1
    %p49 = scmp.eq.s32.totalorder %s11, 1
    %p50 = scmp.ne.s32.totalorder %s45, %s47
    %p51 = scmp.eq.s32.totalorder %s11, 0
    %p52 = por %p50, %p51
    %p53 = scmp.ne.s32.totalorder %s45, %s47
    %p54 = scmp.eq.s32.totalorder %s16, 1
    %p55 = por %p53, %p54
    %p56 = scmp.ne.s32.totalorder %s47, %s48
    %p57 = scmp.eq.s32.totalorder %s16, 0
    %p58 = por %p56, %p57
    %p59 = scmp.ne.s32.totalorder %s47, %s48
    %p60 = scmp.eq.s32.totalorder %s17, 1
    %p61 = por %p59, %p60
    %p63 = scmp.ne.s32.totalorder %s48, %s62
    %p64 = scmp.eq.s32.totalorder %s17, 0
    %p65 = por %p63, %p64
    %s67 = sadd.s32 %s66, 1
    %p70 = scmp.eq.s32.totalorder %s11, 1
    %p71 = scmp.ne.s32.totalorder %s66, %s68
    %p72 = scmp.eq.s32.totalorder %s11, 0
    %p73 = por %p71, %p72
    %p74 = scmp.ne.s32.totalorder %s66, %s68
    %p75 = scmp.eq.s32.totalorder %s16, 1
    %p76 = por %p74, %p75
    %p77 = scmp.ne.s32.totalorder %s68, %s69
    %p78 = scmp.eq.s32.totalorder %s16, 0
    %p79 = por %p77, %p78
    %p80 = scmp.ne.s32.totalorder %s68, %s69
    %p81 = scmp.eq.s32.totalorder %s17, 1
    %p82 = por %p80, %p81
    %p84 = scmp.ne.s32.totalorder %s69, %s83
    %p85 = scmp.eq.s32.totalorder %s17, 0
    %p86 = por %p84, %p85
    %s88 = sadd.s32 %s87, 1
    %p91 = scmp.eq.s32.totalorder %s11, 1
    %p92 = scmp.ne.s32.totalorder %s87, %s89
    %p93 = scmp.eq.s32.totalorder %s11, 0
    %p94 = por %p92, %p93
    %p95 = scmp.ne.s32.totalorder %s87, %s89
    %p96 = scmp.eq.s32.totalorder %s16, 1
    %p97 = por %p95, %p96
    %p98 = scmp.ne.s32.totalorder %s89, %s90
    %p99 = scmp.eq.s32.totalorder %s16, 0
    %p100 = por %p98, %p99
    %p101 = scmp.ne.s32.totalorder %s89, %s90
    %p102 = scmp.eq.s32.totalorder %s17, 1
    %p103 = por %p101, %p102
    %p105 = scmp.ne.s32.totalorder %s90, %s104
    %p106 = scmp.eq.s32.totalorder %s17, 0
    %p107 = por %p105, %p106
    %s109 = sadd.s32 %s108, 1
    %p112 = scmp.eq.s32.totalorder %s11, 1
    %p113 = scmp.ne.s32.totalorder %s108, %s110
    %p114 = scmp.eq.s32.totalorder %s11, 0
    %p115 = por %p113, %p114
    %p116 = scmp.ne.s32.totalorder %s108, %s110
    %p117 = scmp.eq.s32.totalorder %s16, 1
    %p118 = por %p116, %p117
    %p119 = scmp.ne.s32.totalorder %s110, %s111
    %p120 = scmp.eq.s32.totalorder %s16, 0
    %p121 = por %p119, %p120
    %p122 = scmp.ne.s32.totalorder %s110, %s111
    %p123 = scmp.eq.s32.totalorder %s17, 1
    %p124 = por %p122, %p123
    %p126 = scmp.ne.s32.totalorder %s111, %s125
    %p127 = scmp.eq.s32.totalorder %s17, 0
    %p128 = por %p126, %p127
    %s129 = ssub.s32 %s11, %s18
    %p130 = scmp.eq.s32.totalorder %s129, 0
    %s132 = sadd.s32 %s131, 1
    %s133 = scalar_select %p130, %s131, %s132
    %p136 = pneg %p130
    %p137 = scmp.eq.s32.totalorder %s11, 1
    %p138 = por %p136, %p137
    %p139 = scmp.ne.s32.totalorder %s131, %s134
    %p140 = scmp.eq.s32.totalorder %s11, 0
    %p141 = por %p139, %p140
    %p142 = scmp.ne.s32.totalorder %s131, %s134
    %p143 = scmp.eq.s32.totalorder %s16, 1
    %p144 = por %p142, %p143
    %p145 = scmp.ne.s32.totalorder %s134, %s135
    %p146 = scmp.eq.s32.totalorder %s16, 0
    %p147 = por %p145, %p146
    %p148 = scmp.ne.s32.totalorder %s134, %s135
    %p149 = scmp.eq.s32.totalorder %s17, 1
    %p150 = por %p148, %p149
    %p152 = scmp.ne.s32.totalorder %s135, %s151
    %p153 = scmp.eq.s32.totalorder %s17, 0
    %p154 = por %p152, %p153
    %p155 = scmp.le.s32.totalorder 1, %s11
    %p156 = scmp.lt.s32.totalorder %s11, 3
    %p157 = pnand %p155, %p156
    %p158 = pneg %p157
    // Predicated region
    $region9: #{clip_vision_tower_forward.5} parent=5 // pred_check
      _
    $region10: #{clip_vision_tower_forward.5} parent=5 // pred_check_branch
      %160 = sbr.rel (%p157) target = $region12
    $region11: #{clip_vision_tower_forward.5} parent=5 // pred_region
      %s161 = ssub.s32 %s11, 1
      // Predicated region
      $region13: #{clip_vision_tower_forward.5} parent=11 // pred_check
        %p162 = pneg %p58
      $region14: #{clip_vision_tower_forward.5} parent=11 // pred_check_branch
        %164 = sbr.rel (%p162) target = $region16
      $region15: #{clip_vision_tower_forward.5} parent=11 // pred_region
        _
      $region16: #{clip_vision_tower_forward.5} parent=11 // pred_fallthru
        _
      // Predicated region
      $region17: #{clip_vision_tower_forward.5} parent=11 // pred_check
        %p165 = pneg %p79
      $region18: #{clip_vision_tower_forward.5} parent=11 // pred_check_branch
        %167 = sbr.rel (%p165) target = $region20
      $region19: #{clip_vision_tower_forward.5} parent=11 // pred_region
        _
      $region20: #{clip_vision_tower_forward.5} parent=11 // pred_fallthru
        _
      // Predicated region
      $region21: #{clip_vision_tower_forward.5} parent=11 // pred_check
        %p168 = pneg %p100
      $region22: #{clip_vision_tower_forward.5} parent=11 // pred_check_branch
        %170 = sbr.rel (%p168) target = $region24
      $region23: #{clip_vision_tower_forward.5} parent=11 // pred_region
        _
      $region24: #{clip_vision_tower_forward.5} parent=11 // pred_fallthru
        _
      // Predicated region
      $region25: #{clip_vision_tower_forward.5} parent=11 // pred_check
        %p171 = pneg %p121
      $region26: #{clip_vision_tower_forward.5} parent=11 // pred_check_branch
        %173 = sbr.rel (%p171) target = $region28
      $region27: #{clip_vision_tower_forward.5} parent=11 // pred_region
        _
      $region28: #{clip_vision_tower_forward.5} parent=11 // pred_fallthru
        _
    $region12: #{clip_vision_tower_forward.5} parent=5 // pred_fallthru
      _
    %p174 = scmp.lt.s32.totalorder %s11, 2
    // Predicated region
    $region29: #{clip_vision_tower_forward.5} parent=5 // pred_check
      %p175 = pneg %p174
    $region30: #{clip_vision_tower_forward.5} parent=5 // pred_check_branch
      %177 = sbr.rel (%p175) target = $region32
    $region31: #{clip_vision_tower_forward.5} parent=5 // pred_region
      // Predicated region
      $region33: #{clip_vision_tower_forward.5} parent=31 // pred_check
        %p178 = pneg %p31
      $region34: #{clip_vision_tower_forward.5} parent=31 // pred_check_branch
        %180 = sbr.rel (%p178) target = $region36
      $region35: #{clip_vision_tower_forward.5} parent=31 // pred_region
        %p181 = scmp.lt.s32.totalorder %s11, 1
        %s182 = scalar_select %p181, %s11, 1
        %s183 = smul.addr %s182, 2
        %s184 = smul.addr %s183, 8
        %s185 = scalar_lea.vmem %s0, %s184
      $region36: #{clip_vision_tower_forward.5} parent=31 // pred_fallthru
        _
    $region32: #{clip_vision_tower_forward.5} parent=5 // pred_fallthru
      _
    %p186 = scmp.le.s32.totalorder 1, %s11
    %p187 = scmp.lt.s32.totalorder %s11, 3
    %p188 = pnand %p186, %p187
    %p189 = pneg %p188
    // Predicated region
    $region37: #{clip_vision_tower_forward.5} parent=5 // pred_check
      _
    $region38: #{clip_vision_tower_forward.5} parent=5 // pred_check_branch
      %191 = sbr.rel (%p188) target = $region40
    $region39: #{clip_vision_tower_forward.5} parent=5 // pred_region
      %s192 = ssub.s32 %s11, 1
      %p193 = scmp.lt.s32.totalorder %s16, 1
      %s194 = scalar_select %p193, %s16, 1
      %s195 = smul.addr %s194, 2
      %s196 = smul.addr %s195, 8
      %s197 = scalar_lea.vmem %s0, %s196
      %p198 = pneg %p37
      %p199 = pneg %p34
      %p200 = pneg %p58
      %p201 = pneg %p55
      %p202 = pneg %p79
      %p203 = pneg %p76
      %p204 = pneg %p100
      %p205 = pneg %p97
      %p206 = pneg %p121
      %p207 = pneg %p118
      %p208 = pneg %p147
      %p209 = pneg %p144
      %p210 = scmp.lt.s32.totalorder %s16, 1
      %s211 = scalar_select %p210, %s16, 1
      %s212 = smul.addr %s211, 8
      %s213 = scalar_lea.vmem %s5, %s212
      %p214 = scmp.lt.s32.totalorder %s16, 1
      %s215 = scalar_select %p214, %s16, 1
      %s216 = smul.addr %s215, 2
      %s217 = smul.addr %s216, 8
      %s218 = scalar_lea.vmem %s0, %s217
      %p219 = scmp.lt.s32.totalorder %s16, 1
      %s220 = scalar_select %p219, %s16, 1
      %s221 = smul.addr %s220, 8
      %s222 = scalar_lea.vmem %s5, %s221
      %v224 = vld [vmem:[%s218] sm:$0xff]
      %v225 = vld [vmem:[%s218 + $0x8] sm:$0xff]
      %v226 = vpack.c.bf16 %v224, %v224
      %v227 = vpack.c.bf16 %v225, %v225
      %v228 = vld [vmem:[%s1] sm:$0xf]
      %v229 = vld [vmem:[%s1 + $0x4] sm:$0xf]
      %v230 = vld [vmem:[%s1 + $0x8] sm:$0xf]
      %v231 = vld [vmem:[%s1 + $0xc] sm:$0xf]
      %v232 = vld [vmem:[%s1 + $0x10] sm:$0xf]
      %v233 = vld [vmem:[%s1 + $0x14] sm:$0xf]
      %v234 = vld [vmem:[%s1 + $0x18] sm:$0xf]
      %v235 = vld [vmem:[%s1 + $0x1c] sm:$0xf]
      %v236 = vld [vmem:[%s1 + $0x20] sm:$0xf]
      %v237 = vld [vmem:[%s1 + $0x24] sm:$0xf]
      %v238 = vld [vmem:[%s1 + $0x28] sm:$0xf]
      %v239 = vld [vmem:[%s1 + $0x2c] sm:$0xf]
      %v240 = vld [vmem:[%s1 + $0x30] sm:$0xf]
      %v241 = vld [vmem:[%s1 + $0x34] sm:$0xf]
      %v242 = vld [vmem:[%s1 + $0x38] sm:$0xf]
      %v243 = vld [vmem:[%s1 + $0x3c] sm:$0xf]
      %v244 = vld [vmem:[%s1 + $0x40] sm:$0xf]
      %v245 = vld [vmem:[%s1 + $0x44] sm:$0xf]
      %v246 = vld [vmem:[%s1 + $0x48] sm:$0xf]
      %v247 = vld [vmem:[%s1 + $0x4c] sm:$0xf]
      %v248 = vld [vmem:[%s1 + $0x50] sm:$0xf]
      %v249 = vld [vmem:[%s1 + $0x54] sm:$0xf]
      %v250 = vld [vmem:[%s1 + $0x58] sm:$0xf]
      %v251 = vld [vmem:[%s1 + $0x5c] sm:$0xf]
      %v252 = vld [vmem:[%s2] sm:$0xff]
      %v277 = vunpack.c.l.b16 %v228
      %v278 = vunpack.c.l.b16 %v229
      %v279 = vunpack.c.l.b16 %v230
      %v280 = vunpack.c.l.b16 %v231
      %v281 = vunpack.c.l.b16 %v232
      %v282 = vunpack.c.l.b16 %v233
      %v283 = vunpack.c.l.b16 %v234
      %v284 = vunpack.c.l.b16 %v235
      %v285 = vunpack.c.l.b16 %v236
      %v286 = vunpack.c.l.b16 %v237
      %v287 = vunpack.c.l.b16 %v238
      %v288 = vunpack.c.l.b16 %v239
      %v289 = vunpack.c.l.b16 %v240
      %v290 = vunpack.c.l.b16 %v241
      %v291 = vunpack.c.l.b16 %v242
      %v292 = vunpack.c.l.b16 %v243
      %v293 = vunpack.c.l.b16 %v244
      %v294 = vunpack.c.l.b16 %v245
      %v295 = vunpack.c.l.b16 %v246
      %v296 = vunpack.c.l.b16 %v247
      %v297 = vunpack.c.l.b16 %v248
      %v298 = vunpack.c.l.b16 %v249
      %v299 = vunpack.c.l.b16 %v250
      %v300 = vunpack.c.l.b16 %v251
      %v301 = vpack.c.b16 %v278, %v277
      %v302 = vpack.c.b16 %v280, %v279
      %v303 = vpack.c.b16 %v282, %v281
      %v304 = vpack.c.b16 %v284, %v283
      %v305 = vpack.c.b16 %v286, %v285
      %v306 = vpack.c.b16 %v288, %v287
      %v307 = vpack.c.b16 %v290, %v289
      %v308 = vpack.c.b16 %v292, %v291
      %v309 = vpack.c.b16 %v294, %v293
      %v310 = vpack.c.b16 %v296, %v295
      %v311 = vpack.c.b16 %v298, %v297
      %v312 = vpack.c.b16 %v300, %v299
      %vm325 = vcmask 523264
      %v327 = vsel %vm325, %v227, 0
      %329 = vmatprep.subr.bf16.mxu0 0
      %330 = vmatpush1.bf16.msra.mxu0 %v308
      %331 = vmatprep.subr.bf16.mxu0 0
      %332 = vmatpush1.bf16.msra.mxu0 %v307
      %333 = vmatprep.subr.bf16.mxu0 0
      %334 = vmatpush1.bf16.msra.mxu0 %v306
      %335 = vmatprep.subr.bf16.mxu0 0
      %336 = vmatpush1.bf16.msra.mxu0 %v305
      %337 = vmatprep.subr.bf16.mxu0 0
      %338 = vmatpush1.bf16.msra.mxu0 %v304
      %339 = vmatprep.subr.bf16.mxu0 0
      %340 = vmatpush1.bf16.msra.mxu0 %v303
      %341 = vmatprep.subr.bf16.mxu0 0
      %342 = vmatpush1.bf16.msra.mxu0 %v302
      %343 = vmatprep.subr.bf16.mxu0 0
      %344 = vmatpush1.bf16.msra.mxu0 %v301
      %345 = vmatprep.subr.bf16.mxu0 0
      %346 = vmatpush2.bf16.msra.mxu0 0
      %347 = vmatprep.subr.bf16.mxu0 0
      %348 = vmatpush2.bf16.msra.mxu0 0
      %349 = vmatprep.subr.bf16.mxu0 0
      %350 = vmatpush2.bf16.msra.mxu0 0
      %351 = vmatprep.subr.bf16.mxu0 0
      %352 = vmatpush2.bf16.msra.mxu0 0
      %353 = vmatprep.subr.bf16.mxu0 0
      %354 = vmatpush2.bf16.msra.mxu0 %v312
      %355 = vmatprep.subr.bf16.mxu0 0
      %356 = vmatpush2.bf16.msra.mxu0 %v311
      %357 = vmatprep.subr.bf16.mxu0 0
      %358 = vmatpush2.bf16.msra.mxu0 %v310
      %359 = vmatprep.subr.bf16.mxu0 0
      %360 = vmatpush2.bf16.msra.mxu0 %v309
      %361 = vmatprep.mubr.bf16.mxu0 %v327
      %362 = vmatmul.mubr.bf16.gmra.mxu0 %v226
      %v363 = vpop.f32.mrf.mxu0
      %v364 = vadd.f32 %v252, %v363
      %v365 = vpop.f32.mrf.mxu0
      %v366 = vpop.f32.mrf.mxu0
      %v367 = vpop.f32.mrf.mxu0
      %368 = vdwg.mxu0
      %vm369 = vcmask 261120
      %v370 = vsel %vm369, %v364, 0.0
      %371 = vadd.xlane.f32.xlu0 %v370
      %v372 = vpop.xlane.xlu0 %371
      %v373 = vrcp.pop 32.0
      %v374 = vmul.f32 %v372, %v373
      %v375 = vsub.f32 %v364, %v374
      %v376 = vmul.f32 %v375, %v375
      %v377 = vsel %vm369, %v376, 0.0
      %378 = vadd.xlane.f32.xlu0 %v377
      %v379 = vpop.xlane.xlu0 %378
      %v380 = vmul.f32 %v379, %v373
      %v381 = vadd.f32 %v380, 1e-05
      %v382 = vrsqrt.pop %v381
      %v383 = vmul.f32 %v375, %v382
      %v384 = vld [vmem:[%s3] sm:$0x1]
      %v386 = vlaneseq
      %v387 = vshrl.u32 %v386, 7
      %v388 = vsub.s32 0, %v387
      %v389 = vrot.slane %v384, %v388
      %v391 = vmul.f32 %v383, %v389
      %v392 = vld [vmem:[%s4] sm:$0x1]
      %v394 = vlaneseq
      %v395 = vshrl.u32 %v394, 7
      %v396 = vsub.s32 0, %v395
      %v397 = vrot.slane %v392, %v396
      %v399 = vadd.f32 %v391, %v397
      %400 = vst.msk [vmem:[%s222] sm:$0xff] %vm369, %v399
      %p401 = scmp.lt.s32.totalorder %s16, 1
      %s402 = scalar_select %p401, %s16, 1
      %s403 = smul.addr %s402, 8
      %s404 = scalar_lea.vmem %s5, %s403
      // Predicated region
      $region41: #{clip_vision_tower_forward.5} parent=39 // pred_check
        %p405 = pneg %p144
      $region42: #{clip_vision_tower_forward.5} parent=39 // pred_check_branch
        %407 = sbr.rel (%p405) target = $region44
      $region43: #{clip_vision_tower_forward.5} parent=39 // pred_region
        _
      $region44: #{clip_vision_tower_forward.5} parent=39 // pred_fallthru
        _
    $region40: #{clip_vision_tower_forward.5} parent=5 // pred_fallthru
      _
    %p408 = scmp.le.s32.totalorder 2, %s11
    // Predicated region
    $region45: #{clip_vision_tower_forward.5} parent=5 // pred_check
      %p409 = pneg %p408
    $region46: #{clip_vision_tower_forward.5} parent=5 // pred_check_branch
      %411 = sbr.rel (%p409) target = $region48
    $region47: #{clip_vision_tower_forward.5} parent=5 // pred_region
      %s412 = ssub.s32 %s11, 2
      // Predicated region
      $region49: #{clip_vision_tower_forward.5} parent=47 // pred_check
        %p413 = pneg %p150
      $region50: #{clip_vision_tower_forward.5} parent=47 // pred_check_branch
        %415 = sbr.rel (%p413) target = $region52
      $region51: #{clip_vision_tower_forward.5} parent=47 // pred_region
        %p416 = scmp.lt.s32.totalorder %s17, 1
        %s417 = scalar_select %p416, %s17, 1
        %s418 = smul.addr %s417, 8
        %s419 = scalar_lea.vmem %s5, %s418
      $region52: #{clip_vision_tower_forward.5} parent=47 // pred_fallthru
        _
    $region48: #{clip_vision_tower_forward.5} parent=5 // pred_fallthru
      _
  $region6: #{clip_vision_tower_forward.5} parent=0 // loop_footer
    %s15 = sadd.s32 1, %s11
  $region7: #{clip_vision_tower_forward.5} parent=0 // loop_footer_branch
    %10 = sbr.rel target = $region3
  $region8: #{clip_vision_tower_forward.5} parent=0 // loop_exit
    _

// kernel: clip_vision_tower_forward.7
$region0: #{clip_vision_tower_forward.7}
  #allocation0 [shape = 'u32[]', space=smem, size = 0x4, offset = 0x4, fixed_abs, tag = 'smem constant byte address 0x4 - core index']
  #allocation1 [shape = 'u32[144,128]{1,0:T(1,128)}', space=vmem, size = 0x12000, scoped, tag = 'internal scratch']
  %s0 = inlined_call_operand.vmem [shape: f32[2,4,32], index: 0, kind: input, shape index: {}]
  %s1 = inlined_call_operand.vmem [shape: f32[2,7,16], index: 1, kind: input, shape index: {}]
  %s2 = inlined_call_operand.vmem [shape: bf16[16,32], index: 2, kind: input, shape index: {}]
  %s3 = inlined_call_operand.vmem [shape: f32[1,32], index: 3, kind: input, shape index: {}]
  %s4 = inlined_call_operand.vmem [shape: f32[4,4], index: 4, kind: input, shape index: {}]
  %s5 = inlined_call_operand.vmem [shape: f32[4,7], index: 5, kind: input, shape index: {}]
  %s6 = inlined_call_operand.vmem [shape: f32[4,1], index: 6, kind: input, shape index: {}]
  %s7 = inlined_call_operand.hbm [shape: f32[2,4,32], index: 7, kind: output, shape index: {}]
  %s8 = sld [smem:[#allocation0]]
  $region61: #{clip_vision_tower_forward.7} parent=0
    _
  %s10 = ssub.s32 1, %s8
  %s11 = scalar_select 0, %s10, %s8
  $region1: #{clip_vision_tower_forward.7} parent=0
    #allocation2 [shape = 'u8[4096]{0}', space=vmem, size = 0x1000, scoped, tag = 'output window, operand 0']
    #allocation3 [shape = 's32[2]{0}', space=sflag, size = 0x8, scoped, tag = 'scoped memory for clip_vision_tower_forward.7']
    %12 = vsyncpa [#allocation3], 0
    %s13 = scalar_lea.sflag [#allocation3], 1
    %14 = vsyncpa %s13, 0
    loop: start=0, step=1, limit=4
    $region2: #{clip_vision_tower_forward.7} parent=1 // loop_pre_header
      _
    $region3: #{clip_vision_tower_forward.7} parent=1 // loop_header
      %s16 = sphi 0, %s20
      %p17 = scmp.ge.s32.totalorder %s16, 4
      %s26 = sphi 0, %s28
      %s29 = sphi 0, %s26
      %s30 = sphi 0, %s29
      %s46 = sphi 0, %s30
      %s52 = sphi 0, %s54
      %s55 = sphi 0, %s52
      %s56 = sphi 0, %s55
      %s72 = sphi 0, %s56
      %s76 = sphi 0, %s76
      %s78 = sphi 0, %s76
      %s79 = sphi 0, %s78
      %s93 = sphi 0, %s79
      %s97 = sphi 0, %s97
      %s99 = sphi 0, %s97
      %s100 = sphi 0, %s99
      %s114 = sphi 0, %s100
      %s118 = sphi 0, %s118
      %s120 = sphi 0, %s118
      %s121 = sphi 0, %s120
      %s135 = sphi 0, %s121
      %s139 = sphi 0, %s139
      %s141 = sphi 0, %s139
      %s142 = sphi 0, %s141
      %s156 = sphi 0, %s142
      %s160 = sphi 0, %s160
      %s162 = sphi 0, %s160
      %s163 = sphi 0, %s162
      %s177 = sphi 0, %s163
      %s183 = sphi 0, %s185
      %s186 = sphi 0, %s183
      %s187 = sphi 0, %s186
      %s203 = sphi 0, %s187
    $region4: #{clip_vision_tower_forward.7} parent=1 // loop_header_branch
      %19 = sbr.rel (%p17) target = $region8
    $region5: #{clip_vision_tower_forward.7} parent=1 // loop_body
      %s21 = ssub.s32 %s16, 1
      %s22 = ssub.s32 %s16, 2
      %s23 = sadd.s32 %s16, 1
      %s24 = ssub.s32 %s16, %s23
      %p25 = scmp.eq.s32.totalorder %s24, 0
      %s27 = sadd.s32 %s26, 1
      %s28 = scalar_select %p25, %s26, %s27
      %p31 = pneg %p25
      %p32 = scmp.eq.s32.totalorder %s16, 1
      %p33 = por %p31, %p32
      %p34 = scmp.ne.s32.totalorder %s26, %s29
      %p35 = scmp.eq.s32.totalorder %s16, 0
      %p36 = por %p34, %p35
      %p37 = scmp.ne.s32.totalorder %s26, %s29
      %p38 = scmp.eq.s32.totalorder %s21, 1
      %p39 = por %p37, %p38
      %p40 = scmp.ne.s32.totalorder %s29, %s30
      %p41 = scmp.eq.s32.totalorder %s21, 0
      %p42 = por %p40, %p41
      %p43 = scmp.ne.s32.totalorder %s29, %s30
      %p44 = scmp.eq.s32.totalorder %s22, 1
      %p45 = por %p43, %p44
      %p47 = scmp.ne.s32.totalorder %s30, %s46
      %p48 = scmp.eq.s32.totalorder %s22, 0
      %p49 = por %p47, %p48
      %s50 = ssub.s32 %s16, %s23
      %p51 = scmp.eq.s32.totalorder %s50, 0
      %s53 = sadd.s32 %s52, 1
      %s54 = scalar_select %p51, %s52, %s53
      %p57 = pneg %p51
      %p58 = scmp.eq.s32.totalorder %s16, 1
      %p59 = por %p57, %p58
      %p60 = scmp.ne.s32.totalorder %s52, %s55
      %p61 = scmp.eq.s32.totalorder %s16, 0
      %p62 = por %p60, %p61
      %p63 = scmp.ne.s32.totalorder %s52, %s55
      %p64 = scmp.eq.s32.totalorder %s21, 1
      %p65 = por %p63, %p64
      %p66 = scmp.ne.s32.totalorder %s55, %s56
      %p67 = scmp.eq.s32.totalorder %s21, 0
      %p68 = por %p66, %p67
      %p69 = scmp.ne.s32.totalorder %s55, %s56
      %p70 = scmp.eq.s32.totalorder %s22, 1
      %p71 = por %p69, %p70
      %p73 = scmp.ne.s32.totalorder %s56, %s72
      %p74 = scmp.eq.s32.totalorder %s22, 0
      %p75 = por %p73, %p74
      %s77 = sadd.s32 %s76, 1
      %p80 = scmp.eq.s32.totalorder %s16, 1
      %p81 = scmp.ne.s32.totalorder %s76, %s78
      %p82 = scmp.eq.s32.totalorder %s16, 0
      %p83 = por %p81, %p82
      %p84 = scmp.ne.s32.totalorder %s76, %s78
      %p85 = scmp.eq.s32.totalorder %s21, 1
      %p86 = por %p84, %p85
      %p87 = scmp.ne.s32.totalorder %s78, %s79
      %p88 = scmp.eq.s32.totalorder %s21, 0
      %p89 = por %p87, %p88
      %p90 = scmp.ne.s32.totalorder %s78, %s79
      %p91 = scmp.eq.s32.totalorder %s22, 1
      %p92 = por %p90, %p91
      %p94 = scmp.ne.s32.totalorder %s79, %s93
      %p95 = scmp.eq.s32.totalorder %s22, 0
      %p96 = por %p94, %p95
      %s98 = sadd.s32 %s97, 1
      %p101 = scmp.eq.s32.totalorder %s16, 1
      %p102 = scmp.ne.s32.totalorder %s97, %s99
      %p103 = scmp.eq.s32.totalorder %s16, 0
      %p104 = por %p102, %p103
      %p105 = scmp.ne.s32.totalorder %s97, %s99
      %p106 = scmp.eq.s32.totalorder %s21, 1
      %p107 = por %p105, %p106
      %p108 = scmp.ne.s32.totalorder %s99, %s100
      %p109 = scmp.eq.s32.totalorder %s21, 0
      %p110 = por %p108, %p109
      %p111 = scmp.ne.s32.totalorder %s99, %s100
      %p112 = scmp.eq.s32.totalorder %s22, 1
      %p113 = por %p111, %p112
      %p115 = scmp.ne.s32.totalorder %s100, %s114
      %p116 = scmp.eq.s32.totalorder %s22, 0
      %p117 = por %p115, %p116
      %s119 = sadd.s32 %s118, 1
      %p122 = scmp.eq.s32.totalorder %s16, 1
      %p123 = scmp.ne.s32.totalorder %s118, %s120
      %p124 = scmp.eq.s32.totalorder %s16, 0
      %p125 = por %p123, %p124
      %p126 = scmp.ne.s32.totalorder %s118, %s120
      %p127 = scmp.eq.s32.totalorder %s21, 1
      %p128 = por %p126, %p127
      %p129 = scmp.ne.s32.totalorder %s120, %s121
      %p130 = scmp.eq.s32.totalorder %s21, 0
      %p131 = por %p129, %p130
      %p132 = scmp.ne.s32.totalorder %s120, %s121
      %p133 = scmp.eq.s32.totalorder %s22, 1
      %p134 = por %p132, %p133
      %p136 = scmp.ne.s32.totalorder %s121, %s135
      %p137 = scmp.eq.s32.totalorder %s22, 0
      %p138 = por %p136, %p137
      %s140 = sadd.s32 %s139, 1
      %p143 = scmp.eq.s32.totalorder %s16, 1
      %p144 = scmp.ne.s32.totalorder %s139, %s141
      %p145 = scmp.eq.s32.totalorder %s16, 0
      %p146 = por %p144, %p145
      %p147 = scmp.ne.s32.totalorder %s139, %s141
      %p148 = scmp.eq.s32.totalorder %s21, 1
      %p149 = por %p147, %p148
      %p150 = scmp.ne.s32.totalorder %s141, %s142
      %p151 = scmp.eq.s32.totalorder %s21, 0
      %p152 = por %p150, %p151
      %p153 = scmp.ne.s32.totalorder %s141, %s142
      %p154 = scmp.eq.s32.totalorder %s22, 1
      %p155 = por %p153, %p154
      %p157 = scmp.ne.s32.totalorder %s142, %s156
      %p158 = scmp.eq.s32.totalorder %s22, 0
      %p159 = por %p157, %p158
      %s161 = sadd.s32 %s160, 1
      %p164 = scmp.eq.s32.totalorder %s16, 1
      %p165 = scmp.ne.s32.totalorder %s160, %s162
      %p166 = scmp.eq.s32.totalorder %s16, 0
      %p167 = por %p165, %p166
      %p168 = scmp.ne.s32.totalorder %s160, %s162
      %p169 = scmp.eq.s32.totalorder %s21, 1
      %p170 = por %p168, %p169
      %p171 = scmp.ne.s32.totalorder %s162, %s163
      %p172 = scmp.eq.s32.totalorder %s21, 0
      %p173 = por %p171, %p172
      %p174 = scmp.ne.s32.totalorder %s162, %s163
      %p175 = scmp.eq.s32.totalorder %s22, 1
      %p176 = por %p174, %p175
      %p178 = scmp.ne.s32.totalorder %s163, %s177
      %p179 = scmp.eq.s32.totalorder %s22, 0
      %p180 = por %p178, %p179
      %s181 = ssub.s32 %s16, %s23
      %p182 = scmp.eq.s32.totalorder %s181, 0
      %s184 = sadd.s32 %s183, 1
      %s185 = scalar_select %p182, %s183, %s184
      %p188 = pneg %p182
      %p189 = scmp.eq.s32.totalorder %s16, 1
      %p190 = por %p188, %p189
      %p191 = scmp.ne.s32.totalorder %s183, %s186
      %p192 = scmp.eq.s32.totalorder %s16, 0
      %p193 = por %p191, %p192
      %p194 = scmp.ne.s32.totalorder %s183, %s186
      %p195 = scmp.eq.s32.totalorder %s21, 1
      %p196 = por %p194, %p195
      %p197 = scmp.ne.s32.totalorder %s186, %s187
      %p198 = scmp.eq.s32.totalorder %s21, 0
      %p199 = por %p197, %p198
      %p200 = scmp.ne.s32.totalorder %s186, %s187
      %p201 = scmp.eq.s32.totalorder %s22, 1
      %p202 = por %p200, %p201
      %p204 = scmp.ne.s32.totalorder %s187, %s203
      %p205 = scmp.eq.s32.totalorder %s22, 0
      %p206 = por %p204, %p205
      %p207 = scmp.le.s32.totalorder 1, %s16
      %p208 = scmp.lt.s32.totalorder %s16, 3
      %p209 = pnand %p207, %p208
      %p210 = pneg %p209
      // Predicated region
      $region9: #{clip_vision_tower_forward.7} parent=5 // pred_check
        _
      $region10: #{clip_vision_tower_forward.7} parent=5 // pred_check_branch
        %212 = sbr.rel (%p209) target = $region12
      $region11: #{clip_vision_tower_forward.7} parent=5 // pred_region
        %s213 = ssub.s32 %s16, 1
        // Predicated region
        $region13: #{clip_vision_tower_forward.7} parent=11 // pred_check
          %p214 = pneg %p89
        $region14: #{clip_vision_tower_forward.7} parent=11 // pred_check_branch
          %216 = sbr.rel (%p214) target = $region16
        $region15: #{clip_vision_tower_forward.7} parent=11 // pred_region
          _
        $region16: #{clip_vision_tower_forward.7} parent=11 // pred_fallthru
          _
        // Predicated region
        $region17: #{clip_vision_tower_forward.7} parent=11 // pred_check
          %p217 = pneg %p110
        $region18: #{clip_vision_tower_forward.7} parent=11 // pred_check_branch
          %219 = sbr.rel (%p217) target = $region20
        $region19: #{clip_vision_tower_forward.7} parent=11 // pred_region
          _
        $region20: #{clip_vision_tower_forward.7} parent=11 // pred_fallthru
          _
        // Predicated region
        $region21: #{clip_vision_tower_forward.7} parent=11 // pred_check
          %p220 = pneg %p131
        $region22: #{clip_vision_tower_forward.7} parent=11 // pred_check_branch
          %222 = sbr.rel (%p220) target = $region24
        $region23: #{clip_vision_tower_forward.7} parent=11 // pred_region
          _
        $region24: #{clip_vision_tower_forward.7} parent=11 // pred_fallthru
          _
        // Predicated region
        $region25: #{clip_vision_tower_forward.7} parent=11 // pred_check
          %p223 = pneg %p152
        $region26: #{clip_vision_tower_forward.7} parent=11 // pred_check_branch
          %225 = sbr.rel (%p223) target = $region28
        $region27: #{clip_vision_tower_forward.7} parent=11 // pred_region
          _
        $region28: #{clip_vision_tower_forward.7} parent=11 // pred_fallthru
          _
        // Predicated region
        $region29: #{clip_vision_tower_forward.7} parent=11 // pred_check
          %p226 = pneg %p173
        $region30: #{clip_vision_tower_forward.7} parent=11 // pred_check_branch
          %228 = sbr.rel (%p226) target = $region32
        $region31: #{clip_vision_tower_forward.7} parent=11 // pred_region
          _
        $region32: #{clip_vision_tower_forward.7} parent=11 // pred_fallthru
          _
      $region12: #{clip_vision_tower_forward.7} parent=5 // pred_fallthru
        _
      %p229 = scmp.lt.s32.totalorder %s16, 2
      // Predicated region
      $region33: #{clip_vision_tower_forward.7} parent=5 // pred_check
        %p230 = pneg %p229
      $region34: #{clip_vision_tower_forward.7} parent=5 // pred_check_branch
        %232 = sbr.rel (%p230) target = $region36
      $region35: #{clip_vision_tower_forward.7} parent=5 // pred_region
        // Predicated region
        $region37: #{clip_vision_tower_forward.7} parent=35 // pred_check
          %p233 = pneg %p36
        $region38: #{clip_vision_tower_forward.7} parent=35 // pred_check_branch
          %235 = sbr.rel (%p233) target = $region40
        $region39: #{clip_vision_tower_forward.7} parent=35 // pred_region
          %p236 = scmp.lt.s32.totalorder %s16, 1
          %s237 = scalar_select %p236, %s16, 1
          %s238 = smul.addr %s237, 4
          %s239 = scalar_lea.vmem %s0, %s238
        $region40: #{clip_vision_tower_forward.7} parent=35 // pred_fallthru
          _
        // Predicated region
        $region41: #{clip_vision_tower_forward.7} parent=35 // pred_check
          %p240 = pneg %p62
        $region42: #{clip_vision_tower_forward.7} parent=35 // pred_check_branch
          %242 = sbr.rel (%p240) target = $region44
        $region43: #{clip_vision_tower_forward.7} parent=35 // pred_region
          %p243 = scmp.lt.s32.totalorder %s16, 1
          %s244 = scalar_select %p243, %s16, 1
          %s245 = smul.addr %s244, 8
          %s246 = scalar_lea.vmem %s1, %s245
        $region44: #{clip_vision_tower_forward.7} parent=35 // pred_fallthru
          _
      $region36: #{clip_vision_tower_forward.7} parent=5 // pred_fallthru
        _
      %p247 = scmp.le.s32.totalorder 1, %s16
      %p248 = scmp.lt.s32.totalorder %s16, 3
      %p249 = pnand %p247, %p248
      %p250 = pneg %p249
      // Predicated region
      $region45: #{clip_vision_tower_forward.7} parent=5 // pred_check
        _
      $region46: #{clip_vision_tower_forward.7} parent=5 // pred_check_branch
        %252 = sbr.rel (%p249) target = $region48
      $region47: #{clip_vision_tower_forward.7} parent=5 // pred_region
        %s253 = ssub.s32 %s16, 1
        %p254 = scmp.lt.s32.totalorder %s21, 1
        %s255 = scalar_select %p254, %s21, 1
        %s256 = smul.addr %s255, 4
        %s257 = scalar_lea.vmem %s0, %s256
        %p258 = pneg %p42
        %p259 = pneg %p39
        %p260 = scmp.lt.s32.totalorder %s21, 1
        %s261 = scalar_select %p260, %s21, 1
        %s262 = smul.addr %s261, 8
        %s263 = scalar_lea.vmem %s1, %s262
        %p264 = pneg %p68
        %p265 = pneg %p65
        %p266 = pneg %p89
        %p267 = pneg %p86
        %p268 = pneg %p110
        %p269 = pneg %p107
        %p270 = pneg %p131
        %p271 = pneg %p128
        %p272 = pneg %p152
        %p273 = pneg %p149
        %p274 = pneg %p173
        %p275 = pneg %p170
        %p276 = pneg %p199
        %p277 = pneg %p196
        %s278 = sand.u32 %s186, 1
        %s279 = scalar_lea.sflag [#allocation3], %s278
        %s280 = sand.u32 %s186, 1
        %s281 = smul.addr %s280, 4
        %s282 = scalar_lea.vmem [#allocation2], %s281
        %p283 = scmp.lt.s32.totalorder %s21, 1
        %s284 = scalar_select %p283, %s21, 1
        %s285 = smul.addr %s284, 4
        %s286 = scalar_lea.vmem %s0, %s285
        %p287 = scmp.lt.s32.totalorder %s21, 1
        %s288 = scalar_select %p287, %s21, 1
        %s289 = smul.addr %s288, 8
        %s290 = scalar_lea.vmem %s1, %s289
        %v292 = vld [vmem:[%s290] sm:$0x7f]
        %v293 = vpack.c.bf16 %v292, %v292
        %v294 = vld [vmem:[%s2] sm:$0xf]
        %v295 = vld [vmem:[%s2 + $0x4] sm:$0xf]
        %v296 = vld [vmem:[%s3] sm:$0x1]
        %v298 = vlaneseq
        %v299 = vshrl.u32 %v298, 7
        %v300 = vsub.s32 0, %v299
        %v301 = vrot.slane %v296, %v300
        %v305 = vunpack.c.l.b16 %v294
        %v306 = vunpack.c.l.b16 %v295
        %v307 = vpack.c.b16 %v306, %v305
        %vm309 = vcmask 130048
        %v311 = vsel %vm309, %v293, 0
        %313 = vmatprep.subr.bf16.mxu0 0
        %314 = vmatpush1.bf16.msra.mxu0 0
        %315 = vmatprep.subr.bf16.mxu0 0
        %316 = vmatpush1.bf16.msra.mxu0 0
        %317 = vmatprep.subr.bf16.mxu0 0
        %318 = vmatpush1.bf16.msra.mxu0 0
        %319 = vmatprep.subr.bf16.mxu0 0
        %320 = vmatpush1.bf16.msra.mxu0 0
        %321 = vmatprep.subr.bf16.mxu0 0
        %322 = vmatpush1.bf16.msra.mxu0 0
        %323 = vmatprep.subr.bf16.mxu0 0
        %324 = vmatpush1.bf16.msra.mxu0 0
        %325 = vmatprep.subr.bf16.mxu0 0
        %326 = vmatpush1.bf16.msra.mxu0 0
        %327 = vmatprep.subr.bf16.mxu0 0
        %328 = vmatpush1.bf16.msra.mxu0 %v307
        %329 = vmatprep.subr.bf16.mxu0 0
        %330 = vmatpush2.bf16.msra.mxu0 0
        %331 = vmatprep.subr.bf16.mxu0 0
        %332 = vmatpush2.bf16.msra.mxu0 0
        %333 = vmatprep.subr.bf16.mxu0 0
        %334 = vmatpush2.bf16.msra.mxu0 0
        %335 = vmatprep.subr.bf16.mxu0 0
        %336 = vmatpush2.bf16.msra.mxu0 0
        %337 = vmatprep.subr.bf16.mxu0 0
        %338 = vmatpush2.bf16.msra.mxu0 0
        %339 = vmatprep.subr.bf16.mxu0 0
        %340 = vmatpush2.bf16.msra.mxu0 0
        %341 = vmatprep.subr.bf16.mxu0 0
        %342 = vmatpush2.bf16.msra.mxu0 0
        %343 = vmatprep.subr.bf16.mxu0 0
        %344 = vmatpush2.bf16.msra.mxu0 0
        %345 = vmatprep.mubr.bf16.mxu0 0
        %346 = vmatmul.mubr.bf16.gmra.mxu0 %v311
        %v347 = vpop.f32.mrf.mxu0
        %v348 = vadd.f32 %v301, %v347
        %v349 = vpop.f32.mrf.mxu0
        %v350 = vpop.f32.mrf.mxu0
        %v351 = vpop.f32.mrf.mxu0
        %352 = vdwg.mxu0
        %v353 = vmul.f32 %v348, 0.5
        %v354 = vmul.f32 %v348, 0.70710677
        %v355 = verf.f32.pop %v354
        %v356 = vadd.f32 %v355, 1.0
        %v357 = vmul.f32 %v353, %v356
        %v358 = vld [vmem:[%s286] sm:$0xf]
        %v359 = vld [vmem:[%s4] sm:$0xf]
        %v360 = vld [vmem:[%s5] sm:$0xf]
        %vm361 = vcmask 56320
        %v363 = vsel %vm361, %v360, 0
        %vm365 = vcmask 1046528
        %v367 = vsel %vm365, %v357, 0
        %369 = vmatprep.subr.mxu0 0.0
        %370 = vmatpush1.msra.mxu0 0.0
        %371 = vmatprep.subr.mxu0 0.0
        %372 = vmatpush1.msra.mxu0 0.0
        %373 = vmatprep.subr.mxu0 0.0
        %374 = vmatpush1.msra.mxu0 0.0
        %375 = vmatprep.subr.mxu0 0.0
        %376 = vmatpush1.msra.mxu0 0.0
        %377 = vmatprep.subr.mxu0 0.0
        %378 = vmatpush1.msra.mxu0 0.0
        %379 = vmatprep.subr.mxu0 0.0
        %380 = vmatpush1.msra.mxu0 0.0
        %381 = vmatprep.subr.mxu0 0.0
        %382 = vmatpush1.msra.mxu0 0.0
        %383 = vmatprep.subr.mxu0 0.0
        %384 = vmatpush1.msra.mxu0 0.0
        %385 = vmatprep.subr.mxu0 0.0
        %386 = vmatpush1.msra.mxu0 0.0
        %387 = vmatprep.subr.mxu0 0.0
        %388 = vmatpush1.msra.mxu0 0.0
        %389 = vmatprep.subr.mxu0 0.0
        %390 = vmatpush1.msra.mxu0 0.0
        %391 = vmatprep.subr.mxu0 0.0
        %392 = vmatpush1.msra.mxu0 0.0
        %393 = vmatprep.subr.mxu0 0.0
        %394 = vmatpush1.msra.mxu0 0.0
        %395 = vmatprep.subr.mxu0 0.0
        %396 = vmatpush1.msra.mxu0 0.0
        %397 = vmatprep.subr.mxu0 0.0
        %398 = vmatpush1.msra.mxu0 0.0
        %399 = vmatprep.subr.mxu0 0.0
        %400 = vmatpush1.msra.mxu0 %v367
        %401 = vmatprep.subr.mxu0 0.0
        %402 = vmatpush2.msra.mxu0 0.0
        %403 = vmatprep.subr.mxu0 0.0
        %404 = vmatpush2.msra.mxu0 0.0
        %405 = vmatprep.subr.mxu0 0.0
        %406 = vmatpush2.msra.mxu0 0.0
        %407 = vmatprep.subr.mxu0 0.0
        %408 = vmatpush2.msra.mxu0 0.0
        %409 = vmatprep.subr.mxu0 0.0
        %410 = vmatpush2.msra.mxu0 0.0
        %411 = vmatprep.subr.mxu0 0.0
        %412 = vmatpush2.msra.mxu0 0.0
        %413 = vmatprep.subr.mxu0 0.0
        %414 = vmatpush2.msra.mxu0 0.0
        %415 = vmatprep.subr.mxu0 0.0
        %416 = vmatpush2.msra.mxu0 0.0
        %417 = vmatprep.subr.mxu0 0.0
        %418 = vmatpush2.msra.mxu0 0.0
        %419 = vmatprep.subr.mxu0 0.0
        %420 = vmatpush2.msra.mxu0 0.0
        %421 = vmatprep.subr.mxu0 0.0
        %422 = vmatpush2.msra.mxu0 0.0
        %423 = vmatprep.subr.mxu0 0.0
        %424 = vmatpush2.msra.mxu0 0.0
        %425 = vmatprep.subr.mxu0 0.0
        %426 = vmatpush2.msra.mxu0 0.0
        %427 = vmatprep.subr.mxu0 0.0
        %428 = vmatpush2.msra.mxu0 0.0
        %429 = vmatprep.subr.mxu0 0.0
        %430 = vmatpush2.msra.mxu0 0.0
        %431 = vmatprep.subr.mxu0 0.0
        %432 = vmatpush2.msra.mxu0 0.0
        %433 = vmatprep.mubr.f32.mxu0 0.0
        %434 = vmatmul.mubr.f32.gmra.mxu0 %v363
        %v435 = vpop.f32.mrf.mxu0
        %v436 = vadd.f32 0.0, %v435
        %v437 = vpop.f32.mrf.mxu0
        %438 = vdwg.mxu0
        %vm439 = vcmask 31744
        %v441 = vsel %vm439, %v359, 0
        %vm443 = vcmask 1043456
        %v445 = vsel %vm443, %v358, 0
        %447 = vmatprep.subr.mxu0 0.0
        %448 = vmatpush1.msra.mxu0 0.0
        %449 = vmatprep.subr.mxu0 0.0
        %450 = vmatpush1.msra.mxu0 0.0
        %451 = vmatprep.subr.mxu0 0.0
        %452 = vmatpush1.msra.mxu0 0.0
        %453 = vmatprep.subr.mxu0 0.0
        %454 = vmatpush1.msra.mxu0 0.0
        %455 = vmatprep.subr.mxu0 0.0
        %456 = vmatpush1.msra.mxu0 0.0
        %457 = vmatprep.subr.mxu0 0.0
        %458 = vmatpush1.msra.mxu0 0.0
        %459 = vmatprep.subr.mxu0 0.0
        %460 = vmatpush1.msra.mxu0 0.0
        %461 = vmatprep.subr.mxu0 0.0
        %462 = vmatpush1.msra.mxu0 0.0
        %463 = vmatprep.subr.mxu0 0.0
        %464 = vmatpush1.msra.mxu0 0.0
        %465 = vmatprep.subr.mxu0 0.0
        %466 = vmatpush1.msra.mxu0 0.0
        %467 = vmatprep.subr.mxu0 0.0
        %468 = vmatpush1.msra.mxu0 0.0
        %469 = vmatprep.subr.mxu0 0.0
        %470 = vmatpush1.msra.mxu0 0.0
        %471 = vmatprep.subr.mxu0 0.0
        %472 = vmatpush1.msra.mxu0 0.0
        %473 = vmatprep.subr.mxu0 0.0
        %474 = vmatpush1.msra.mxu0 0.0
        %475 = vmatprep.subr.mxu0 0.0
        %476 = vmatpush1.msra.mxu0 0.0
        %477 = vmatprep.subr.mxu0 0.0
        %478 = vmatpush1.msra.mxu0 %v445
        %479 = vmatprep.subr.mxu0 0.0
        %480 = vmatpush2.msra.mxu0 0.0
        %481 = vmatprep.subr.mxu0 0.0
        %482 = vmatpush2.msra.mxu0 0.0
        %483 = vmatprep.subr.mxu0 0.0
        %484 = vmatpush2.msra.mxu0 0.0
        %485 = vmatprep.subr.mxu0 0.0
        %486 = vmatpush2.msra.mxu0 0.0
        %487 = vmatprep.subr.mxu0 0.0
        %488 = vmatpush2.msra.mxu0 0.0
        %489 = vmatprep.subr.mxu0 0.0
        %490 = vmatpush2.msra.mxu0 0.0
        %491 = vmatprep.subr.mxu0 0.0
        %492 = vmatpush2.msra.mxu0 0.0
        %493 = vmatprep.subr.mxu0 0.0
        %494 = vmatpush2.msra.mxu0 0.0
        %495 = vmatprep.subr.mxu0 0.0
        %496 = vmatpush2.msra.mxu0 0.0
        %497 = vmatprep.subr.mxu0 0.0
        %498 = vmatpush2.msra.mxu0 0.0
        %499 = vmatprep.subr.mxu0 0.0
        %500 = vmatpush2.msra.mxu0 0.0
        %501 = vmatprep.subr.mxu0 0.0
        %502 = vmatpush2.msra.mxu0 0.0
        %503 = vmatprep.subr.mxu0 0.0
        %504 = vmatpush2.msra.mxu0 0.0
        %505 = vmatprep.subr.mxu0 0.0
        %506 = vmatpush2.msra.mxu0 0.0
        %507 = vmatprep.subr.mxu0 0.0
        %508 = vmatpush2.msra.mxu0 0.0
        %509 = vmatprep.subr.mxu0 0.0
        %510 = vmatpush2.msra.mxu0 0.0
        %511 = vmatprep.mubr.f32.mxu0 0.0
        %512 = vmatmul.mubr.f32.gmra.mxu0 %v441
        %v513 = vpop.f32.mrf.mxu0
        %v514 = vadd.f32 %v436, %v513
        %v515 = vpop.f32.mrf.mxu0
        %516 = vdwg.mxu0
        %v517 = vld [vmem:[%s6] sm:$0xf]
        %519 = vset.pattern.permute.xlu0 0
        %520 = vperm.xlu0 %519, %v517
        %v521 = vpop.permute.xlu0 %520
        %v523 = vadd.f32 %v514, %v521
        %vm524 = vcmask 257024
        %525 = vst.msk [vmem:[%s282] sm:$0xf] %vm524, %v523
        %s526 = sand.u32 %s186, 1
        %s527 = scalar_lea.sflag [#allocation3], %s526
        %s528 = sand.u32 %s186, 1
        %s529 = smul.addr %s528, 4
        %s530 = scalar_lea.vmem [#allocation2], %s529
        // Predicated region
        $region49: #{clip_vision_tower_forward.7} parent=47 // pred_check
          %p531 = pneg %p196
        $region50: #{clip_vision_tower_forward.7} parent=47 // pred_check_branch
          %533 = sbr.rel (%p531) target = $region52
        $region51: #{clip_vision_tower_forward.7} parent=47 // pred_region
          %s535 = ssub.s32 64, 64
          %536 = vsyncadd %s527, %s535
          %s537 = smul.addr %s21, 64
          %s538 = scalar_lea.hbm %s7, %s537
          %s540 = sshll.u32 %s530, 4
          %s541 = int_to_ptr.vmem [resolvable:$true] %s540
          %543 = dma.vmem_to_hbm [thread:$0]  %s541, 64, %s538, %s527
        $region52: #{clip_vision_tower_forward.7} parent=47 // pred_fallthru
          _
      $region48: #{clip_vision_tower_forward.7} parent=5 // pred_fallthru
        _
      %p544 = scmp.le.s32.totalorder 2, %s16
      // Predicated region
      $region53: #{clip_vision_tower_forward.7} parent=5 // pred_check
        %p545 = pneg %p544
      $region54: #{clip_vision_tower_forward.7} parent=5 // pred_check_branch
        %547 = sbr.rel (%p545) target = $region56
      $region55: #{clip_vision_tower_forward.7} parent=5 // pred_region
        %s548 = ssub.s32 %s16, 2
        // Predicated region
        $region57: #{clip_vision_tower_forward.7} parent=55 // pred_check
          %p549 = pneg %p202
        $region58: #{clip_vision_tower_forward.7} parent=55 // pred_check_branch
          %551 = sbr.rel (%p549) target = $region60
        $region59: #{clip_vision_tower_forward.7} parent=55 // pred_region
          %s552 = sand.u32 %s187, 1
          %s553 = scalar_lea.sflag [#allocation3], %s552
          %s554 = sand.u32 %s187, 1
          %s555 = smul.addr %s554, 4
          %s556 = scalar_lea.vmem [#allocation2], %s555
          %557 = dma.done %s553, 64
        $region60: #{clip_vision_tower_forward.7} parent=55 // pred_fallthru
          _
      $region56: #{clip_vision_tower_forward.7} parent=5 // pred_fallthru
        _
    $region6: #{clip_vision_tower_forward.7} parent=1 // loop_footer
      %s20 = sadd.s32 1, %s16
    $region7: #{clip_vision_tower_forward.7} parent=1 // loop_footer_branch
      %15 = sbr.rel target = $region3
    $region8: #{clip_vision_tower_forward.7} parent=1 // loop_exit
      _
    %558 = vsyncpa [#allocation3], 1
    %s559 = scalar_lea.sflag [#allocation3], 1
    %560 = vsyncpa %s559, 1

// kernel: clip_vision_tower_forward.6
$region0: #{clip_vision_tower_forward.6}
  #allocation0 [shape = 'u32[]', space=smem, size = 0x4, offset = 0x4, fixed_abs, tag = 'smem constant byte address 0x4 - core index']
  #allocation1 [shape = 'u32[144,128]{1,0:T(1,128)}', space=vmem, size = 0x12000, scoped, tag = 'internal scratch']
  #allocation2 [shape = 'f32[8,32]{1,0:T(8,128)}', space=vmem, size = 0x1000, scoped, tag = 'scratch operand']
  #allocation3 [shape = 'bf16[8,96]{1,0:T(8,128)(2,1)}', space=vmem, size = 0x800, scoped, tag = 'scratch operand']
  #allocation4 [shape = 'f32[8,32]{1,0:T(8,128)}', space=vmem, size = 0x1000, scoped, tag = 'scratch operand']
  %s0 = inlined_call_operand.vmem [shape: f32[2,8,32], index: 0, kind: input, shape index: {}]
  %s1 = inlined_call_operand.vmem [shape: f32[1,1,32], index: 1, kind: input, shape index: {}]
  %s2 = inlined_call_operand.vmem [shape: f32[1,1,32], index: 2, kind: input, shape index: {}]
  %s3 = inlined_call_operand.vmem [shape: bf16[1,32,96], index: 3, kind: input, shape index: {}]
  %s4 = inlined_call_operand.vmem [shape: f32[1,1,96], index: 4, kind: input, shape index: {}]
  %s5 = inlined_call_operand.vmem [shape: bf16[1,32,32], index: 5, kind: input, shape index: {}]
  %s6 = inlined_call_operand.vmem [shape: f32[1,1,32], index: 6, kind: input, shape index: {}]
  %s7 = inlined_call_operand.vmem [shape: f32[1,1,32], index: 7, kind: input, shape index: {}]
  %s8 = inlined_call_operand.vmem [shape: f32[1,1,32], index: 8, kind: input, shape index: {}]
  %s9 = inlined_call_operand.vmem [shape: bf16[1,32,64], index: 9, kind: input, shape index: {}]
  %s10 = inlined_call_operand.vmem [shape: f32[1,1,64], index: 10, kind: input, shape index: {}]
  %s11 = inlined_call_operand.vmem [shape: bf16[1,64,32], index: 11, kind: input, shape index: {}]
  %s12 = inlined_call_operand.vmem [shape: f32[1,1,32], index: 12, kind: input, shape index: {}]
  %s13 = inlined_call_operand.vmem [shape: f32[2,8,32], index: 13, kind: output, shape index: {}]
  %s14 = sld [smem:[#allocation0]]
  $region93: #{clip_vision_tower_forward.6} parent=0
    _
  %s16 = ssub.s32 1, %s14
  %s17 = scalar_select 0, %s16, %s14
  loop: start=0, step=1, limit=4
  $region2: #{clip_vision_tower_forward.6} parent=0 // loop_pre_header
    _
  $region3: #{clip_vision_tower_forward.6} parent=0 // loop_header
    %s19 = sphi 0, %s23
    %p20 = scmp.ge.s32.totalorder %s19, 4
    %s26 = sphi 0, %s38
    %s27 = sphi 0, %s34
    %s28 = sphi 0, %s26
    %s29 = sphi 0, %s27
    %s30 = sphi 0, %s28
    %s31 = sphi 0, %s29
    %s41 = sphi 0, %s43
    %s44 = sphi 0, %s41
    %s45 = sphi 0, %s44
    %s61 = sphi 0, %s45
    %s67 = sphi 0, %s69
    %s70 = sphi 0, %s67
    %s71 = sphi 0, %s70
    %s87 = sphi 0, %s71
    %s93 = sphi 0, %s95
    %s96 = sphi 0, %s93
    %s97 = sphi 0, %s96
    %s113 = sphi 0, %s97
    %s119 = sphi 0, %s121
    %s122 = sphi 0, %s119
    %s123 = sphi 0, %s122
    %s139 = sphi 0, %s123
    %s145 = sphi 0, %s147
    %s148 = sphi 0, %s145
    %s149 = sphi 0, %s148
    %s165 = sphi 0, %s149
    %s171 = sphi 0, %s173
    %s174 = sphi 0, %s171
    %s175 = sphi 0, %s174
    %s191 = sphi 0, %s175
    %s197 = sphi 0, %s199
    %s200 = sphi 0, %s197
    %s201 = sphi 0, %s200
    %s217 = sphi 0, %s201
    %s223 = sphi 0, %s225
    %s226 = sphi 0, %s223
    %s227 = sphi 0, %s226
    %s243 = sphi 0, %s227
    %s249 = sphi 0, %s251
    %s252 = sphi 0, %s249
    %s253 = sphi 0, %s252
    %s269 = sphi 0, %s253
    %s275 = sphi 0, %s277
    %s278 = sphi 0, %s275
    %s279 = sphi 0, %s278
    %s295 = sphi 0, %s279
    %s301 = sphi 0, %s303
    %s304 = sphi 0, %s301
    %s305 = sphi 0, %s304
    %s321 = sphi 0, %s305
    %s327 = sphi 0, %s329
    %s330 = sphi 0, %s327
    %s331 = sphi 0, %s330
    %s347 = sphi 0, %s331
    %s353 = sphi 0, %s355
    %s356 = sphi 0, %s353
    %s357 = sphi 0, %s356
    %s373 = sphi 0, %s357
    %s379 = sphi 0, %s381
    %s382 = sphi 0, %s379
    %s383 = sphi 0, %s382
    %s399 = sphi 0, %s383
  $region4: #{clip_vision_tower_forward.6} parent=0 // loop_header_branch
    %22 = sbr.rel (%p20) target = $region8
  $region5: #{clip_vision_tower_forward.6} parent=0 // loop_body
    %s24 = ssub.s32 %s19, 1
    %s25 = ssub.s32 %s19, 2
    %s32 = sadd.s32 1, %s27
    %p33 = scmp.ge.s32.totalorder %s32, 1
    %s34 = scalar_select %p33, 0, %s32
    %s35 = sadd.s32 1, %s26
    %s36 = scalar_select %p33, %s35, %s26
    %p37 = scmp.ge.s32.totalorder %s36, 2
    %s38 = scalar_select %p37, 0, %s36
    %s39 = ssub.s32 %s26, %s38
    %p40 = scmp.eq.s32.totalorder %s39, 0
    %s42 = sadd.s32 %s41, 1
    %s43 = scalar_select %p40, %s41, %s42
    %p46 = pneg %p40
    %p47 = scmp.eq.s32.totalorder %s19, 1
    %p48 = por %p46, %p47
    %p49 = scmp.ne.s32.totalorder %s41, %s44
    %p50 = scmp.eq.s32.totalorder %s19, 0
    %p51 = por %p49, %p50
    %p52 = scmp.ne.s32.totalorder %s41, %s44
    %p53 = scmp.eq.s32.totalorder %s24, 1
    %p54 = por %p52, %p53
    %p55 = scmp.ne.s32.totalorder %s44, %s45
    %p56 = scmp.eq.s32.totalorder %s24, 0
    %p57 = por %p55, %p56
    %p58 = scmp.ne.s32.totalorder %s44, %s45
    %p59 = scmp.eq.s32.totalorder %s25, 1
    %p60 = por %p58, %p59
    %p62 = scmp.ne.s32.totalorder %s45, %s61
    %p63 = scmp.eq.s32.totalorder %s25, 0
    %p64 = por %p62, %p63
    %s65 = ssub.s32 %s27, %s34
    %p66 = scmp.eq.s32.totalorder %s65, 0
    %s68 = sadd.s32 %s67, 1
    %s69 = scalar_select %p66, %s67, %s68
    %p72 = pneg %p66
    %p73 = scmp.eq.s32.totalorder %s19, 1
    %p74 = por %p72, %p73
    %p75 = scmp.ne.s32.totalorder %s67, %s70
    %p76 = scmp.eq.s32.totalorder %s19, 0
    %p77 = por %p75, %p76
    %p78 = scmp.ne.s32.totalorder %s67, %s70
    %p79 = scmp.eq.s32.totalorder %s24, 1
    %p80 = por %p78, %p79
    %p81 = scmp.ne.s32.totalorder %s70, %s71
    %p82 = scmp.eq.s32.totalorder %s24, 0
    %p83 = por %p81, %p82
    %p84 = scmp.ne.s32.totalorder %s70, %s71
    %p85 = scmp.eq.s32.totalorder %s25, 1
    %p86 = por %p84, %p85
    %p88 = scmp.ne.s32.totalorder %s71, %s87
    %p89 = scmp.eq.s32.totalorder %s25, 0
    %p90 = por %p88, %p89
    %s91 = ssub.s32 %s27, %s34
    %p92 = scmp.eq.s32.totalorder %s91, 0
    %s94 = sadd.s32 %s93, 1
    %s95 = scalar_select %p92, %s93, %s94
    %p98 = pneg %p92
    %p99 = scmp.eq.s32.totalorder %s19, 1
    %p100 = por %p98, %p99
    %p101 = scmp.ne.s32.totalorder %s93, %s96
    %p102 = scmp.eq.s32.totalorder %s19, 0
    %p103 = por %p101, %p102
    %p104 = scmp.ne.s32.totalorder %s93, %s96
    %p105 = scmp.eq.s32.totalorder %s24, 1
    %p106 = por %p104, %p105
    %p107 = scmp.ne.s32.totalorder %s96, %s97
    %p108 = scmp.eq.s32.totalorder %s24, 0
    %p109 = por %p107, %p108
    %p110 = scmp.ne.s32.totalorder %s96, %s97
    %p111 = scmp.eq.s32.totalorder %s25, 1
    %p112 = por %p110, %p111
    %p114 = scmp.ne.s32.totalorder %s97, %s113
    %p115 = scmp.eq.s32.totalorder %s25, 0
    %p116 = por %p114, %p115
    %s117 = ssub.s32 %s27, %s34
    %p118 = scmp.eq.s32.totalorder %s117, 0
    %s120 = sadd.s32 %s119, 1
    %s121 = scalar_select %p118, %s119, %s120
    %p124 = pneg %p118
    %p125 = scmp.eq.s32.totalorder %s19, 1
    %p126 = por %p124, %p125
    %p127 = scmp.ne.s32.totalorder %s119, %s122
    %p128 = scmp.eq.s32.totalorder %s19, 0
    %p129 = por %p127, %p128
    %p130 = scmp.ne.s32.totalorder %s119, %s122
    %p131 = scmp.eq.s32.totalorder %s24, 1
    %p132 = por %p130, %p131
    %p133 = scmp.ne.s32.totalorder %s122, %s123
    %p134 = scmp.eq.s32.totalorder %s24, 0
    %p135 = por %p133, %p134
    %p136 = scmp.ne.s32.totalorder %s122, %s123
    %p137 = scmp.eq.s32.totalorder %s25, 1
    %p138 = por %p136, %p137
    %p140 = scmp.ne.s32.totalorder %s123, %s139
    %p141 = scmp.eq.s32.totalorder %s25, 0
    %p142 = por %p140, %p141
    %s143 = ssub.s32 %s27, %s34
    %p144 = scmp.eq.s32.totalorder %s143, 0
    %s146 = sadd.s32 %s145, 1
    %s147 = scalar_select %p144, %s145, %s146
    %p150 = pneg %p144
    %p151 = scmp.eq.s32.totalorder %s19, 1
    %p152 = por %p150, %p151
    %p153 = scmp.ne.s32.totalorder %s145, %s148
    %p154 = scmp.eq.s32.totalorder %s19, 0
    %p155 = por %p153, %p154
    %p156 = scmp.ne.s32.totalorder %s145, %s148
    %p157 = scmp.eq.s32.totalorder %s24, 1
    %p158 = por %p156, %p157
    %p159 = scmp.ne.s32.totalorder %s148, %s149
    %p160 = scmp.eq.s32.totalorder %s24, 0
    %p161 = por %p159, %p160
    %p162 = scmp.ne.s32.totalorder %s148, %s149
    %p163 = scmp.eq.s32.totalorder %s25, 1
    %p164 = por %p162, %p163
    %p166 = scmp.ne.s32.totalorder %s149, %s165
    %p167 = scmp.eq.s32.totalorder %s25, 0
    %p168 = por %p166, %p167
    %s169 = ssub.s32 %s27, %s34
    %p170 = scmp.eq.s32.totalorder %s169, 0
    %s172 = sadd.s32 %s171, 1
    %s173 = scalar_select %p170, %s171, %s172
    %p176 = pneg %p170
    %p177 = scmp.eq.s32.totalorder %s19, 1
    %p178 = por %p176, %p177
    %p179 = scmp.ne.s32.totalorder %s171, %s174
    %p180 = scmp.eq.s32.totalorder %s19, 0
    %p181 = por %p179, %p180
    %p182 = scmp.ne.s32.totalorder %s171, %s174
    %p183 = scmp.eq.s32.totalorder %s24, 1
    %p184 = por %p182, %p183
    %p185 = scmp.ne.s32.totalorder %s174, %s175
    %p186 = scmp.eq.s32.totalorder %s24, 0
    %p187 = por %p185, %p186
    %p188 = scmp.ne.s32.totalorder %s174, %s175
    %p189 = scmp.eq.s32.totalorder %s25, 1
    %p190 = por %p188, %p189
    %p192 = scmp.ne.s32.totalorder %s175, %s191
    %p193 = scmp.eq.s32.totalorder %s25, 0
    %p194 = por %p192, %p193
    %s195 = ssub.s32 %s27, %s34
    %p196 = scmp.eq.s32.totalorder %s195, 0
    %s198 = sadd.s32 %s197, 1
    %s199 = scalar_select %p196, %s197, %s198
    %p202 = pneg %p196
    %p203 = scmp.eq.s32.totalorder %s19, 1
    %p204 = por %p202, %p203
    %p205 = scmp.ne.s32.totalorder %s197, %s200
    %p206 = scmp.eq.s32.totalorder %s19, 0
    %p207 = por %p205, %p206
    %p208 = scmp.ne.s32.totalorder %s197, %s200
    %p209 = scmp.eq.s32.totalorder %s24, 1
    %p210 = por %p208, %p209
    %p211 = scmp.ne.s32.totalorder %s200, %s201
    %p212 = scmp.eq.s32.totalorder %s24, 0
    %p213 = por %p211, %p212
    %p214 = scmp.ne.s32.totalorder %s200, %s201
    %p215 = scmp.eq.s32.totalorder %s25, 1
    %p216 = por %p214, %p215
    %p218 = scmp.ne.s32.totalorder %s201, %s217
    %p219 = scmp.eq.s32.totalorder %s25, 0
    %p220 = por %p218, %p219
    %s221 = ssub.s32 %s27, %s34
    %p222 = scmp.eq.s32.totalorder %s221, 0
    %s224 = sadd.s32 %s223, 1
    %s225 = scalar_select %p222, %s223, %s224
    %p228 = pneg %p222
    %p229 = scmp.eq.s32.totalorder %s19, 1
    %p230 = por %p228, %p229
    %p231 = scmp.ne.s32.totalorder %s223, %s226
    %p232 = scmp.eq.s32.totalorder %s19, 0
    %p233 = por %p231, %p232
    %p234 = scmp.ne.s32.totalorder %s223, %s226
    %p235 = scmp.eq.s32.totalorder %s24, 1
    %p236 = por %p234, %p235
    %p237 = scmp.ne.s32.totalorder %s226, %s227
    %p238 = scmp.eq.s32.totalorder %s24, 0
    %p239 = por %p237, %p238
    %p240 = scmp.ne.s32.totalorder %s226, %s227
    %p241 = scmp.eq.s32.totalorder %s25, 1
    %p242 = por %p240, %p241
    %p244 = scmp.ne.s32.totalorder %s227, %s243
    %p245 = scmp.eq.s32.totalorder %s25, 0
    %p246 = por %p244, %p245
    %s247 = ssub.s32 %s27, %s34
    %p248 = scmp.eq.s32.totalorder %s247, 0
    %s250 = sadd.s32 %s249, 1
    %s251 = scalar_select %p248, %s249, %s250
    %p254 = pneg %p248
    %p255 = scmp.eq.s32.totalorder %s19, 1
    %p256 = por %p254, %p255
    %p257 = scmp.ne.s32.totalorder %s249, %s252
    %p258 = scmp.eq.s32.totalorder %s19, 0
    %p259 = por %p257, %p258
    %p260 = scmp.ne.s32.totalorder %s249, %s252
    %p261 = scmp.eq.s32.totalorder %s24, 1
    %p262 = por %p260, %p261
    %p263 = scmp.ne.s32.totalorder %s252, %s253
    %p264 = scmp.eq.s32.totalorder %s24, 0
    %p265 = por %p263, %p264
    %p266 = scmp.ne.s32.totalorder %s252, %s253
    %p267 = scmp.eq.s32.totalorder %s25, 1
    %p268 = por %p266, %p267
    %p270 = scmp.ne.s32.totalorder %s253, %s269
    %p271 = scmp.eq.s32.totalorder %s25, 0
    %p272 = por %p270, %p271
    %s273 = ssub.s32 %s27, %s34
    %p274 = scmp.eq.s32.totalorder %s273, 0
    %s276 = sadd.s32 %s275, 1
    %s277 = scalar_select %p274, %s275, %s276
    %p280 = pneg %p274
    %p281 = scmp.eq.s32.totalorder %s19, 1
    %p282 = por %p280, %p281
    %p283 = scmp.ne.s32.totalorder %s275, %s278
    %p284 = scmp.eq.s32.totalorder %s19, 0
    %p285 = por %p283, %p284
    %p286 = scmp.ne.s32.totalorder %s275, %s278
    %p287 = scmp.eq.s32.totalorder %s24, 1
    %p288 = por %p286, %p287
    %p289 = scmp.ne.s32.totalorder %s278, %s279
    %p290 = scmp.eq.s32.totalorder %s24, 0
    %p291 = por %p289, %p290
    %p292 = scmp.ne.s32.totalorder %s278, %s279
    %p293 = scmp.eq.s32.totalorder %s25, 1
    %p294 = por %p292, %p293
    %p296 = scmp.ne.s32.totalorder %s279, %s295
    %p297 = scmp.eq.s32.totalorder %s25, 0
    %p298 = por %p296, %p297
    %s299 = ssub.s32 %s27, %s34
    %p300 = scmp.eq.s32.totalorder %s299, 0
    %s302 = sadd.s32 %s301, 1
    %s303 = scalar_select %p300, %s301, %s302
    %p306 = pneg %p300
    %p307 = scmp.eq.s32.totalorder %s19, 1
    %p308 = por %p306, %p307
    %p309 = scmp.ne.s32.totalorder %s301, %s304
    %p310 = scmp.eq.s32.totalorder %s19, 0
    %p311 = por %p309, %p310
    %p312 = scmp.ne.s32.totalorder %s301, %s304
    %p313 = scmp.eq.s32.totalorder %s24, 1
    %p314 = por %p312, %p313
    %p315 = scmp.ne.s32.totalorder %s304, %s305
    %p316 = scmp.eq.s32.totalorder %s24, 0
    %p317 = por %p315, %p316
    %p318 = scmp.ne.s32.totalorder %s304, %s305
    %p319 = scmp.eq.s32.totalorder %s25, 1
    %p320 = por %p318, %p319
    %p322 = scmp.ne.s32.totalorder %s305, %s321
    %p323 = scmp.eq.s32.totalorder %s25, 0
    %p324 = por %p322, %p323
    %s325 = ssub.s32 %s27, %s34
    %p326 = scmp.eq.s32.totalorder %s325, 0
    %s328 = sadd.s32 %s327, 1
    %s329 = scalar_select %p326, %s327, %s328
    %p332 = pneg %p326
    %p333 = scmp.eq.s32.totalorder %s19, 1
    %p334 = por %p332, %p333
    %p335 = scmp.ne.s32.totalorder %s327, %s330
    %p336 = scmp.eq.s32.totalorder %s19, 0
    %p337 = por %p335, %p336
    %p338 = scmp.ne.s32.totalorder %s327, %s330
    %p339 = scmp.eq.s32.totalorder %s24, 1
    %p340 = por %p338, %p339
    %p341 = scmp.ne.s32.totalorder %s330, %s331
    %p342 = scmp.eq.s32.totalorder %s24, 0
    %p343 = por %p341, %p342
    %p344 = scmp.ne.s32.totalorder %s330, %s331
    %p345 = scmp.eq.s32.totalorder %s25, 1
    %p346 = por %p344, %p345
    %p348 = scmp.ne.s32.totalorder %s331, %s347
    %p349 = scmp.eq.s32.totalorder %s25, 0
    %p350 = por %p348, %p349
    %s351 = ssub.s32 %s27, %s34
    %p352 = scmp.eq.s32.totalorder %s351, 0
    %s354 = sadd.s32 %s353, 1
    %s355 = scalar_select %p352, %s353, %s354
    %p358 = pneg %p352
    %p359 = scmp.eq.s32.totalorder %s19, 1
    %p360 = por %p358, %p359
    %p361 = scmp.ne.s32.totalorder %s353, %s356
    %p362 = scmp.eq.s32.totalorder %s19, 0
    %p363 = por %p361, %p362
    %p364 = scmp.ne.s32.totalorder %s353, %s356
    %p365 = scmp.eq.s32.totalorder %s24, 1
    %p366 = por %p364, %p365
    %p367 = scmp.ne.s32.totalorder %s356, %s357
    %p368 = scmp.eq.s32.totalorder %s24, 0
    %p369 = por %p367, %p368
    %p370 = scmp.ne.s32.totalorder %s356, %s357
    %p371 = scmp.eq.s32.totalorder %s25, 1
    %p372 = por %p370, %p371
    %p374 = scmp.ne.s32.totalorder %s357, %s373
    %p375 = scmp.eq.s32.totalorder %s25, 0
    %p376 = por %p374, %p375
    %s377 = ssub.s32 %s26, %s38
    %p378 = scmp.eq.s32.totalorder %s377, 0
    %s380 = sadd.s32 %s379, 1
    %s381 = scalar_select %p378, %s379, %s380
    %p384 = pneg %p378
    %p385 = scmp.eq.s32.totalorder %s19, 1
    %p386 = por %p384, %p385
    %p387 = scmp.ne.s32.totalorder %s379, %s382
    %p388 = scmp.eq.s32.totalorder %s19, 0
    %p389 = por %p387, %p388
    %p390 = scmp.ne.s32.totalorder %s379, %s382
    %p391 = scmp.eq.s32.totalorder %s24, 1
    %p392 = por %p390, %p391
    %p393 = scmp.ne.s32.totalorder %s382, %s383
    %p394 = scmp.eq.s32.totalorder %s24, 0
    %p395 = por %p393, %p394
    %p396 = scmp.ne.s32.totalorder %s382, %s383
    %p397 = scmp.eq.s32.totalorder %s25, 1
    %p398 = por %p396, %p397
    %p400 = scmp.ne.s32.totalorder %s383, %s399
    %p401 = scmp.eq.s32.totalorder %s25, 0
    %p402 = por %p400, %p401
    %p403 = scmp.le.s32.totalorder 1, %s19
    %p404 = scmp.lt.s32.totalorder %s19, 3
    %p405 = pnand %p403, %p404
    %p406 = pneg %p405
    // Predicated region
    $region9: #{clip_vision_tower_forward.6} parent=5 // pred_check
      _
    $region10: #{clip_vision_tower_forward.6} parent=5 // pred_check_branch
      %408 = sbr.rel (%p405) target = $region12
    $region11: #{clip_vision_tower_forward.6} parent=5 // pred_region
      %s409 = ssub.s32 %s19, 1
      // Predicated region
      $region13: #{clip_vision_tower_forward.6} parent=11 // pred_check
        %p410 = pneg %p83
      $region14: #{clip_vision_tower_forward.6} parent=11 // pred_check_branch
        %412 = sbr.rel (%p410) target = $region16
      $region15: #{clip_vision_tower_forward.6} parent=11 // pred_region
        %p413 = scmp.lt.s32.totalorder %s29, 0
        %s414 = scalar_select %p413, %s29, 0
        %s415 = scalar_lea.vmem %s1, %s414
      $region16: #{clip_vision_tower_forward.6} parent=11 // pred_fallthru
        _
      // Predicated region
      $region17: #{clip_vision_tower_forward.6} parent=11 // pred_check
        %p416 = pneg %p109
      $region18: #{clip_vision_tower_forward.6} parent=11 // pred_check_branch
        %418 = sbr.rel (%p416) target = $region20
      $region19: #{clip_vision_tower_forward.6} parent=11 // pred_region
        %p419 = scmp.lt.s32.totalorder %s29, 0
        %s420 = scalar_select %p419, %s29, 0
        %s421 = scalar_lea.vmem %s2, %s420
      $region20: #{clip_vision_tower_forward.6} parent=11 // pred_fallthru
        _
      // Predicated region
      $region21: #{clip_vision_tower_forward.6} parent=11 // pred_check
        %p422 = pneg %p135
      $region22: #{clip_vision_tower_forward.6} parent=11 // pred_check_branch
        %424 = sbr.rel (%p422) target = $region24
      $region23: #{clip_vision_tower_forward.6} parent=11 // pred_region
        %p425 = scmp.lt.s32.totalorder %s29, 0
        %s426 = scalar_select %p425, %s29, 0
        %s427 = smul.addr %s426, 4
        %s428 = smul.addr %s427, 4
        %s429 = scalar_lea.vmem %s3, %s428
      $region24: #{clip_vision_tower_forward.6} parent=11 // pred_fallthru
        _
      // Predicated region
      $region25: #{clip_vision_tower_forward.6} parent=11 // pred_check
        %p430 = pneg %p161
      $region26: #{clip_vision_tower_forward.6} parent=11 // pred_check_branch
        %432 = sbr.rel (%p430) target = $region28
      $region27: #{clip_vision_tower_forward.6} parent=11 // pred_region
        %p433 = scmp.lt.s32.totalorder %s29, 0
        %s434 = scalar_select %p433, %s29, 0
        %s435 = scalar_lea.vmem %s4, %s434
      $region28: #{clip_vision_tower_forward.6} parent=11 // pred_fallthru
        _
      // Predicated region
      $region29: #{clip_vision_tower_forward.6} parent=11 // pred_check
        %p436 = pneg %p187
      $region30: #{clip_vision_tower_forward.6} parent=11 // pred_check_branch
        %438 = sbr.rel (%p436) target = $region32
      $region31: #{clip_vision_tower_forward.6} parent=11 // pred_region
        %p439 = scmp.lt.s32.totalorder %s29, 0
        %s440 = scalar_select %p439, %s29, 0
        %s441 = smul.addr %s440, 4
        %s442 = smul.addr %s441, 4
        %s443 = scalar_lea.vmem %s5, %s442
      $region32: #{clip_vision_tower_forward.6} parent=11 // pred_fallthru
        _
      // Predicated region
      $region33: #{clip_vision_tower_forward.6} parent=11 // pred_check
        %p444 = pneg %p213
      $region34: #{clip_vision_tower_forward.6} parent=11 // pred_check_branch
        %446 = sbr.rel (%p444) target = $region36
      $region35: #{clip_vision_tower_forward.6} parent=11 // pred_region
        %p447 = scmp.lt.s32.totalorder %s29, 0
        %s448 = scalar_select %p447, %s29, 0
        %s449 = scalar_lea.vmem %s6, %s448
      $region36: #{clip_vision_tower_forward.6} parent=11 // pred_fallthru
        _
      // Predicated region
      $region37: #{clip_vision_tower_forward.6} parent=11 // pred_check
        %p450 = pneg %p239
      $region38: #{clip_vision_tower_forward.6} parent=11 // pred_check_branch
        %452 = sbr.rel (%p450) target = $region40
      $region39: #{clip_vision_tower_forward.6} parent=11 // pred_region
        %p453 = scmp.lt.s32.totalorder %s29, 0
        %s454 = scalar_select %p453, %s29, 0
        %s455 = scalar_lea.vmem %s7, %s454
      $region40: #{clip_vision_tower_forward.6} parent=11 // pred_fallthru
        _
      // Predicated region
      $region41: #{clip_vision_tower_forward.6} parent=11 // pred_check
        %p456 = pneg %p265
      $region42: #{clip_vision_tower_forward.6} parent=11 // pred_check_branch
        %458 = sbr.rel (%p456) target = $region44
      $region43: #{clip_vision_tower_forward.6} parent=11 // pred_region
        %p459 = scmp.lt.s32.totalorder %s29, 0
        %s460 = scalar_select %p459, %s29, 0
        %s461 = scalar_lea.vmem %s8, %s460
      $region44: #{clip_vision_tower_forward.6} parent=11 // pred_fallthru
        _
      // Predicated region
      $region45: #{clip_vision_tower_forward.6} parent=11 // pred_check
        %p462 = pneg %p291
      $region46: #{clip_vision_tower_forward.6} parent=11 // pred_check_branch
        %464 = sbr.rel (%p462) target = $region48
      $region47: #{clip_vision_tower_forward.6} parent=11 // pred_region
        %p465 = scmp.lt.s32.totalorder %s29, 0
        %s466 = scalar_select %p465, %s29, 0
        %s467 = smul.addr %s466, 4
        %s468 = smul.addr %s467, 4
        %s469 = scalar_lea.vmem %s9, %s468
      $region48: #{clip_vision_tower_forward.6} parent=11 // pred_fallthru
        _
      // Predicated region
      $region49: #{clip_vision_tower_forward.6} parent=11 // pred_check
        %p470 = pneg %p317
      $region50: #{clip_vision_tower_forward.6} parent=11 // pred_check_branch
        %472 = sbr.rel (%p470) target = $region52
      $region51: #{clip_vision_tower_forward.6} parent=11 // pred_region
        %p473 = scmp.lt.s32.totalorder %s29, 0
        %s474 = scalar_select %p473, %s29, 0
        %s475 = scalar_lea.vmem %s10, %s474
      $region52: #{clip_vision_tower_forward.6} parent=11 // pred_fallthru
        _
      // Predicated region
      $region53: #{clip_vision_tower_forward.6} parent=11 // pred_check
        %p476 = pneg %p343
      $region54: #{clip_vision_tower_forward.6} parent=11 // pred_check_branch
        %478 = sbr.rel (%p476) target = $region56
      $region55: #{clip_vision_tower_forward.6} parent=11 // pred_region
        %p479 = scmp.lt.s32.totalorder %s29, 0
        %s480 = scalar_select %p479, %s29, 0
        %s481 = smul.addr %s480, 8
        %s482 = smul.addr %s481, 4
        %s483 = scalar_lea.vmem %s11, %s482
      $region56: #{clip_vision_tower_forward.6} parent=11 // pred_fallthru
        _
      // Predicated region
      $region57: #{clip_vision_tower_forward.6} parent=11 // pred_check
        %p484 = pneg %p369
      $region58: #{clip_vision_tower_forward.6} parent=11 // pred_check_branch
        %486 = sbr.rel (%p484) target = $region60
      $region59: #{clip_vision_tower_forward.6} parent=11 // pred_region
        %p487 = scmp.lt.s32.totalorder %s29, 0
        %s488 = scalar_select %p487, %s29, 0
        %s489 = scalar_lea.vmem %s12, %s488
      $region60: #{clip_vision_tower_forward.6} parent=11 // pred_fallthru
        _
    $region12: #{clip_vision_tower_forward.6} parent=5 // pred_fallthru
      _
    %p490 = scmp.lt.s32.totalorder %s19, 2
    // Predicated region
    $region61: #{clip_vision_tower_forward.6} parent=5 // pred_check
      %p491 = pneg %p490
    $region62: #{clip_vision_tower_forward.6} parent=5 // pred_check_branch
      %493 = sbr.rel (%p491) target = $region64
    $region63: #{clip_vision_tower_forward.6} parent=5 // pred_region
      // Predicated region
      $region65: #{clip_vision_tower_forward.6} parent=63 // pred_check
        %p494 = pneg %p51
      $region66: #{clip_vision_tower_forward.6} parent=63 // pred_check_branch
        %496 = sbr.rel (%p494) target = $region68
      $region67: #{clip_vision_tower_forward.6} parent=63 // pred_region
        %p497 = scmp.lt.s32.totalorder %s26, 1
        %s498 = scalar_select %p497, %s26, 1
        %s499 = smul.addr %s498, 8
        %s500 = scalar_lea.vmem %s0, %s499
      $region68: #{clip_vision_tower_forward.6} parent=63 // pred_fallthru
        _
    $region64: #{clip_vision_tower_forward.6} parent=5 // pred_fallthru
      _
    %p501 = scmp.le.s32.totalorder 1, %s19
    %p502 = scmp.lt.s32.totalorder %s19, 3
    %p503 = pnand %p501, %p502
    %p504 = pneg %p503
    // Predicated region
    $region69: #{clip_vision_tower_forward.6} parent=5 // pred_check
      _
    $region70: #{clip_vision_tower_forward.6} parent=5 // pred_check_branch
      %506 = sbr.rel (%p503) target = $region72
    $region71: #{clip_vision_tower_forward.6} parent=5 // pred_region
      %s507 = ssub.s32 %s19, 1
      %p508 = scmp.lt.s32.totalorder %s28, 1
      %s509 = scalar_select %p508, %s28, 1
      %s510 = smul.addr %s509, 8
      %s511 = scalar_lea.vmem %s0, %s510
      %p512 = pneg %p57
      %p513 = pneg %p54
      %p514 = scmp.lt.s32.totalorder %s29, 0
      %s515 = scalar_select %p514, %s29, 0
      %s516 = scalar_lea.vmem %s1, %s515
      %p517 = pneg %p83
      %p518 = pneg %p80
      %p519 = scmp.lt.s32.totalorder %s29, 0
      %s520 = scalar_select %p519, %s29, 0
      %s521 = scalar_lea.vmem %s2, %s520
      %p522 = pneg %p109
      %p523 = pneg %p106
      %p524 = scmp.lt.s32.totalorder %s29, 0
      %s525 = scalar_select %p524, %s29, 0
      %s526 = smul.addr %s525, 4
      %s527 = smul.addr %s526, 4
      %s528 = scalar_lea.vmem %s3, %s527
      %p529 = pneg %p135
      %p530 = pneg %p132
      %p531 = scmp.lt.s32.totalorder %s29, 0
      %s532 = scalar_select %p531, %s29, 0
      %s533 = scalar_lea.vmem %s4, %s532
      %p534 = pneg %p161
      %p535 = pneg %p158
      %p536 = scmp.lt.s32.totalorder %s29, 0
      %s537 = scalar_select %p536, %s29, 0
      %s538 = smul.addr %s537, 4
      %s539 = smul.addr %s538, 4
      %s540 = scalar_lea.vmem %s5, %s539
      %p541 = pneg %p187
      %p542 = pneg %p184
      %p543 = scmp.lt.s32.totalorder %s29, 0
      %s544 = scalar_select %p543, %s29, 0
      %s545 = scalar_lea.vmem %s6, %s544
      %p546 = pneg %p213
      %p547 = pneg %p210
      %p548 = scmp.lt.s32.totalorder %s29, 0
      %s549 = scalar_select %p548, %s29, 0
      %s550 = scalar_lea.vmem %s7, %s549
      %p551 = pneg %p239
      %p552 = pneg %p236
      %p553 = scmp.lt.s32.totalorder %s29, 0
      %s554 = scalar_select %p553, %s29, 0
      %s555 = scalar_lea.vmem %s8, %s554
      %p556 = pneg %p265
      %p557 = pneg %p262
      %p558 = scmp.lt.s32.totalorder %s29, 0
      %s559 = scalar_select %p558, %s29, 0
      %s560 = smul.addr %s559, 4
      %s561 = smul.addr %s560, 4
      %s562 = scalar_lea.vmem %s9, %s561
      %p563 = pneg %p291
      %p564 = pneg %p288
      %p565 = scmp.lt.s32.totalorder %s29, 0
      %s566 = scalar_select %p565, %s29, 0
      %s567 = scalar_lea.vmem %s10, %s566
      %p568 = pneg %p317
      %p569 = pneg %p314
      %p570 = scmp.lt.s32.totalorder %s29, 0
      %s571 = scalar_select %p570, %s29, 0
      %s572 = smul.addr %s571, 8
      %s573 = smul.addr %s572, 4
      %s574 = scalar_lea.vmem %s11, %s573
      %p575 = pneg %p343
      %p576 = pneg %p340
      %p577 = scmp.lt.s32.totalorder %s29, 0
      %s578 = scalar_select %p577, %s29, 0
      %s579 = scalar_lea.vmem %s12, %s578
      %p580 = pneg %p369
      %p581 = pneg %p366
      %p582 = pneg %p395
      %p583 = pneg %p392
      %p584 = scmp.lt.s32.totalorder %s28, 1
      %s585 = scalar_select %p584, %s28, 1
      %s586 = smul.addr %s585, 8
      %s587 = scalar_lea.vmem %s13, %s586
      %p588 = scmp.lt.s32.totalorder %s28, 1
      %s589 = scalar_select %p588, %s28, 1
      %s590 = smul.addr %s589, 8
      %s591 = scalar_lea.vmem %s0, %s590
      %p592 = scmp.lt.s32.totalorder %s29, 0
      %s593 = scalar_select %p592, %s29, 0
      %s594 = scalar_lea.vmem %s1, %s593
      %p595 = scmp.lt.s32.totalorder %s29, 0
      %s596 = scalar_select %p595, %s29, 0
      %s597 = scalar_lea.vmem %s2, %s596
      %p598 = scmp.lt.s32.totalorder %s29, 0
      %s599 = scalar_select %p598, %s29, 0
      %s600 = smul.addr %s599, 4
      %s601 = smul.addr %s600, 4
      %s602 = scalar_lea.vmem %s3, %s601
      %p603 = scmp.lt.s32.totalorder %s29, 0
      %s604 = scalar_select %p603, %s29, 0
      %s605 = scalar_lea.vmem %s4, %s604
      %p606 = scmp.lt.s32.totalorder %s29, 0
      %s607 = scalar_select %p606, %s29, 0
      %s608 = smul.addr %s607, 4
      %s609 = smul.addr %s608, 4
      %s610 = scalar_lea.vmem %s5, %s609
      %p611 = scmp.lt.s32.totalorder %s29, 0
      %s612 = scalar_select %p611, %s29, 0
      %s613 = scalar_lea.vmem %s6, %s612
      %p614 = scmp.lt.s32.totalorder %s29, 0
      %s615 = scalar_select %p614, %s29, 0
      %s616 = scalar_lea.vmem %s7, %s615
      %p617 = scmp.lt.s32.totalorder %s29, 0
      %s618 = scalar_select %p617, %s29, 0
      %s619 = scalar_lea.vmem %s8, %s618
      %p620 = scmp.lt.s32.totalorder %s29, 0
      %s621 = scalar_select %p620, %s29, 0
      %s622 = smul.addr %s621, 4
      %s623 = smul.addr %s622, 4
      %s624 = scalar_lea.vmem %s9, %s623
      %p625 = scmp.lt.s32.totalorder %s29, 0
      %s626 = scalar_select %p625, %s29, 0
      %s627 = scalar_lea.vmem %s10, %s626
      %p628 = scmp.lt.s32.totalorder %s29, 0
      %s629 = scalar_select %p628, %s29, 0
      %s630 = smul.addr %s629, 8
      %s631 = smul.addr %s630, 4
      %s632 = scalar_lea.vmem %s11, %s631
      %p633 = scmp.lt.s32.totalorder %s29, 0
      %s634 = scalar_select %p633, %s29, 0
      %s635 = scalar_lea.vmem %s12, %s634
      %p636 = scmp.lt.s32.totalorder %s28, 1
      %s637 = scalar_select %p636, %s28, 1
      %s638 = smul.addr %s637, 8
      %s639 = scalar_lea.vmem %s13, %s638
      %p641 = scmp.eq.s32.totalorder %s29, 0
      // Predicated region
      $region73: #{clip_vision_tower_forward.6} parent=71 // pred_check
        %p642 = pneg %p641
      $region74: #{clip_vision_tower_forward.6} parent=71 // pred_check_branch
        %644 = sbr.rel (%p642) target = $region76
      $region75: #{clip_vision_tower_forward.6} parent=71 // pred_region
        %v645 = vld [vmem:[%s591] sm:$0xff]
        %vm646 = vcmask 261120
        %647 = vst.msk [vmem:[#allocation2] sm:$0xff] %vm646, %v645
      $region76: #{clip_vision_tower_forward.6} parent=71 // pred_fallthru
        _
      %v648 = vld [vmem:[#allocation2] sm:$0xff]
      %v649 = vld [vmem:[%s594] sm:$0x1]
      %v650 = vld [vmem:[%s597] sm:$0x1]
      %vm651 = vcmask 261120
      %v652 = vsel %vm651, %v648, 0.0
      %653 = vadd.xlane.f32.xlu0 %v652
      %v654 = vpop.xlane.xlu0 %653
      %v655 = vrcp.pop 32.0
      %v656 = vmul.f32 %v654, %v655
      %v657 = vsub.f32 %v648, %v656
      %v658 = vmul.f32 %v657, %v657
      %v659 = vsel %vm651, %v658, 0.0
      %660 = vadd.xlane.f32.xlu0 %v659
      %v661 = vpop.xlane.xlu0 %660
      %v662 = vmul.f32 %v661, %v655
      %v663 = vadd.f32 %v662, 1e-05
      %v664 = vrsqrt.pop %v663
      %v665 = vmul.f32 %v657, %v664
      %v667 = vlaneseq
      %v668 = vshrl.u32 %v667, 7
      %v669 = vsub.s32 0, %v668
      %v670 = vrot.slane %v649, %v669
      %v672 = vmul.f32 %v665, %v670
      %v674 = vlaneseq
      %v675 = vshrl.u32 %v674, 7
      %v676 = vsub.s32 0, %v675
      %v677 = vrot.slane %v650, %v676
      %v679 = vadd.f32 %v672, %v677
      %v680 = vpack.c.bf16 %v679, %v679
      %v681 = vld [vmem:[%s602] sm:$0xf]
      %v682 = vld [vmem:[%s602 + $0x4] sm:$0xf]
      %v683 = vld [vmem:[%s602 + $0x8] sm:$0xf]
      %v684 = vld [vmem:[%s602 + $0xc] sm:$0xf]
      %v685 = vld [vmem:[%s605] sm:$0x1]
      %v687 = vlaneseq
      %v688 = vshrl.u32 %v687, 7
      %v689 = vsub.s32 0, %v688
      %v690 = vrot.slane %v685, %v689
      %v696 = vunpack.c.l.b16 %v681
      %v697 = vunpack.c.l.b16 %v682
      %v698 = vunpack.c.l.b16 %v683
      %v699 = vunpack.c.l.b16 %v684
      %v700 = vpack.c.b16 %v697, %v696
      %v701 = vpack.c.b16 %v699, %v698
      %v705 = vsel %vm651, %v680, 0
      %707 = vmatprep.subr.bf16.mxu0 0
      %708 = vmatpush1.bf16.msra.mxu0 0
      %709 = vmatprep.subr.bf16.mxu0 0
      %710 = vmatpush1.bf16.msra.mxu0 0
      %711 = vmatprep.subr.bf16.mxu0 0
      %712 = vmatpush1.bf16.msra.mxu0 0
      %713 = vmatprep.subr.bf16.mxu0 0
      %714 = vmatpush1.bf16.msra.mxu0 0
      %715 = vmatprep.subr.bf16.mxu0 0
      %716 = vmatpush1.bf16.msra.mxu0 0
      %717 = vmatprep.subr.bf16.mxu0 0
      %718 = vmatpush1.bf16.msra.mxu0 0
      %719 = vmatprep.subr.bf16.mxu0 0
      %720 = vmatpush1.bf16.msra.mxu0 %v701
      %721 = vmatprep.subr.bf16.mxu0 0
      %722 = vmatpush1.bf16.msra.mxu0 %v700
      %723 = vmatprep.subr.bf16.mxu0 0
      %724 = vmatpush2.bf16.msra.mxu0 0
      %725 = vmatprep.subr.bf16.mxu0 0
      %726 = vmatpush2.bf16.msra.mxu0 0
      %727 = vmatprep.subr.bf16.mxu0 0
      %728 = vmatpush2.bf16.msra.mxu0 0
      %729 = vmatprep.subr.bf16.mxu0 0
      %730 = vmatpush2.bf16.msra.mxu0 0
      %731 = vmatprep.subr.bf16.mxu0 0
      %732 = vmatpush2.bf16.msra.mxu0 0
      %733 = vmatprep.subr.bf16.mxu0 0
      %734 = vmatpush2.bf16.msra.mxu0 0
      %735 = vmatprep.subr.bf16.mxu0 0
      %736 = vmatpush2.bf16.msra.mxu0 0
      %737 = vmatprep.subr.bf16.mxu0 0
      %738 = vmatpush2.bf16.msra.mxu0 0
      %739 = vmatprep.mubr.bf16.mxu0 0
      %740 = vmatmul.mubr.bf16.gmra.mxu0 %v705
      %v741 = vpop.f32.mrf.mxu0
      %v742 = vadd.f32 %v690, %v741
      %v743 = vpop.f32.mrf.mxu0
      %v744 = vpop.f32.mrf.mxu0
      %v745 = vpop.f32.mrf.mxu0
      %746 = vdwg.mxu0
      %v747 = vpack.c.bf16 %v742, %v742
      %vm748 = vcmask 781312
      %749 = vst.msk [vmem:[#allocation3] sm:$0xf] %vm748, %v747
      %v750 = vlaneseq
      %v751 = vand.u32 %v750, 127
      %vm752 = vcmp.ge.s32.totalorder %v751, 5
      %v753 = vsel %vm752, -1e+09, 0.0
      %v754 = vld [vmem:[#allocation3] sm:$0xf]
      %v756 = vunpack.c.l.b16 %v754
      %v757 = vpack.c.b16 %v756, %v756
      %758 = vrot.lane.b32.xlu0 %v757, 96
      %v759 = vpop.permute.xlu0 %758
      %vm760 = vcmask 64512
      %v762 = vsel %vm760, %v754, 0
      %v765 = vsel %vm760, %v759, 0
      %767 = vmatprep.subr.bf16.mxu0 0
      %768 = vmatpush1.bf16.xpose.msra.mxu0 0
      %769 = vmatprep.subr.bf16.mxu0 0
      %770 = vmatpush1.bf16.xpose.msra.mxu0 0
      %771 = vmatprep.subr.bf16.mxu0 0
      %772 = vmatpush1.bf16.xpose.msra.mxu0 0
      %773 = vmatprep.subr.bf16.mxu0 0
      %774 = vmatpush1.bf16.xpose.msra.mxu0 0
      %775 = vmatprep.subr.bf16.mxu0 0
      %776 = vmatpush1.bf16.xpose.msra.mxu0 0
      %777 = vmatprep.subr.bf16.mxu0 0
      %778 = vmatpush1.bf16.xpose.msra.mxu0 0
      %779 = vmatprep.subr.bf16.mxu0 0
      %780 = vmatpush1.bf16.xpose.msra.mxu0 0
      %781 = vmatprep.subr.bf16.mxu0 0
      %782 = vmatpush1.bf16.xpose.msra.mxu0 %v765
      %783 = vmatprep.subr.bf16.mxu0 0
      %784 = vmatpush2.bf16.xpose.msra.mxu0 0
      %785 = vmatprep.subr.bf16.mxu0 0
      %786 = vmatpush2.bf16.xpose.msra.mxu0 0
      %787 = vmatprep.subr.bf16.mxu0 0
      %788 = vmatpush2.bf16.xpose.msra.mxu0 0
      %789 = vmatprep.subr.bf16.mxu0 0
      %790 = vmatpush2.bf16.xpose.msra.mxu0 0
      %791 = vmatprep.subr.bf16.mxu0 0
      %792 = vmatpush2.bf16.xpose.msra.mxu0 0
      %793 = vmatprep.subr.bf16.mxu0 0
      %794 = vmatpush2.bf16.xpose.msra.mxu0 0
      %795 = vmatprep.subr.bf16.mxu0 0
      %796 = vmatpush2.bf16.xpose.msra.mxu0 0
      %797 = vmatprep.subr.bf16.mxu0 0
      %798 = vmatpush2.bf16.xpose.msra.mxu0 0
      %799 = vmatprep.mubr.bf16.mxu0 0
      %800 = vmatmul.mubr.bf16.gmra.mxu0 %v762
      %v801 = vpop.f32.mrf.mxu0
      %v802 = vadd.f32 0.0, %v801
      %v803 = vpop.f32.mrf.mxu0
      %v804 = vpop.f32.mrf.mxu0
      %v805 = vpop.f32.mrf.mxu0
      %806 = vdwg.mxu0
      %v807 = vmul.f32 %v802, 0.35355338
      %v808 = vadd.f32 %v807, %v753
      %v809 = vsel %vm760, %v808, -inf
      %810 = vmax.xlane.f32.xlu0 %v809
      %v811 = vpop.xlane.xlu0 %810
      %v812 = vsub.f32 %v808, %v811
      %v813 = vmul.f32 %v812, 1.442695
      %v814 = vpow.pop %v813
      %v815 = vsel %vm760, %v814, 0.0
      %816 = vadd.xlane.f32.xlu0 %v815
      %v817 = vpop.xlane.xlu0 %816
      %v818 = vrcp.pop %v817
      %v819 = vmul.f32 %v814, %v818
      %v820 = vpack.c.bf16 %v819, %v819
      %821 = vrot.lane.b32.xlu0 %v757, 64
      %v822 = vpop.permute.xlu0 %821
      %v824 = vsel %vm760, %v820, 0
      %vm826 = vcmask 1043456
      %v828 = vsel %vm826, %v822, 0
      %830 = vmatprep.subr.bf16.mxu0 0
      %831 = vmatpush1.bf16.msra.mxu0 0
      %832 = vmatprep.subr.bf16.mxu0 0
      %833 = vmatpush1.bf16.msra.mxu0 0
      %834 = vmatprep.subr.bf16.mxu0 0
      %835 = vmatpush1.bf16.msra.mxu0 0
      %836 = vmatprep.subr.bf16.mxu0 0
      %837 = vmatpush1.bf16.msra.mxu0 0
      %838 = vmatprep.subr.bf16.mxu0 0
      %839 = vmatpush1.bf16.msra.mxu0 0
      %840 = vmatprep.subr.bf16.mxu0 0
      %841 = vmatpush1.bf16.msra.mxu0 0
      %842 = vmatprep.subr.bf16.mxu0 0
      %843 = vmatpush1.bf16.msra.mxu0 0
      %844 = vmatprep.subr.bf16.mxu0 0
      %845 = vmatpush1.bf16.msra.mxu0 %v828
      %846 = vmatprep.subr.bf16.mxu0 0
      %847 = vmatpush2.bf16.msra.mxu0 0
      %848 = vmatprep.subr.bf16.mxu0 0
      %849 = vmatpush2.bf16.msra.mxu0 0
      %850 = vmatprep.subr.bf16.mxu0 0
      %851 = vmatpush2.bf16.msra.mxu0 0
      %852 = vmatprep.subr.bf16.mxu0 0
      %853 = vmatpush2.bf16.msra.mxu0 0
      %854 = vmatprep.subr.bf16.mxu0 0
      %855 = vmatpush2.bf16.msra.mxu0 0
      %856 = vmatprep.subr.bf16.mxu0 0
      %857 = vmatpush2.bf16.msra.mxu0 0
      %858 = vmatprep.subr.bf16.mxu0 0
      %859 = vmatpush2.bf16.msra.mxu0 0
      %860 = vmatprep.subr.bf16.mxu0 0
      %861 = vmatpush2.bf16.msra.mxu0 0
      %862 = vmatprep.mubr.bf16.mxu0 0
      %863 = vmatmul.mubr.bf16.gmra.mxu0 %v824
      %v864 = vpop.f32.mrf.mxu0
      %v865 = vadd.f32 0.0, %v864
      %v866 = vpop.f32.mrf.mxu0
      %v867 = vpop.f32.mrf.mxu0
      %v868 = vpop.f32.mrf.mxu0
      %869 = vdwg.mxu0
      %870 = vst.msk [vmem:[#allocation4] sm:$0xff] %vm760, %v865
      %v871 = vld [vmem:[#allocation3] sm:$0xf]
      %v873 = vunpack.c.l.b16 %v871
      %v874 = vpack.c.b16 %v873, %v873
      %875 = vrot.lane.b32.xlu0 %v874, 120
      %v876 = vpop.permute.xlu0 %875
      %877 = vrot.lane.b32.xlu0 %v874, 88
      %v878 = vpop.permute.xlu0 %877
      %v880 = vsel %vm760, %v876, 0
      %v883 = vsel %vm760, %v878, 0
      %885 = vmatprep.subr.bf16.mxu0 0
      %886 = vmatpush1.bf16.xpose.msra.mxu0 0
      %887 = vmatprep.subr.bf16.mxu0 0
      %888 = vmatpush1.bf16.xpose.msra.mxu0 0
      %889 = vmatprep.subr.bf16.mxu0 0
      %890 = vmatpush1.bf16.xpose.msra.mxu0 0
      %891 = vmatprep.subr.bf16.mxu0 0
      %892 = vmatpush1.bf16.xpose.msra.mxu0 0
      %893 = vmatprep.subr.bf16.mxu0 0
      %894 = vmatpush1.bf16.xpose.msra.mxu0 0
      %895 = vmatprep.subr.bf16.mxu0 0
      %896 = vmatpush1.bf16.xpose.msra.mxu0 0
      %897 = vmatprep.subr.bf16.mxu0 0
      %898 = vmatpush1.bf16.xpose.msra.mxu0 0
      %899 = vmatprep.subr.bf16.mxu0 0
      %900 = vmatpush1.bf16.xpose.msra.mxu0 %v883
      %901 = vmatprep.subr.bf16.mxu0 0
      %902 = vmatpush2.bf16.xpose.msra.mxu0 0
      %903 = vmatprep.subr.bf16.mxu0 0
      %904 = vmatpush2.bf16.xpose.msra.mxu0 0
      %905 = vmatprep.subr.bf16.mxu0 0
      %906 = vmatpush2.bf16.xpose.msra.mxu0 0
      %907 = vmatprep.subr.bf16.mxu0 0
      %908 = vmatpush2.bf16.xpose.msra.mxu0 0
      %909 = vmatprep.subr.bf16.mxu0 0
      %910 = vmatpush2.bf16.xpose.msra.mxu0 0
      %911 = vmatprep.subr.bf16.mxu0 0
      %912 = vmatpush2.bf16.xpose.msra.mxu0 0
      %913 = vmatprep.subr.bf16.mxu0 0
      %914 = vmatpush2.bf16.xpose.msra.mxu0 0
      %915 = vmatprep.subr.bf16.mxu0 0
      %916 = vmatpush2.bf16.xpose.msra.mxu0 0
      %917 = vmatprep.mubr.bf16.mxu0 0
      %918 = vmatmul.mubr.bf16.gmra.mxu0 %v880
      %v919 = vpop.f32.mrf.mxu0
      %v920 = vadd.f32 0.0, %v919
      %v921 = vpop.f32.mrf.mxu0
      %v922 = vpop.f32.mrf.mxu0
      %v923 = vpop.f32.mrf.mxu0
      %924 = vdwg.mxu0
      %v925 = vmul.f32 %v920, 0.35355338
      %v926 = vadd.f32 %v925, %v753
      %v927 = vsel %vm760, %v926, -inf
      %928 = vmax.xlane.f32.xlu0 %v927
      %v929 = vpop.xlane.xlu0 %928
      %v930 = vsub.f32 %v926, %v929
      %v931 = vmul.f32 %v930, 1.442695
      %v932 = vpow.pop %v931
      %v933 = vsel %vm760, %v932, 0.0
      %934 = vadd.xlane.f32.xlu0 %v933
      %v935 = vpop.xlane.xlu0 %934
      %v936 = vrcp.pop %v935
      %v937 = vmul.f32 %v932, %v936
      %v938 = vpack.c.bf16 %v937, %v937
      %939 = vrot.lane.b32.xlu0 %v874, 56
      %v940 = vpop.permute.xlu0 %939
      %v942 = vsel %vm760, %v938, 0
      %v945 = vsel %vm826, %v940, 0
      %947 = vmatprep.subr.bf16.mxu0 0
      %948 = vmatpush1.bf16.msra.mxu0 0
      %949 = vmatprep.subr.bf16.mxu0 0
      %950 = vmatpush1.bf16.msra.mxu0 0
      %951 = vmatprep.subr.bf16.mxu0 0
      %952 = vmatpush1.bf16.msra.mxu0 0
      %953 = vmatprep.subr.bf16.mxu0 0
      %954 = vmatpush1.bf16.msra.mxu0 0
      %955 = vmatprep.subr.bf16.mxu0 0
      %956 = vmatpush1.bf16.msra.mxu0 0
      %957 = vmatprep.subr.bf16.mxu0 0
      %958 = vmatpush1.bf16.msra.mxu0 0
      %959 = vmatprep.subr.bf16.mxu0 0
      %960 = vmatpush1.bf16.msra.mxu0 0
      %961 = vmatprep.subr.bf16.mxu0 0
      %962 = vmatpush1.bf16.msra.mxu0 %v945
      %963 = vmatprep.subr.bf16.mxu0 0
      %964 = vmatpush2.bf16.msra.mxu0 0
      %965 = vmatprep.subr.bf16.mxu0 0
      %966 = vmatpush2.bf16.msra.mxu0 0
      %967 = vmatprep.subr.bf16.mxu0 0
      %968 = vmatpush2.bf16.msra.mxu0 0
      %969 = vmatprep.subr.bf16.mxu0 0
      %970 = vmatpush2.bf16.msra.mxu0 0
      %971 = vmatprep.subr.bf16.mxu0 0
      %972 = vmatpush2.bf16.msra.mxu0 0
      %973 = vmatprep.subr.bf16.mxu0 0
      %974 = vmatpush2.bf16.msra.mxu0 0
      %975 = vmatprep.subr.bf16.mxu0 0
      %976 = vmatpush2.bf16.msra.mxu0 0
      %977 = vmatprep.subr.bf16.mxu0 0
      %978 = vmatpush2.bf16.msra.mxu0 0
      %979 = vmatprep.mubr.bf16.mxu0 0
      %980 = vmatmul.mubr.bf16.gmra.mxu0 %v942
      %v981 = vpop.f32.mrf.mxu0
      %v982 = vadd.f32 0.0, %v981
      %v983 = vpop.f32.mrf.mxu0
      %v984 = vpop.f32.mrf.mxu0
      %v985 = vpop.f32.mrf.mxu0
      %986 = vdwg.mxu0
      %988 = vrot.lane.b32.xlu0 %v982, 8
      %v989 = vpop.permute.xlu0 %988
      %vm991 = vcmask 130112
      %992 = vst.msk [vmem:[#allocation4] sm:$0xff] %vm991, %v989
      %v993 = vld [vmem:[#allocation3] sm:$0xf]
      %v995 = vunpack.c.l.b16 %v993
      %v996 = vpack.c.b16 %v995, %v995
      %997 = vrot.lane.b32.xlu0 %v996, 112
      %v998 = vpop.permute.xlu0 %997
      %999 = vrot.lane.b32.xlu0 %v996, 80
      %v1000 = vpop.permute.xlu0 %999
      %v1002 = vsel %vm760, %v998, 0
      %v1005 = vsel %vm760, %v1000, 0
      %1007 = vmatprep.subr.bf16.mxu0 0
      %1008 = vmatpush1.bf16.xpose.msra.mxu0 0
      %1009 = vmatprep.subr.bf16.mxu0 0
      %1010 = vmatpush1.bf16.xpose.msra.mxu0 0
      %1011 = vmatprep.subr.bf16.mxu0 0
      %1012 = vmatpush1.bf16.xpose.msra.mxu0 0
      %1013 = vmatprep.subr.bf16.mxu0 0
      %1014 = vmatpush1.bf16.xpose.msra.mxu0 0
      %1015 = vmatprep.subr.bf16.mxu0 0
      %1016 = vmatpush1.bf16.xpose.msra.mxu0 0
      %1017 = vmatprep.subr.bf16.mxu0 0
      %1018 = vmatpush1.bf16.xpose.msra.mxu0 0
      %1019 = vmatprep.subr.bf16.mxu0 0
      %1020 = vmatpush1.bf16.xpose.msra.mxu0 0
      %1021 = vmatprep.subr.bf16.mxu0 0
      %1022 = vmatpush1.bf16.xpose.msra.mxu0 %v1005
      %1023 = vmatprep.subr.bf16.mxu0 0
      %1024 = vmatpush2.bf16.xpose.msra.mxu0 0
      %1025 = vmatprep.subr.bf16.mxu0 0
      %1026 = vmatpush2.bf16.xpose.msra.mxu0 0
      %1027 = vmatprep.subr.bf16.mxu0 0
      %1028 = vmatpush2.bf16.xpose.msra.mxu0 0
      %1029 = vmatprep.subr.bf16.mxu0 0
      %1030 = vmatpush2.bf16.xpose.msra.mxu0 0
      %1031 = vmatprep.subr.bf16.mxu0 0
      %1032 = vmatpush2.bf16.xpose.msra.mxu0 0
      %1033 = vmatprep.subr.bf16.mxu0 0
      %1034 = vmatpush2.bf16.xpose.msra.mxu0 0
      %1035 = vmatprep.subr.bf16.mxu0 0
      %1036 = vmatpush2.bf16.xpose.msra.mxu0 0
      %1037 = vmatprep.subr.bf16.mxu0 0
      %1038 = vmatpush2.bf16.xpose.msra.mxu0 0
      %1039 = vmatprep.mubr.bf16.mxu0 0
      %1040 = vmatmul.mubr.bf16.gmra.mxu0 %v1002
      %v1041 = vpop.f32.mrf.mxu0
      %v1042 = vadd.f32 0.0, %v1041
      %v1043 = vpop.f32.mrf.mxu0
      %v1044 = vpop.f32.mrf.mxu0
      %v1045 = vpop.f32.mrf.mxu0
      %1046 = vdwg.mxu0
      %v1047 = vmul.f32 %v1042, 0.35355338
      %v1048 = vadd.f32 %v1047, %v753
      %v1049 = vsel %vm760, %v1048, -inf
      %1050 = vmax.xlane.f32.xlu0 %v1049
      %v1051 = vpop.xlane.xlu0 %1050
      %v1052 = vsub.f32 %v1048, %v1051
      %v1053 = vmul.f32 %v1052, 1.442695
      %v1054 = vpow.pop %v1053
      %v1055 = vsel %vm760, %v1054, 0.0
      %1056 = vadd.xlane.f32.xlu0 %v1055
      %v1057 = vpop.xlane.xlu0 %1056
      %v1058 = vrcp.pop %v1057
      %v1059 = vmul.f32 %v1054, %v1058
      %v1060 = vpack.c.bf16 %v1059, %v1059
      %1061 = vrot.lane.b32.xlu0 %v996, 48
      %v1062 = vpop.permute.xlu0 %1061
      %v1064 = vsel %vm760, %v1060, 0
      %v1067 = vsel %vm826, %v1062, 0
      %1069 = vmatprep.subr.bf16.mxu0 0
      %1070 = vmatpush1.bf16.msra.mxu0 0
      %1071 = vmatprep.subr.bf16.mxu0 0
      %1072 = vmatpush1.bf16.msra.mxu0 0
      %1073 = vmatprep.subr.bf16.mxu0 0
      %1074 = vmatpush1.bf16.msra.mxu0 0
      %1075 = vmatprep.subr.bf16.mxu0 0
      %1076 = vmatpush1.bf16.msra.mxu0 0
      %1077 = vmatprep.subr.bf16.mxu0 0
      %1078 = vmatpush1.bf16.msra.mxu0 0
      %1079 = vmatprep.subr.bf16.mxu0 0
      %1080 = vmatpush1.bf16.msra.mxu0 0
      %1081 = vmatprep.subr.bf16.mxu0 0
      %1082 = vmatpush1.bf16.msra.mxu0 0
      %1083 = vmatprep.subr.bf16.mxu0 0
      %1084 = vmatpush1.bf16.msra.mxu0 %v1067
      %1085 = vmatprep.subr.bf16.mxu0 0
      %1086 = vmatpush2.bf16.msra.mxu0 0
      %1087 = vmatprep.subr.bf16.mxu0 0
      %1088 = vmatpush2.bf16.msra.mxu0 0
      %1089 = vmatprep.subr.bf16.mxu0 0
      %1090 = vmatpush2.bf16.msra.mxu0 0
      %1091 = vmatprep.subr.bf16.mxu0 0
      %1092 = vmatpush2.bf16.msra.mxu0 0
      %1093 = vmatprep.subr.bf16.mxu0 0
      %1094 = vmatpush2.bf16.msra.mxu0 0
      %1095 = vmatprep.subr.bf16.mxu0 0
      %1096 = vmatpush2.bf16.msra.mxu0 0
      %1097 = vmatprep.subr.bf16.mxu0 0
      %1098 = vmatpush2.bf16.msra.mxu0 0
      %1099 = vmatprep.subr.bf16.mxu0 0
      %1100 = vmatpush2.bf16.msra.mxu0 0
      %1101 = vmatprep.mubr.bf16.mxu0 0
      %1102 = vmatmul.mubr.bf16.gmra.mxu0 %v1064
      %v1103 = vpop.f32.mrf.mxu0
      %v1104 = vadd.f32 0.0, %v1103
      %v1105 = vpop.f32.mrf.mxu0
      %v1106 = vpop.f32.mrf.mxu0
      %v1107 = vpop.f32.mrf.mxu0
      %1108 = vdwg.mxu0
      %1110 = vrot.lane.b32.xlu0 %v1104, 16
      %v1111 = vpop.permute.xlu0 %1110
      %vm1113 = vcmask 195712
      %1114 = vst.msk [vmem:[#allocation4] sm:$0xff] %vm1113, %v1111
      %v1115 = vld [vmem:[#allocation3] sm:$0xf]
      %v1117 = vunpack.c.l.b16 %v1115
      %v1118 = vpack.c.b16 %v1117, %v1117
      %1119 = vrot.lane.b32.xlu0 %v1118, 104
      %v1120 = vpop.permute.xlu0 %1119
      %1121 = vrot.lane.b32.xlu0 %v1118, 72
      %v1122 = vpop.permute.xlu0 %1121
      %v1124 = vsel %vm760, %v1120, 0
      %v1127 = vsel %vm760, %v1122, 0
      %1129 = vmatprep.subr.bf16.mxu0 0
      %1130 = vmatpush1.bf16.xpose.msra.mxu0 0
      %1131 = vmatprep.subr.bf16.mxu0 0
      %1132 = vmatpush1.bf16.xpose.msra.mxu0 0
      %1133 = vmatprep.subr.bf16.mxu0 0
      %1134 = vmatpush1.bf16.xpose.msra.mxu0 0
      %1135 = vmatprep.subr.bf16.mxu0 0
      %1136 = vmatpush1.bf16.xpose.msra.mxu0 0
      %1137 = vmatprep.subr.bf16.mxu0 0
      %1138 = vmatpush1.bf16.xpose.msra.mxu0 0
      %1139 = vmatprep.subr.bf16.mxu0 0
      %1140 = vmatpush1.bf16.xpose.msra.mxu0 0
      %1141 = vmatprep.subr.bf16.mxu0 0
      %1142 = vmatpush1.bf16.xpose.msra.mxu0 0
      %1143 = vmatprep.subr.bf16.mxu0 0
      %1144 = vmatpush1.bf16.xpose.msra.mxu0 %v1127
      %1145 = vmatprep.subr.bf16.mxu0 0
      %1146 = vmatpush2.bf16.xpose.msra.mxu0 0
      %1147 = vmatprep.subr.bf16.mxu0 0
      %1148 = vmatpush2.bf16.xpose.msra.mxu0 0
      %1149 = vmatprep.subr.bf16.mxu0 0
      %1150 = vmatpush2.bf16.xpose.msra.mxu0 0
      %1151 = vmatprep.subr.bf16.mxu0 0
      %1152 = vmatpush2.bf16.xpose.msra.mxu0 0
      %1153 = vmatprep.subr.bf16.mxu0 0
      %1154 = vmatpush2.bf16.xpose.msra.mxu0 0
      %1155 = vmatprep.subr.bf16.mxu0 0
      %1156 = vmatpush2.bf16.xpose.msra.mxu0 0
      %1157 = vmatprep.subr.bf16.mxu0 0
      %1158 = vmatpush2.bf16.xpose.msra.mxu0 0
      %1159 = vmatprep.subr.bf16.mxu0 0
      %1160 = vmatpush2.bf16.xpose.msra.mxu0 0
      %1161 = vmatprep.mubr.bf16.mxu0 0
      %1162 = vmatmul.mubr.bf16.gmra.mxu0 %v1124
      %v1163 = vpop.f32.mrf.mxu0
      %v1164 = vadd.f32 0.0, %v1163
      %v1165 = vpop.f32.mrf.mxu0
      %v1166 = vpop.f32.mrf.mxu0
      %v1167 = vpop.f32.mrf.mxu0
      %1168 = vdwg.mxu0
      %v1169 = vmul.f32 %v1164, 0.35355338
      %v1170 = vadd.f32 %v1169, %v753
      %v1171 = vsel %vm760, %v1170, -inf
      %1172 = vmax.xlane.f32.xlu0 %v1171
      %v1173 = vpop.xlane.xlu0 %1172
      %v1174 = vsub.f32 %v1170, %v1173
      %v1175 = vmul.f32 %v1174, 1.442695
      %v1176 = vpow.pop %v1175
      %v1177 = vsel %vm760, %v1176, 0.0
      %1178 = vadd.xlane.f32.xlu0 %v1177
      %v1179 = vpop.xlane.xlu0 %1178
      %v1180 = vrcp.pop %v1179
      %v1181 = vmul.f32 %v1176, %v1180
      %v1182 = vpack.c.bf16 %v1181, %v1181
      %1183 = vrot.lane.b32.xlu0 %v1118, 40
      %v1184 = vpop.permute.xlu0 %1183
      %v1186 = vsel %vm760, %v1182, 0
      %v1189 = vsel %vm826, %v1184, 0
      %1191 = vmatprep.subr.bf16.mxu0 0
      %1192 = vmatpush1.bf16.msra.mxu0 0
      %1193 = vmatprep.subr.bf16.mxu0 0
      %1194 = vmatpush1.bf16.msra.mxu0 0
      %1195 = vmatprep.subr.bf16.mxu0 0
      %1196 = vmatpush1.bf16.msra.mxu0 0
      %1197 = vmatprep.subr.bf16.mxu0 0
      %1198 = vmatpush1.bf16.msra.mxu0 0
      %1199 = vmatprep.subr.bf16.mxu0 0
      %1200 = vmatpush1.bf16.msra.mxu0 0
      %1201 = vmatprep.subr.bf16.mxu0 0
      %1202 = vmatpush1.bf16.msra.mxu0 0
      %1203 = vmatprep.subr.bf16.mxu0 0
      %1204 = vmatpush1.bf16.msra.mxu0 0
      %1205 = vmatprep.subr.bf16.mxu0 0
      %1206 = vmatpush1.bf16.msra.mxu0 %v1189
      %1207 = vmatprep.subr.bf16.mxu0 0
      %1208 = vmatpush2.bf16.msra.mxu0 0
      %1209 = vmatprep.subr.bf16.mxu0 0
      %1210 = vmatpush2.bf16.msra.mxu0 0
      %1211 = vmatprep.subr.bf16.mxu0 0
      %1212 = vmatpush2.bf16.msra.mxu0 0
      %1213 = vmatprep.subr.bf16.mxu0 0
      %1214 = vmatpush2.bf16.msra.mxu0 0
      %1215 = vmatprep.subr.bf16.mxu0 0
      %1216 = vmatpush2.bf16.msra.mxu0 0
      %1217 = vmatprep.subr.bf16.mxu0 0
      %1218 = vmatpush2.bf16.msra.mxu0 0
      %1219 = vmatprep.subr.bf16.mxu0 0
      %1220 = vmatpush2.bf16.msra.mxu0 0
      %1221 = vmatprep.subr.bf16.mxu0 0
      %1222 = vmatpush2.bf16.msra.mxu0 0
      %1223 = vmatprep.mubr.bf16.mxu0 0
      %1224 = vmatmul.mubr.bf16.gmra.mxu0 %v1186
      %v1225 = vpop.f32.mrf.mxu0
      %v1226 = vadd.f32 0.0, %v1225
      %v1227 = vpop.f32.mrf.mxu0
      %v1228 = vpop.f32.mrf.mxu0
      %v1229 = vpop.f32.mrf.mxu0
      %1230 = vdwg.mxu0
      %1232 = vrot.lane.b32.xlu0 %v1226, 24
      %v1233 = vpop.permute.xlu0 %1232
      %vm1235 = vcmask 261312
      %1236 = vst.msk [vmem:[#allocation4] sm:$0xff] %vm1235, %v1233
      %v1237 = vld [vmem:[#allocation4] sm:$0xff]
      %v1238 = vpack.c.bf16 %v1237, %v1237
      %v1239 = vld [vmem:[%s610] sm:$0xf]
      %v1240 = vld [vmem:[%s610 + $0x4] sm:$0xf]
      %v1241 = vld [vmem:[%s610 + $0x8] sm:$0xf]
      %v1242 = vld [vmem:[%s610 + $0xc] sm:$0xf]
      %v1243 = vld [vmem:[%s613] sm:$0x1]
      %v1245 = vlaneseq
      %v1246 = vshrl.u32 %v1245, 7
      %v1247 = vsub.s32 0, %v1246
      %v1248 = vrot.slane %v1243, %v1247
      %v1254 = vunpack.c.l.b16 %v1239
      %v1255 = vunpack.c.l.b16 %v1240
      %v1256 = vunpack.c.l.b16 %v1241
      %v1257 = vunpack.c.l.b16 %v1242
      %v1258 = vpack.c.b16 %v1255, %v1254
      %v1259 = vpack.c.b16 %v1257, %v1256
      %v1263 = vsel %vm651, %v1238, 0
      %1265 = vmatprep.subr.bf16.mxu0 0
      %1266 = vmatpush1.bf16.msra.mxu0 0
      %1267 = vmatprep.subr.bf16.mxu0 0
      %1268 = vmatpush1.bf16.msra.mxu0 0
      %1269 = vmatprep.subr.bf16.mxu0 0
      %1270 = vmatpush1.bf16.msra.mxu0 0
      %1271 = vmatprep.subr.bf16.mxu0 0
      %1272 = vmatpush1.bf16.msra.mxu0 0
      %1273 = vmatprep.subr.bf16.mxu0 0
      %1274 = vmatpush1.bf16.msra.mxu0 0
      %1275 = vmatprep.subr.bf16.mxu0 0
      %1276 = vmatpush1.bf16.msra.mxu0 0
      %1277 = vmatprep.subr.bf16.mxu0 0
      %1278 = vmatpush1.bf16.msra.mxu0 %v1259
      %1279 = vmatprep.subr.bf16.mxu0 0
      %1280 = vmatpush1.bf16.msra.mxu0 %v1258
      %1281 = vmatprep.subr.bf16.mxu0 0
      %1282 = vmatpush2.bf16.msra.mxu0 0
      %1283 = vmatprep.subr.bf16.mxu0 0
      %1284 = vmatpush2.bf16.msra.mxu0 0
      %1285 = vmatprep.subr.bf16.mxu0 0
      %1286 = vmatpush2.bf16.msra.mxu0 0
      %1287 = vmatprep.subr.bf16.mxu0 0
      %1288 = vmatpush2.bf16.msra.mxu0 0
      %1289 = vmatprep.subr.bf16.mxu0 0
      %1290 = vmatpush2.bf16.msra.mxu0 0
      %1291 = vmatprep.subr.bf16.mxu0 0
      %1292 = vmatpush2.bf16.msra.mxu0 0
      %1293 = vmatprep.subr.bf16.mxu0 0
      %1294 = vmatpush2.bf16.msra.mxu0 0
      %1295 = vmatprep.subr.bf16.mxu0 0
      %1296 = vmatpush2.bf16.msra.mxu0 0
      %1297 = vmatprep.mubr.bf16.mxu0 0
      %1298 = vmatmul.mubr.bf16.gmra.mxu0 %v1263
      %v1299 = vpop.f32.mrf.mxu0
      %v1300 = vadd.f32 %v1248, %v1299
      %v1301 = vpop.f32.mrf.mxu0
      %v1302 = vpop.f32.mrf.mxu0
      %v1303 = vpop.f32.mrf.mxu0
      %1304 = vdwg.mxu0
      %v1305 = vadd.f32 %v648, %v1300
      %v1306 = vld [vmem:[%s616] sm:$0x1]
      %v1307 = vld [vmem:[%s619] sm:$0x1]
      %v1308 = vsel %vm651, %v1305, 0.0
      %1309 = vadd.xlane.f32.xlu0 %v1308
      %v1310 = vpop.xlane.xlu0 %1309
      %v1311 = vmul.f32 %v1310, %v655
      %v1312 = vsub.f32 %v1305, %v1311
      %v1313 = vmul.f32 %v1312, %v1312
      %v1314 = vsel %vm651, %v1313, 0.0
      %1315 = vadd.xlane.f32.xlu0 %v1314
      %v1316 = vpop.xlane.xlu0 %1315
      %v1317 = vmul.f32 %v1316, %v655
      %v1318 = vadd.f32 %v1317, 1e-05
      %v1319 = vrsqrt.pop %v1318
      %v1320 = vmul.f32 %v1312, %v1319
      %v1322 = vlaneseq
      %v1323 = vshrl.u32 %v1322, 7
      %v1324 = vsub.s32 0, %v1323
      %v1325 = vrot.slane %v1306, %v1324
      %v1327 = vmul.f32 %v1320, %v1325
      %v1329 = vlaneseq
      %v1330 = vshrl.u32 %v1329, 7
      %v1331 = vsub.s32 0, %v1330
      %v1332 = vrot.slane %v1307, %v1331
      %v1334 = vadd.f32 %v1327, %v1332
      %v1335 = vpack.c.bf16 %v1334, %v1334
      %v1336 = vld [vmem:[%s624] sm:$0xf]
      %v1337 = vld [vmem:[%s624 + $0x4] sm:$0xf]
      %v1338 = vld [vmem:[%s624 + $0x8] sm:$0xf]
      %v1339 = vld [vmem:[%s624 + $0xc] sm:$0xf]
      %v1340 = vld [vmem:[%s627] sm:$0x1]
      %v1342 = vlaneseq
      %v1343 = vshrl.u32 %v1342, 7
      %v1344 = vsub.s32 0, %v1343
      %v1345 = vrot.slane %v1340, %v1344
      %v1351 = vunpack.c.l.b16 %v1336
      %v1352 = vunpack.c.l.b16 %v1337
      %v1353 = vunpack.c.l.b16 %v1338
      %v1354 = vunpack.c.l.b16 %v1339
      %v1355 = vpack.c.b16 %v1352, %v1351
      %v1356 = vpack.c.b16 %v1354, %v1353
      %v1360 = vsel %vm651, %v1335, 0
      %1362 = vmatprep.subr.bf16.mxu0 0
      %1363 = vmatpush1.bf16.msra.mxu0 0
      %1364 = vmatprep.subr.bf16.mxu0 0
      %1365 = vmatpush1.bf16.msra.mxu0 0
      %1366 = vmatprep.subr.bf16.mxu0 0
      %1367 = vmatpush1.bf16.msra.mxu0 0
      %1368 = vmatprep.subr.bf16.mxu0 0
      %1369 = vmatpush1.bf16.msra.mxu0 0
      %1370 = vmatprep.subr.bf16.mxu0 0
      %1371 = vmatpush1.bf16.msra.mxu0 0
      %1372 = vmatprep.subr.bf16.mxu0 0
      %1373 = vmatpush1.bf16.msra.mxu0 0
      %1374 = vmatprep.subr.bf16.mxu0 0
      %1375 = vmatpush1.bf16.msra.mxu0 %v1356
      %1376 = vmatprep.subr.bf16.mxu0 0
      %1377 = vmatpush1.bf16.msra.mxu0 %v1355
      %1378 = vmatprep.subr.bf16.mxu0 0
      %1379 = vmatpush2.bf16.msra.mxu0 0
      %1380 = vmatprep.subr.bf16.mxu0 0
      %1381 = vmatpush2.bf16.msra.mxu0 0
      %1382 = vmatprep.subr.bf16.mxu0 0
      %1383 = vmatpush2.bf16.msra.mxu0 0
      %1384 = vmatprep.subr.bf16.mxu0 0
      %1385 = vmatpush2.bf16.msra.mxu0 0
      %1386 = vmatprep.subr.bf16.mxu0 0
      %1387 = vmatpush2.bf16.msra.mxu0 0
      %1388 = vmatprep.subr.bf16.mxu0 0
      %1389 = vmatpush2.bf16.msra.mxu0 0
      %1390 = vmatprep.subr.bf16.mxu0 0
      %1391 = vmatpush2.bf16.msra.mxu0 0
      %1392 = vmatprep.subr.bf16.mxu0 0
      %1393 = vmatpush2.bf16.msra.mxu0 0
      %1394 = vmatprep.mubr.bf16.mxu0 0
      %1395 = vmatmul.mubr.bf16.gmra.mxu0 %v1360
      %v1396 = vpop.f32.mrf.mxu0
      %v1397 = vadd.f32 %v1345, %v1396
      %v1398 = vpop.f32.mrf.mxu0
      %v1399 = vpop.f32.mrf.mxu0
      %v1400 = vpop.f32.mrf.mxu0
      %1401 = vdwg.mxu0
      %v1402 = vmul.f32 %v1397, 1.702
      %v1403 = vxor.u32 %v1402, 2147483648
      %v1404 = vmul.f32 %v1403, 1.442695
      %v1405 = vpow.pop %v1404
      %v1406 = vadd.f32 %v1405, 1.0
      %v1407 = vrcp.pop %v1406
      %v1408 = vmul.f32 1.0, %v1407
      %v1409 = vmul.f32 %v1397, %v1408
      %v1410 = vpack.c.bf16 %v1409, %v1409
      %v1411 = vld [vmem:[%s632] sm:$0xf]
      %v1412 = vld [vmem:[%s632 + $0x4] sm:$0xf]
      %v1413 = vld [vmem:[%s632 + $0x8] sm:$0xf]
      %v1414 = vld [vmem:[%s632 + $0xc] sm:$0xf]
      %v1415 = vld [vmem:[%s632 + $0x10] sm:$0xf]
      %v1416 = vld [vmem:[%s632 + $0x14] sm:$0xf]
      %v1417 = vld [vmem:[%s632 + $0x18] sm:$0xf]
      %v1418 = vld [vmem:[%s632 + $0x1c] sm:$0xf]
      %v1419 = vld [vmem:[%s635] sm:$0x1]
      %v1421 = vlaneseq
      %v1422 = vshrl.u32 %v1421, 7
      %v1423 = vsub.s32 0, %v1422
      %v1424 = vrot.slane %v1419, %v1423
      %v1434 = vunpack.c.l.b16 %v1411
      %v1435 = vunpack.c.l.b16 %v1412
      %v1436 = vunpack.c.l.b16 %v1413
      %v1437 = vunpack.c.l.b16 %v1414
      %v1438 = vunpack.c.l.b16 %v1415
      %v1439 = vunpack.c.l.b16 %v1416
      %v1440 = vunpack.c.l.b16 %v1417
      %v1441 = vunpack.c.l.b16 %v1418
      %v1442 = vpack.c.b16 %v1435, %v1434
      %v1443 = vpack.c.b16 %v1437, %v1436
      %v1444 = vpack.c.b16 %v1439, %v1438
      %v1445 = vpack.c.b16 %v1441, %v1440
      %vm1450 = vcmask 523264
      %v1452 = vsel %vm1450, %v1410, 0
      %1454 = vmatprep.subr.bf16.mxu0 0
      %1455 = vmatpush1.bf16.msra.mxu0 0
      %1456 = vmatprep.subr.bf16.mxu0 0
      %1457 = vmatpush1.bf16.msra.mxu0 0
      %1458 = vmatprep.subr.bf16.mxu0 0
      %1459 = vmatpush1.bf16.msra.mxu0 0
      %1460 = vmatprep.subr.bf16.mxu0 0
      %1461 = vmatpush1.bf16.msra.mxu0 0
      %1462 = vmatprep.subr.bf16.mxu0 0
      %1463 = vmatpush1.bf16.msra.mxu0 %v1445
      %1464 = vmatprep.subr.bf16.mxu0 0
      %1465 = vmatpush1.bf16.msra.mxu0 %v1444
      %1466 = vmatprep.subr.bf16.mxu0 0
      %1467 = vmatpush1.bf16.msra.mxu0 %v1443
      %1468 = vmatprep.subr.bf16.mxu0 0
      %1469 = vmatpush1.bf16.msra.mxu0 %v1442
      %1470 = vmatprep.subr.bf16.mxu0 0
      %1471 = vmatpush2.bf16.msra.mxu0 0
      %1472 = vmatprep.subr.bf16.mxu0 0
      %1473 = vmatpush2.bf16.msra.mxu0 0
      %1474 = vmatprep.subr.bf16.mxu0 0
      %1475 = vmatpush2.bf16.msra.mxu0 0
      %1476 = vmatprep.subr.bf16.mxu0 0
      %1477 = vmatpush2.bf16.msra.mxu0 0
      %1478 = vmatprep.subr.bf16.mxu0 0
      %1479 = vmatpush2.bf16.msra.mxu0 0
      %1480 = vmatprep.subr.bf16.mxu0 0
      %1481 = vmatpush2.bf16.msra.mxu0 0
      %1482 = vmatprep.subr.bf16.mxu0 0
      %1483 = vmatpush2.bf16.msra.mxu0 0
      %1484 = vmatprep.subr.bf16.mxu0 0
      %1485 = vmatpush2.bf16.msra.mxu0 0
      %1486 = vmatprep.mubr.bf16.mxu0 0
      %1487 = vmatmul.mubr.bf16.gmra.mxu0 %v1452
      %v1488 = vpop.f32.mrf.mxu0
      %v1489 = vadd.f32 %v1424, %v1488
      %v1490 = vpop.f32.mrf.mxu0
      %v1491 = vpop.f32.mrf.mxu0
      %v1492 = vpop.f32.mrf.mxu0
      %1493 = vdwg.mxu0
      %v1494 = vadd.f32 %v1305, %v1489
      %1495 = vst.msk [vmem:[#allocation2] sm:$0xff] %vm651, %v1494
      // Predicated region
      $region77: #{clip_vision_tower_forward.6} parent=71 // pred_check
        %p1496 = pneg %p641
      $region78: #{clip_vision_tower_forward.6} parent=71 // pred_check_branch
        %1498 = sbr.rel (%p1496) target = $region80
      $region79: #{clip_vision_tower_forward.6} parent=71 // pred_region
        %1499 = vst.msk [vmem:[%s639] sm:$0xff] %vm651, %v1494
      $region80: #{clip_vision_tower_forward.6} parent=71 // pred_fallthru
        _
      %p1500 = scmp.lt.s32.totalorder %s28, 1
      %s1501 = scalar_select %p1500, %s28, 1
      %s1502 = smul.addr %s1501, 8
      %s1503 = scalar_lea.vmem %s13, %s1502
      // Predicated region
      $region81: #{clip_vision_tower_forward.6} parent=71 // pred_check
        %p1504 = pneg %p392
      $region82: #{clip_vision_tower_forward.6} parent=71 // pred_check_branch
        %1506 = sbr.rel (%p1504) target = $region84
      $region83: #{clip_vision_tower_forward.6} parent=71 // pred_region
        _
      $region84: #{clip_vision_tower_forward.6} parent=71 // pred_fallthru
        _
    $region72: #{clip_vision_tower_forward.6} parent=5 // pred_fallthru
      _
    %p1507 = scmp.le.s32.totalorder 2, %s19
    // Predicated region
    $region85: #{clip_vision_tower_forward.6} parent=5 // pred_check
      %p1508 = pneg %p1507
    $region86: #{clip_vision_tower_forward.6} parent=5 // pred_check_branch
      %1510 = sbr.rel (%p1508) target = $region88
    $region87: #{clip_vision_tower_forward.6} parent=5 // pred_region
      %s1511 = ssub.s32 %s19, 2
      // Predicated region
      $region89: #{clip_vision_tower_forward.6} parent=87 // pred_check
        %p1512 = pneg %p398
      $region90: #{clip_vision_tower_forward.6} parent=87 // pred_check_branch
        %1514 = sbr.rel (%p1512) target = $region92
      $region91: #{clip_vision_tower_forward.6} parent=87 // pred_region
        %p1515 = scmp.lt.s32.totalorder %s30, 1
        %s1516 = scalar_select %p1515, %s30, 1
        %s1517 = smul.addr %s1516, 8
        %s1518 = scalar_lea.vmem %s13, %s1517
      $region92: #{clip_vision_tower_forward.6} parent=87 // pred_fallthru
        _
    $region88: #{clip_vision_tower_forward.6} parent=5 // pred_fallthru
      _
  $region6: #{clip_vision_tower_forward.6} parent=0 // loop_footer
    %s23 = sadd.s32 1, %s19
  $region7: #{clip_vision_tower_forward.6} parent=0 // loop_footer_branch
    %18 = sbr.rel target = $region3
  $region8: #{clip_vision_tower_forward.6} parent=0 // loop_exit
    _

// kernel: clip_vision_tower_forward.4
$region0: #{clip_vision_tower_forward.4}
  #allocation0 [shape = 'u32[]', space=smem, size = 0x4, offset = 0x4, fixed_abs, tag = 'smem constant byte address 0x4 - core index']
  #allocation1 [shape = 'u32[144,128]{1,0:T(1,128)}', space=vmem, size = 0x12000, scoped, tag = 'internal scratch']
  #allocation2 [shape = 'f32[8,16]{1,0:T(8,128)}', space=vmem, size = 0x1000, scoped, tag = 'scratch operand']
  #allocation3 [shape = 'bf16[8,48]{1,0:T(8,128)(2,1)}', space=vmem, size = 0x800, scoped, tag = 'scratch operand']
  #allocation4 [shape = 'f32[8,16]{1,0:T(8,128)}', space=vmem, size = 0x1000, scoped, tag = 'scratch operand']
  %s0 = inlined_call_operand.vmem [shape: f32[2,8,16], index: 0, kind: input, shape index: {}]
  %s1 = inlined_call_operand.vmem [shape: f32[1,1,16], index: 1, kind: input, shape index: {}]
  %s2 = inlined_call_operand.vmem [shape: f32[1,1,16], index: 2, kind: input, shape index: {}]
  %s3 = inlined_call_operand.vmem [shape: bf16[1,16,48], index: 3, kind: input, shape index: {}]
  %s4 = inlined_call_operand.vmem [shape: f32[1,1,48], index: 4, kind: input, shape index: {}]
  %s5 = inlined_call_operand.vmem [shape: bf16[1,16,16], index: 5, kind: input, shape index: {}]
  %s6 = inlined_call_operand.vmem [shape: f32[1,1,16], index: 6, kind: input, shape index: {}]
  %s7 = inlined_call_operand.vmem [shape: f32[1,1,16], index: 7, kind: input, shape index: {}]
  %s8 = inlined_call_operand.vmem [shape: f32[1,1,16], index: 8, kind: input, shape index: {}]
  %s9 = inlined_call_operand.vmem [shape: bf16[1,16,32], index: 9, kind: input, shape index: {}]
  %s10 = inlined_call_operand.vmem [shape: f32[1,1,32], index: 10, kind: input, shape index: {}]
  %s11 = inlined_call_operand.vmem [shape: bf16[1,32,16], index: 11, kind: input, shape index: {}]
  %s12 = inlined_call_operand.vmem [shape: f32[1,1,16], index: 12, kind: input, shape index: {}]
  %s13 = inlined_call_operand.vmem [shape: f32[2,8,16], index: 13, kind: output, shape index: {}]
  %s14 = sld [smem:[#allocation0]]
  $region93: #{clip_vision_tower_forward.4} parent=0
    _
  %s16 = ssub.s32 1, %s14
  %s17 = scalar_select 0, %s16, %s14
  loop: start=0, step=1, limit=4
  $region2: #{clip_vision_tower_forward.4} parent=0 // loop_pre_header
    _
  $region3: #{clip_vision_tower_forward.4} parent=0 // loop_header
    %s19 = sphi 0, %s23
    %p20 = scmp.ge.s32.totalorder %s19, 4
    %s26 = sphi 0, %s38
    %s27 = sphi 0, %s34
    %s28 = sphi 0, %s26
    %s29 = sphi 0, %s27
    %s30 = sphi 0, %s28
    %s31 = sphi 0, %s29
    %s41 = sphi 0, %s43
    %s44 = sphi 0, %s41
    %s45 = sphi 0, %s44
    %s61 = sphi 0, %s45
    %s67 = sphi 0, %s69
    %s70 = sphi 0, %s67
    %s71 = sphi 0, %s70
    %s87 = sphi 0, %s71
    %s93 = sphi 0, %s95
    %s96 = sphi 0, %s93
    %s97 = sphi 0, %s96
    %s113 = sphi 0, %s97
    %s119 = sphi 0, %s121
    %s122 = sphi 0, %s119
    %s123 = sphi 0, %s122
    %s139 = sphi 0, %s123
    %s145 = sphi 0, %s147
    %s148 = sphi 0, %s145
    %s149 = sphi 0, %s148
    %s165 = sphi 0, %s149
    %s171 = sphi 0, %s173
    %s174 = sphi 0, %s171
    %s175 = sphi 0, %s174
    %s191 = sphi 0, %s175
    %s197 = sphi 0, %s199
    %s200 = sphi 0, %s197
    %s201 = sphi 0, %s200
    %s217 = sphi 0, %s201
    %s223 = sphi 0, %s225
    %s226 = sphi 0, %s223
    %s227 = sphi 0, %s226
    %s243 = sphi 0, %s227
    %s249 = sphi 0, %s251
    %s252 = sphi 0, %s249
    %s253 = sphi 0, %s252
    %s269 = sphi 0, %s253
    %s275 = sphi 0, %s277
    %s278 = sphi 0, %s275
    %s279 = sphi 0, %s278
    %s295 = sphi 0, %s279
    %s301 = sphi 0, %s303
    %s304 = sphi 0, %s301
    %s305 = sphi 0, %s304
    %s321 = sphi 0, %s305
    %s327 = sphi 0, %s329
    %s330 = sphi 0, %s327
    %s331 = sphi 0, %s330
    %s347 = sphi 0, %s331
    %s353 = sphi 0, %s355
    %s356 = sphi 0, %s353
    %s357 = sphi 0, %s356
    %s373 = sphi 0, %s357
    %s379 = sphi 0, %s381
    %s382 = sphi 0, %s379
    %s383 = sphi 0, %s382
    %s399 = sphi 0, %s383
  $region4: #{clip_vision_tower_forward.4} parent=0 // loop_header_branch
    %22 = sbr.rel (%p20) target = $region8
  $region5: #{clip_vision_tower_forward.4} parent=0 // loop_body
    %s24 = ssub.s32 %s19, 1
    %s25 = ssub.s32 %s19, 2
    %s32 = sadd.s32 1, %s27
    %p33 = scmp.ge.s32.totalorder %s32, 1
    %s34 = scalar_select %p33, 0, %s32
    %s35 = sadd.s32 1, %s26
    %s36 = scalar_select %p33, %s35, %s26
    %p37 = scmp.ge.s32.totalorder %s36, 2
    %s38 = scalar_select %p37, 0, %s36
    %s39 = ssub.s32 %s26, %s38
    %p40 = scmp.eq.s32.totalorder %s39, 0
    %s42 = sadd.s32 %s41, 1
    %s43 = scalar_select %p40, %s41, %s42
    %p46 = pneg %p40
    %p47 = scmp.eq.s32.totalorder %s19, 1
    %p48 = por %p46, %p47
    %p49 = scmp.ne.s32.totalorder %s41, %s44
    %p50 = scmp.eq.s32.totalorder %s19, 0
    %p51 = por %p49, %p50
    %p52 = scmp.ne.s32.totalorder %s41, %s44
    %p53 = scmp.eq.s32.totalorder %s24, 1
    %p54 = por %p52, %p53
    %p55 = scmp.ne.s32.totalorder %s44, %s45
    %p56 = scmp.eq.s32.totalorder %s24, 0
    %p57 = por %p55, %p56
    %p58 = scmp.ne.s32.totalorder %s44, %s45
    %p59 = scmp.eq.s32.totalorder %s25, 1
    %p60 = por %p58, %p59
    %p62 = scmp.ne.s32.totalorder %s45, %s61
    %p63 = scmp.eq.s32.totalorder %s25, 0
    %p64 = por %p62, %p63
    %s65 = ssub.s32 %s27, %s34
    %p66 = scmp.eq.s32.totalorder %s65, 0
    %s68 = sadd.s32 %s67, 1
    %s69 = scalar_select %p66, %s67, %s68
    %p72 = pneg %p66
    %p73 = scmp.eq.s32.totalorder %s19, 1
    %p74 = por %p72, %p73
    %p75 = scmp.ne.s32.totalorder %s67, %s70
    %p76 = scmp.eq.s32.totalorder %s19, 0
    %p77 = por %p75, %p76
    %p78 = scmp.ne.s32.totalorder %s67, %s70
    %p79 = scmp.eq.s32.totalorder %s24, 1
    %p80 = por %p78, %p79
    %p81 = scmp.ne.s32.totalorder %s70, %s71
    %p82 = scmp.eq.s32.totalorder %s24, 0
    %p83 = por %p81, %p82
    %p84 = scmp.ne.s32.totalorder %s70, %s71
    %p85 = scmp.eq.s32.totalorder %s25, 1
    %p86 = por %p84, %p85
    %p88 = scmp.ne.s32.totalorder %s71, %s87
    %p89 = scmp.eq.s32.totalorder %s25, 0
    %p90 = por %p88, %p89
    %s91 = ssub.s32 %s27, %s34
    %p92 = scmp.eq.s32.totalorder %s91, 0
    %s94 = sadd.s32 %s93, 1
    %s95 = scalar_select %p92, %s93, %s94
    %p98 = pneg %p92
    %p99 = scmp.eq.s32.totalorder %s19, 1
    %p100 = por %p98, %p99
    %p101 = scmp.ne.s32.totalorder %s93, %s96
    %p102 = scmp.eq.s32.totalorder %s19, 0
    %p103 = por %p101, %p102
    %p104 = scmp.ne.s32.totalorder %s93, %s96
    %p105 = scmp.eq.s32.totalorder %s24, 1
    %p106 = por %p104, %p105
    %p107 = scmp.ne.s32.totalorder %s96, %s97
    %p108 = scmp.eq.s32.totalorder %s24, 0
    %p109 = por %p107, %p108
    %p110 = scmp.ne.s32.totalorder %s96, %s97
    %p111 = scmp.eq.s32.totalorder %s25, 1
    %p112 = por %p110, %p111
    %p114 = scmp.ne.s32.totalorder %s97, %s113
    %p115 = scmp.eq.s32.totalorder %s25, 0
    %p116 = por %p114, %p115
    %s117 = ssub.s32 %s27, %s34
    %p118 = scmp.eq.s32.totalorder %s117, 0
    %s120 = sadd.s32 %s119, 1
    %s121 = scalar_select %p118, %s119, %s120
    %p124 = pneg %p118
    %p125 = scmp.eq.s32.totalorder %s19, 1
    %p126 = por %p124, %p125
    %p127 = scmp.ne.s32.totalorder %s119, %s122
    %p128 = scmp.eq.s32.totalorder %s19, 0
    %p129 = por %p127, %p128
    %p130 = scmp.ne.s32.totalorder %s119, %s122
    %p131 = scmp.eq.s32.totalorder %s24, 1
    %p132 = por %p130, %p131
    %p133 = scmp.ne.s32.totalorder %s122, %s123
    %p134 = scmp.eq.s32.totalorder %s24, 0
    %p135 = por %p133, %p134
    %p136 = scmp.ne.s32.totalorder %s122, %s123
    %p137 = scmp.eq.s32.totalorder %s25, 1
    %p138 = por %p136, %p137
    %p140 = scmp.ne.s32.totalorder %s123, %s139
    %p141 = scmp.eq.s32.totalorder %s25, 0
    %p142 = por %p140, %p141
    %s143 = ssub.s32 %s27, %s34
    %p144 = scmp.eq.s32.totalorder %s143, 0
    %s146 = sadd.s32 %s145, 1
    %s147 = scalar_select %p144, %s145, %s146
    %p150 = pneg %p144
    %p151 = scmp.eq.s32.totalorder %s19, 1
    %p152 = por %p150, %p151
    %p153 = scmp.ne.s32.totalorder %s145, %s148
    %p154 = scmp.eq.s32.totalorder %s19, 0
    %p155 = por %p153, %p154
    %p156 = scmp.ne.s32.totalorder %s145, %s148
    %p157 = scmp.eq.s32.totalorder %s24, 1
    %p158 = por %p156, %p157
    %p159 = scmp.ne.s32.totalorder %s148, %s149
    %p160 = scmp.eq.s32.totalorder %s24, 0
    %p161 = por %p159, %p160
    %p162 = scmp.ne.s32.totalorder %s148, %s149
    %p163 = scmp.eq.s32.totalorder %s25, 1
    %p164 = por %p162, %p163
    %p166 = scmp.ne.s32.totalorder %s149, %s165
    %p167 = scmp.eq.s32.totalorder %s25, 0
    %p168 = por %p166, %p167
    %s169 = ssub.s32 %s27, %s34
    %p170 = scmp.eq.s32.totalorder %s169, 0
    %s172 = sadd.s32 %s171, 1
    %s173 = scalar_select %p170, %s171, %s172
    %p176 = pneg %p170
    %p177 = scmp.eq.s32.totalorder %s19, 1
    %p178 = por %p176, %p177
    %p179 = scmp.ne.s32.totalorder %s171, %s174
    %p180 = scmp.eq.s32.totalorder %s19, 0
    %p181 = por %p179, %p180
    %p182 = scmp.ne.s32.totalorder %s171, %s174
    %p183 = scmp.eq.s32.totalorder %s24, 1
    %p184 = por %p182, %p183
    %p185 = scmp.ne.s32.totalorder %s174, %s175
    %p186 = scmp.eq.s32.totalorder %s24, 0
    %p187 = por %p185, %p186
    %p188 = scmp.ne.s32.totalorder %s174, %s175
    %p189 = scmp.eq.s32.totalorder %s25, 1
    %p190 = por %p188, %p189
    %p192 = scmp.ne.s32.totalorder %s175, %s191
    %p193 = scmp.eq.s32.totalorder %s25, 0
    %p194 = por %p192, %p193
    %s195 = ssub.s32 %s27, %s34
    %p196 = scmp.eq.s32.totalorder %s195, 0
    %s198 = sadd.s32 %s197, 1
    %s199 = scalar_select %p196, %s197, %s198
    %p202 = pneg %p196
    %p203 = scmp.eq.s32.totalorder %s19, 1
    %p204 = por %p202, %p203
    %p205 = scmp.ne.s32.totalorder %s197, %s200
    %p206 = scmp.eq.s32.totalorder %s19, 0
    %p207 = por %p205, %p206
    %p208 = scmp.ne.s32.totalorder %s197, %s200
    %p209 = scmp.eq.s32.totalorder %s24, 1
    %p210 = por %p208, %p209
    %p211 = scmp.ne.s32.totalorder %s200, %s201
    %p212 = scmp.eq.s32.totalorder %s24, 0
    %p213 = por %p211, %p212
    %p214 = scmp.ne.s32.totalorder %s200, %s201
    %p215 = scmp.eq.s32.totalorder %s25, 1
    %p216 = por %p214, %p215
    %p218 = scmp.ne.s32.totalorder %s201, %s217
    %p219 = scmp.eq.s32.totalorder %s25, 0
    %p220 = por %p218, %p219
    %s221 = ssub.s32 %s27, %s34
    %p222 = scmp.eq.s32.totalorder %s221, 0
    %s224 = sadd.s32 %s223, 1
    %s225 = scalar_select %p222, %s223, %s224
    %p228 = pneg %p222
    %p229 = scmp.eq.s32.totalorder %s19, 1
    %p230 = por %p228, %p229
    %p231 = scmp.ne.s32.totalorder %s223, %s226
    %p232 = scmp.eq.s32.totalorder %s19, 0
    %p233 = por %p231, %p232
    %p234 = scmp.ne.s32.totalorder %s223, %s226
    %p235 = scmp.eq.s32.totalorder %s24, 1
    %p236 = por %p234, %p235
    %p237 = scmp.ne.s32.totalorder %s226, %s227
    %p238 = scmp.eq.s32.totalorder %s24, 0
    %p239 = por %p237, %p238
    %p240 = scmp.ne.s32.totalorder %s226, %s227
    %p241 = scmp.eq.s32.totalorder %s25, 1
    %p242 = por %p240, %p241
    %p244 = scmp.ne.s32.totalorder %s227, %s243
    %p245 = scmp.eq.s32.totalorder %s25, 0
    %p246 = por %p244, %p245
    %s247 = ssub.s32 %s27, %s34
    %p248 = scmp.eq.s32.totalorder %s247, 0
    %s250 = sadd.s32 %s249, 1
    %s251 = scalar_select %p248, %s249, %s250
    %p254 = pneg %p248
    %p255 = scmp.eq.s32.totalorder %s19, 1
    %p256 = por %p254, %p255
    %p257 = scmp.ne.s32.totalorder %s249, %s252
    %p258 = scmp.eq.s32.totalorder %s19, 0
    %p259 = por %p257, %p258
    %p260 = scmp.ne.s32.totalorder %s249, %s252
    %p261 = scmp.eq.s32.totalorder %s24, 1
    %p262 = por %p260, %p261
    %p263 = scmp.ne.s32.totalorder %s252, %s253
    %p264 = scmp.eq.s32.totalorder %s24, 0
    %p265 = por %p263, %p264
    %p266 = scmp.ne.s32.totalorder %s252, %s253
    %p267 = scmp.eq.s32.totalorder %s25, 1
    %p268 = por %p266, %p267
    %p270 = scmp.ne.s32.totalorder %s253, %s269
    %p271 = scmp.eq.s32.totalorder %s25, 0
    %p272 = por %p270, %p271
    %s273 = ssub.s32 %s27, %s34
    %p274 = scmp.eq.s32.totalorder %s273, 0
    %s276 = sadd.s32 %s275, 1
    %s277 = scalar_select %p274, %s275, %s276
    %p280 = pneg %p274
    %p281 = scmp.eq.s32.totalorder %s19, 1
    %p282 = por %p280, %p281
    %p283 = scmp.ne.s32.totalorder %s275, %s278
    %p284 = scmp.eq.s32.totalorder %s19, 0
    %p285 = por %p283, %p284
    %p286 = scmp.ne.s32.totalorder %s275, %s278
    %p287 = scmp.eq.s32.totalorder %s24, 1
    %p288 = por %p286, %p287
    %p289 = scmp.ne.s32.totalorder %s278, %s279
    %p290 = scmp.eq.s32.totalorder %s24, 0
    %p291 = por %p289, %p290
    %p292 = scmp.ne.s32.totalorder %s278, %s279
    %p293 = scmp.eq.s32.totalorder %s25, 1
    %p294 = por %p292, %p293
    %p296 = scmp.ne.s32.totalorder %s279, %s295
    %p297 = scmp.eq.s32.totalorder %s25, 0
    %p298 = por %p296, %p297
    %s299 = ssub.s32 %s27, %s34
    %p300 = scmp.eq.s32.totalorder %s299, 0
    %s302 = sadd.s32 %s301, 1
    %s303 = scalar_select %p300, %s301, %s302
    %p306 = pneg %p300
    %p307 = scmp.eq.s32.totalorder %s19, 1
    %p308 = por %p306, %p307
    %p309 = scmp.ne.s32.totalorder %s301, %s304
    %p310 = scmp.eq.s32.totalorder %s19, 0
    %p311 = por %p309, %p310
    %p312 = scmp.ne.s32.totalorder %s301, %s304
    %p313 = scmp.eq.s32.totalorder %s24, 1
    %p314 = por %p312, %p313
    %p315 = scmp.ne.s32.totalorder %s304, %s305
    %p316 = scmp.eq.s32.totalorder %s24, 0
    %p317 = por %p315, %p316
    %p318 = scmp.ne.s32.totalorder %s304, %s305
    %p319 = scmp.eq.s32.totalorder %s25, 1
    %p320 = por %p318, %p319
    %p322 = scmp.ne.s32.totalorder %s305, %s321
    %p323 = scmp.eq.s32.totalorder %s25, 0
    %p324 = por %p322, %p323
    %s325 = ssub.s32 %s27, %s34
    %p326 = scmp.eq.s32.totalorder %s325, 0
    %s328 = sadd.s32 %s327, 1
    %s329 = scalar_select %p326, %s327, %s328
    %p332 = pneg %p326
    %p333 = scmp.eq.s32.totalorder %s19, 1
    %p334 = por %p332, %p333
    %p335 = scmp.ne.s32.totalorder %s327, %s330
    %p336 = scmp.eq.s32.totalorder %s19, 0
    %p337 = por %p335, %p336
    %p338 = scmp.ne.s32.totalorder %s327, %s330
    %p339 = scmp.eq.s32.totalorder %s24, 1
    %p340 = por %p338, %p339
    %p341 = scmp.ne.s32.totalorder %s330, %s331
    %p342 = scmp.eq.s32.totalorder %s24, 0
    %p343 = por %p341, %p342
    %p344 = scmp.ne.s32.totalorder %s330, %s331
    %p345 = scmp.eq.s32.totalorder %s25, 1
    %p346 = por %p344, %p345
    %p348 = scmp.ne.s32.totalorder %s331, %s347
    %p349 = scmp.eq.s32.totalorder %s25, 0
    %p350 = por %p348, %p349
    %s351 = ssub.s32 %s27, %s34
    %p352 = scmp.eq.s32.totalorder %s351, 0
    %s354 = sadd.s32 %s353, 1
    %s355 = scalar_select %p352, %s353, %s354
    %p358 = pneg %p352
    %p359 = scmp.eq.s32.totalorder %s19, 1
    %p360 = por %p358, %p359
    %p361 = scmp.ne.s32.totalorder %s353, %s356
    %p362 = scmp.eq.s32.totalorder %s19, 0
    %p363 = por %p361, %p362
    %p364 = scmp.ne.s32.totalorder %s353, %s356
    %p365 = scmp.eq.s32.totalorder %s24, 1
    %p366 = por %p364, %p365
    %p367 = scmp.ne.s32.totalorder %s356, %s357
    %p368 = scmp.eq.s32.totalorder %s24, 0
    %p369 = por %p367, %p368
    %p370 = scmp.ne.s32.totalorder %s356, %s357
    %p371 = scmp.eq.s32.totalorder %s25, 1
    %p372 = por %p370, %p371
    %p374 = scmp.ne.s32.totalorder %s357, %s373
    %p375 = scmp.eq.s32.totalorder %s25, 0
    %p376 = por %p374, %p375
    %s377 = ssub.s32 %s26, %s38
    %p378 = scmp.eq.s32.totalorder %s377, 0
    %s380 = sadd.s32 %s379, 1
    %s381 = scalar_select %p378, %s379, %s380
    %p384 = pneg %p378
    %p385 = scmp.eq.s32.totalorder %s19, 1
    %p386 = por %p384, %p385
    %p387 = scmp.ne.s32.totalorder %s379, %s382
    %p388 = scmp.eq.s32.totalorder %s19, 0
    %p389 = por %p387, %p388
    %p390 = scmp.ne.s32.totalorder %s379, %s382
    %p391 = scmp.eq.s32.totalorder %s24, 1
    %p392 = por %p390, %p391
    %p393 = scmp.ne.s32.totalorder %s382, %s383
    %p394 = scmp.eq.s32.totalorder %s24, 0
    %p395 = por %p393, %p394
    %p396 = scmp.ne.s32.totalorder %s382, %s383
    %p397 = scmp.eq.s32.totalorder %s25, 1
    %p398 = por %p396, %p397
    %p400 = scmp.ne.s32.totalorder %s383, %s399
    %p401 = scmp.eq.s32.totalorder %s25, 0
    %p402 = por %p400, %p401
    %p403 = scmp.le.s32.totalorder 1, %s19
    %p404 = scmp.lt.s32.totalorder %s19, 3
    %p405 = pnand %p403, %p404
    %p406 = pneg %p405
    // Predicated region
    $region9: #{clip_vision_tower_forward.4} parent=5 // pred_check
      _
    $region10: #{clip_vision_tower_forward.4} parent=5 // pred_check_branch
      %408 = sbr.rel (%p405) target = $region12
    $region11: #{clip_vision_tower_forward.4} parent=5 // pred_region
      %s409 = ssub.s32 %s19, 1
      // Predicated region
      $region13: #{clip_vision_tower_forward.4} parent=11 // pred_check
        %p410 = pneg %p83
      $region14: #{clip_vision_tower_forward.4} parent=11 // pred_check_branch
        %412 = sbr.rel (%p410) target = $region16
      $region15: #{clip_vision_tower_forward.4} parent=11 // pred_region
        %p413 = scmp.lt.s32.totalorder %s29, 0
        %s414 = scalar_select %p413, %s29, 0
        %s415 = scalar_lea.vmem %s1, %s414
      $region16: #{clip_vision_tower_forward.4} parent=11 // pred_fallthru
        _
      // Predicated region
      $region17: #{clip_vision_tower_forward.4} parent=11 // pred_check
        %p416 = pneg %p109
      $region18: #{clip_vision_tower_forward.4} parent=11 // pred_check_branch
        %418 = sbr.rel (%p416) target = $region20
      $region19: #{clip_vision_tower_forward.4} parent=11 // pred_region
        %p419 = scmp.lt.s32.totalorder %s29, 0
        %s420 = scalar_select %p419, %s29, 0
        %s421 = scalar_lea.vmem %s2, %s420
      $region20: #{clip_vision_tower_forward.4} parent=11 // pred_fallthru
        _
      // Predicated region
      $region21: #{clip_vision_tower_forward.4} parent=11 // pred_check
        %p422 = pneg %p135
      $region22: #{clip_vision_tower_forward.4} parent=11 // pred_check_branch
        %424 = sbr.rel (%p422) target = $region24
      $region23: #{clip_vision_tower_forward.4} parent=11 // pred_region
        %p425 = scmp.lt.s32.totalorder %s29, 0
        %s426 = scalar_select %p425, %s29, 0
        %s427 = smul.addr %s426, 2
        %s428 = smul.addr %s427, 4
        %s429 = scalar_lea.vmem %s3, %s428
      $region24: #{clip_vision_tower_forward.4} parent=11 // pred_fallthru
        _
      // Predicated region
      $region25: #{clip_vision_tower_forward.4} parent=11 // pred_check
        %p430 = pneg %p161
      $region26: #{clip_vision_tower_forward.4} parent=11 // pred_check_branch
        %432 = sbr.rel (%p430) target = $region28
      $region27: #{clip_vision_tower_forward.4} parent=11 // pred_region
        %p433 = scmp.lt.s32.totalorder %s29, 0
        %s434 = scalar_select %p433, %s29, 0
        %s435 = scalar_lea.vmem %s4, %s434
      $region28: #{clip_vision_tower_forward.4} parent=11 // pred_fallthru
        _
      // Predicated region
      $region29: #{clip_vision_tower_forward.4} parent=11 // pred_check
        %p436 = pneg %p187
      $region30: #{clip_vision_tower_forward.4} parent=11 // pred_check_branch
        %438 = sbr.rel (%p436) target = $region32
      $region31: #{clip_vision_tower_forward.4} parent=11 // pred_region
        %p439 = scmp.lt.s32.totalorder %s29, 0
        %s440 = scalar_select %p439, %s29, 0
        %s441 = smul.addr %s440, 2
        %s442 = smul.addr %s441, 4
        %s443 = scalar_lea.vmem %s5, %s442
      $region32: #{clip_vision_tower_forward.4} parent=11 // pred_fallthru
        _
      // Predicated region
      $region33: #{clip_vision_tower_forward.4} parent=11 // pred_check
        %p444 = pneg %p213
      $region34: #{clip_vision_tower_forward.4} parent=11 // pred_check_branch
        %446 = sbr.rel (%p444) target = $region36
      $region35: #{clip_vision_tower_forward.4} parent=11 // pred_region
        %p447 = scmp.lt.s32.totalorder %s29, 0
        %s448 = scalar_select %p447, %s29, 0
        %s449 = scalar_lea.vmem %s6, %s448
      $region36: #{clip_vision_tower_forward.4} parent=11 // pred_fallthru
        _
      // Predicated region
      $region37: #{clip_vision_tower_forward.4} parent=11 // pred_check
        %p450 = pneg %p239
      $region38: #{clip_vision_tower_forward.4} parent=11 // pred_check_branch
        %452 = sbr.rel (%p450) target = $region40
      $region39: #{clip_vision_tower_forward.4} parent=11 // pred_region
        %p453 = scmp.lt.s32.totalorder %s29, 0
        %s454 = scalar_select %p453, %s29, 0
        %s455 = scalar_lea.vmem %s7, %s454
      $region40: #{clip_vision_tower_forward.4} parent=11 // pred_fallthru
        _
      // Predicated region
      $region41: #{clip_vision_tower_forward.4} parent=11 // pred_check
        %p456 = pneg %p265
      $region42: #{clip_vision_tower_forward.4} parent=11 // pred_check_branch
        %458 = sbr.rel (%p456) target = $region44
      $region43: #{clip_vision_tower_forward.4} parent=11 // pred_region
        %p459 = scmp.lt.s32.totalorder %s29, 0
        %s460 = scalar_select %p459, %s29, 0
        %s461 = scalar_lea.vmem %s8, %s460
      $region44: #{clip_vision_tower_forward.4} parent=11 // pred_fallthru
        _
      // Predicated region
      $region45: #{clip_vision_tower_forward.4} parent=11 // pred_check
        %p462 = pneg %p291
      $region46: #{clip_vision_tower_forward.4} parent=11 // pred_check_branch
        %464 = sbr.rel (%p462) target = $region48
      $region47: #{clip_vision_tower_forward.4} parent=11 // pred_region
        %p465 = scmp.lt.s32.totalorder %s29, 0
        %s466 = scalar_select %p465, %s29, 0
        %s467 = smul.addr %s466, 2
        %s468 = smul.addr %s467, 4
        %s469 = scalar_lea.vmem %s9, %s468
      $region48: #{clip_vision_tower_forward.4} parent=11 // pred_fallthru
        _
      // Predicated region
      $region49: #{clip_vision_tower_forward.4} parent=11 // pred_check
        %p470 = pneg %p317
      $region50: #{clip_vision_tower_forward.4} parent=11 // pred_check_branch
        %472 = sbr.rel (%p470) target = $region52
      $region51: #{clip_vision_tower_forward.4} parent=11 // pred_region
        %p473 = scmp.lt.s32.totalorder %s29, 0
        %s474 = scalar_select %p473, %s29, 0
        %s475 = scalar_lea.vmem %s10, %s474
      $region52: #{clip_vision_tower_forward.4} parent=11 // pred_fallthru
        _
      // Predicated region
      $region53: #{clip_vision_tower_forward.4} parent=11 // pred_check
        %p476 = pneg %p343
      $region54: #{clip_vision_tower_forward.4} parent=11 // pred_check_branch
        %478 = sbr.rel (%p476) target = $region56
      $region55: #{clip_vision_tower_forward.4} parent=11 // pred_region
        %p479 = scmp.lt.s32.totalorder %s29, 0
        %s480 = scalar_select %p479, %s29, 0
        %s481 = smul.addr %s480, 4
        %s482 = smul.addr %s481, 4
        %s483 = scalar_lea.vmem %s11, %s482
      $region56: #{clip_vision_tower_forward.4} parent=11 // pred_fallthru
        _
      // Predicated region
      $region57: #{clip_vision_tower_forward.4} parent=11 // pred_check
        %p484 = pneg %p369
      $region58: #{clip_vision_tower_forward.4} parent=11 // pred_check_branch
        %486 = sbr.rel (%p484) target = $region60
      $region59: #{clip_vision_tower_forward.4} parent=11 // pred_region
        %p487 = scmp.lt.s32.totalorder %s29, 0
        %s488 = scalar_select %p487, %s29, 0
        %s489 = scalar_lea.vmem %s12, %s488
      $region60: #{clip_vision_tower_forward.4} parent=11 // pred_fallthru
        _
    $region12: #{clip_vision_tower_forward.4} parent=5 // pred_fallthru
      _
    %p490 = scmp.lt.s32.totalorder %s19, 2
    // Predicated region
    $region61: #{clip_vision_tower_forward.4} parent=5 // pred_check
      %p491 = pneg %p490
    $region62: #{clip_vision_tower_forward.4} parent=5 // pred_check_branch
      %493 = sbr.rel (%p491) target = $region64
    $region63: #{clip_vision_tower_forward.4} parent=5 // pred_region
      // Predicated region
      $region65: #{clip_vision_tower_forward.4} parent=63 // pred_check
        %p494 = pneg %p51
      $region66: #{clip_vision_tower_forward.4} parent=63 // pred_check_branch
        %496 = sbr.rel (%p494) target = $region68
      $region67: #{clip_vision_tower_forward.4} parent=63 // pred_region
        %p497 = scmp.lt.s32.totalorder %s26, 1
        %s498 = scalar_select %p497, %s26, 1
        %s499 = smul.addr %s498, 8
        %s500 = scalar_lea.vmem %s0, %s499
      $region68: #{clip_vision_tower_forward.4} parent=63 // pred_fallthru
        _
    $region64: #{clip_vision_tower_forward.4} parent=5 // pred_fallthru
      _
    %p501 = scmp.le.s32.totalorder 1, %s19
    %p502 = scmp.lt.s32.totalorder %s19, 3
    %p503 = pnand %p501, %p502
    %p504 = pneg %p503
    // Predicated region
    $region69: #{clip_vision_tower_forward.4} parent=5 // pred_check
      _
    $region70: #{clip_vision_tower_forward.4} parent=5 // pred_check_branch
      %506 = sbr.rel (%p503) target = $region72
    $region71: #{clip_vision_tower_forward.4} parent=5 // pred_region
      %s507 = ssub.s32 %s19, 1
      %p508 = scmp.lt.s32.totalorder %s28, 1
      %s509 = scalar_select %p508, %s28, 1
      %s510 = smul.addr %s509, 8
      %s511 = scalar_lea.vmem %s0, %s510
      %p512 = pneg %p57
      %p513 = pneg %p54
      %p514 = scmp.lt.s32.totalorder %s29, 0
      %s515 = scalar_select %p514, %s29, 0
      %s516 = scalar_lea.vmem %s1, %s515
      %p517 = pneg %p83
      %p518 = pneg %p80
      %p519 = scmp.lt.s32.totalorder %s29, 0
      %s520 = scalar_select %p519, %s29, 0
      %s521 = scalar_lea.vmem %s2, %s520
      %p522 = pneg %p109
      %p523 = pneg %p106
      %p524 = scmp.lt.s32.totalorder %s29, 0
      %s525 = scalar_select %p524, %s29, 0
      %s526 = smul.addr %s525, 2
      %s527 = smul.addr %s526, 4
      %s528 = scalar_lea.vmem %s3, %s527
      %p529 = pneg %p135
      %p530 = pneg %p132
      %p531 = scmp.lt.s32.totalorder %s29, 0
      %s532 = scalar_select %p531, %s29, 0
      %s533 = scalar_lea.vmem %s4, %s532
      %p534 = pneg %p161
      %p535 = pneg %p158
      %p536 = scmp.lt.s32.totalorder %s29, 0
      %s537 = scalar_select %p536, %s29, 0
      %s538 = smul.addr %s537, 2
      %s539 = smul.addr %s538, 4
      %s540 = scalar_lea.vmem %s5, %s539
      %p541 = pneg %p187
      %p542 = pneg %p184
      %p543 = scmp.lt.s32.totalorder %s29, 0
      %s544 = scalar_select %p543, %s29, 0
      %s545 = scalar_lea.vmem %s6, %s544
      %p546 = pneg %p213
      %p547 = pneg %p210
      %p548 = scmp.lt.s32.totalorder %s29, 0
      %s549 = scalar_select %p548, %s29, 0
      %s550 = scalar_lea.vmem %s7, %s549
      %p551 = pneg %p239
      %p552 = pneg %p236
      %p553 = scmp.lt.s32.totalorder %s29, 0
      %s554 = scalar_select %p553, %s29, 0
      %s555 = scalar_lea.vmem %s8, %s554
      %p556 = pneg %p265
      %p557 = pneg %p262
      %p558 = scmp.lt.s32.totalorder %s29, 0
      %s559 = scalar_select %p558, %s29, 0
      %s560 = smul.addr %s559, 2
      %s561 = smul.addr %s560, 4
      %s562 = scalar_lea.vmem %s9, %s561
      %p563 = pneg %p291
      %p564 = pneg %p288
      %p565 = scmp.lt.s32.totalorder %s29, 0
      %s566 = scalar_select %p565, %s29, 0
      %s567 = scalar_lea.vmem %s10, %s566
      %p568 = pneg %p317
      %p569 = pneg %p314
      %p570 = scmp.lt.s32.totalorder %s29, 0
      %s571 = scalar_select %p570, %s29, 0
      %s572 = smul.addr %s571, 4
      %s573 = smul.addr %s572, 4
      %s574 = scalar_lea.vmem %s11, %s573
      %p575 = pneg %p343
      %p576 = pneg %p340
      %p577 = scmp.lt.s32.totalorder %s29, 0
      %s578 = scalar_select %p577, %s29, 0
      %s579 = scalar_lea.vmem %s12, %s578
      %p580 = pneg %p369
      %p581 = pneg %p366
      %p582 = pneg %p395
      %p583 = pneg %p392
      %p584 = scmp.lt.s32.totalorder %s28, 1
      %s585 = scalar_select %p584, %s28, 1
      %s586 = smul.addr %s585, 8
      %s587 = scalar_lea.vmem %s13, %s586
      %p588 = scmp.lt.s32.totalorder %s28, 1
      %s589 = scalar_select %p588, %s28, 1
      %s590 = smul.addr %s589, 8
      %s591 = scalar_lea.vmem %s0, %s590
      %p592 = scmp.lt.s32.totalorder %s29, 0
      %s593 = scalar_select %p592, %s29, 0
      %s594 = scalar_lea.vmem %s1, %s593
      %p595 = scmp.lt.s32.totalorder %s29, 0
      %s596 = scalar_select %p595, %s29, 0
      %s597 = scalar_lea.vmem %s2, %s596
      %p598 = scmp.lt.s32.totalorder %s29, 0
      %s599 = scalar_select %p598, %s29, 0
      %s600 = smul.addr %s599, 2
      %s601 = smul.addr %s600, 4
      %s602 = scalar_lea.vmem %s3, %s601
      %p603 = scmp.lt.s32.totalorder %s29, 0
      %s604 = scalar_select %p603, %s29, 0
      %s605 = scalar_lea.vmem %s4, %s604
      %p606 = scmp.lt.s32.totalorder %s29, 0
      %s607 = scalar_select %p606, %s29, 0
      %s608 = smul.addr %s607, 2
      %s609 = smul.addr %s608, 4
      %s610 = scalar_lea.vmem %s5, %s609
      %p611 = scmp.lt.s32.totalorder %s29, 0
      %s612 = scalar_select %p611, %s29, 0
      %s613 = scalar_lea.vmem %s6, %s612
      %p614 = scmp.lt.s32.totalorder %s29, 0
      %s615 = scalar_select %p614, %s29, 0
      %s616 = scalar_lea.vmem %s7, %s615
      %p617 = scmp.lt.s32.totalorder %s29, 0
      %s618 = scalar_select %p617, %s29, 0
      %s619 = scalar_lea.vmem %s8, %s618
      %p620 = scmp.lt.s32.totalorder %s29, 0
      %s621 = scalar_select %p620, %s29, 0
      %s622 = smul.addr %s621, 2
      %s623 = smul.addr %s622, 4
      %s624 = scalar_lea.vmem %s9, %s623
      %p625 = scmp.lt.s32.totalorder %s29, 0
      %s626 = scalar_select %p625, %s29, 0
      %s627 = scalar_lea.vmem %s10, %s626
      %p628 = scmp.lt.s32.totalorder %s29, 0
      %s629 = scalar_select %p628, %s29, 0
      %s630 = smul.addr %s629, 4
      %s631 = smul.addr %s630, 4
      %s632 = scalar_lea.vmem %s11, %s631
      %p633 = scmp.lt.s32.totalorder %s29, 0
      %s634 = scalar_select %p633, %s29, 0
      %s635 = scalar_lea.vmem %s12, %s634
      %p636 = scmp.lt.s32.totalorder %s28, 1
      %s637 = scalar_select %p636, %s28, 1
      %s638 = smul.addr %s637, 8
      %s639 = scalar_lea.vmem %s13, %s638
      %p641 = scmp.eq.s32.totalorder %s29, 0
      // Predicated region
      $region73: #{clip_vision_tower_forward.4} parent=71 // pred_check
        %p642 = pneg %p641
      $region74: #{clip_vision_tower_forward.4} parent=71 // pred_check_branch
        %644 = sbr.rel (%p642) target = $region76
      $region75: #{clip_vision_tower_forward.4} parent=71 // pred_region
        %v645 = vld [vmem:[%s591] sm:$0xff]
        %vm646 = vcmask 130048
        %647 = vst.msk [vmem:[#allocation2] sm:$0xff] %vm646, %v645
      $region76: #{clip_vision_tower_forward.4} parent=71 // pred_fallthru
        _
      %v648 = vld [vmem:[#allocation2] sm:$0xff]
      %v649 = vld [vmem:[%s594] sm:$0x1]
      %v650 = vld [vmem:[%s597] sm:$0x1]
      %vm651 = vcmask 130048
      %v652 = vsel %vm651, %v648, 0.0
      %653 = vadd.xlane.f32.xlu0 %v652
      %v654 = vpop.xlane.xlu0 %653
      %v655 = vrcp.pop 16.0
      %v656 = vmul.f32 %v654, %v655
      %v657 = vsub.f32 %v648, %v656
      %v658 = vmul.f32 %v657, %v657
      %v659 = vsel %vm651, %v658, 0.0
      %660 = vadd.xlane.f32.xlu0 %v659
      %v661 = vpop.xlane.xlu0 %660
      %v662 = vmul.f32 %v661, %v655
      %v663 = vadd.f32 %v662, 1e-05
      %v664 = vrsqrt.pop %v663
      %v665 = vmul.f32 %v657, %v664
      %v667 = vlaneseq
      %v668 = vshrl.u32 %v667, 7
      %v669 = vsub.s32 0, %v668
      %v670 = vrot.slane %v649, %v669
      %v672 = vmul.f32 %v665, %v670
      %v674 = vlaneseq
      %v675 = vshrl.u32 %v674, 7
      %v676 = vsub.s32 0, %v675
      %v677 = vrot.slane %v650, %v676
      %v679 = vadd.f32 %v672, %v677
      %v680 = vpack.c.bf16 %v679, %v679
      %v681 = vld [vmem:[%s602] sm:$0xf]
      %v682 = vld [vmem:[%s602 + $0x4] sm:$0xf]
      %v683 = vld [vmem:[%s605] sm:$0x1]
      %v685 = vlaneseq
      %v686 = vshrl.u32 %v685, 7
      %v687 = vsub.s32 0, %v686
      %v688 = vrot.slane %v683, %v687
      %v692 = vunpack.c.l.b16 %v681
      %v693 = vunpack.c.l.b16 %v682
      %v694 = vpack.c.b16 %v693, %v692
      %v697 = vsel %vm651, %v680, 0
      %699 = vmatprep.subr.bf16.mxu0 0
      %700 = vmatpush1.bf16.msra.mxu0 0
      %701 = vmatprep.subr.bf16.mxu0 0
      %702 = vmatpush1.bf16.msra.mxu0 0
      %703 = vmatprep.subr.bf16.mxu0 0
      %704 = vmatpush1.bf16.msra.mxu0 0
      %705 = vmatprep.subr.bf16.mxu0 0
      %706 = vmatpush1.bf16.msra.mxu0 0
      %707 = vmatprep.subr.bf16.mxu0 0
      %708 = vmatpush1.bf16.msra.mxu0 0
      %709 = vmatprep.subr.bf16.mxu0 0
      %710 = vmatpush1.bf16.msra.mxu0 0
      %711 = vmatprep.subr.bf16.mxu0 0
      %712 = vmatpush1.bf16.msra.mxu0 0
      %713 = vmatprep.subr.bf16.mxu0 0
      %714 = vmatpush1.bf16.msra.mxu0 %v694
      %715 = vmatprep.subr.bf16.mxu0 0
      %716 = vmatpush2.bf16.msra.mxu0 0
      %717 = vmatprep.subr.bf16.mxu0 0
      %718 = vmatpush2.bf16.msra.mxu0 0
      %719 = vmatprep.subr.bf16.mxu0 0
      %720 = vmatpush2.bf16.msra.mxu0 0
      %721 = vmatprep.subr.bf16.mxu0 0
      %722 = vmatpush2.bf16.msra.mxu0 0
      %723 = vmatprep.subr.bf16.mxu0 0
      %724 = vmatpush2.bf16.msra.mxu0 0
      %725 = vmatprep.subr.bf16.mxu0 0
      %726 = vmatpush2.bf16.msra.mxu0 0
      %727 = vmatprep.subr.bf16.mxu0 0
      %728 = vmatpush2.bf16.msra.mxu0 0
      %729 = vmatprep.subr.bf16.mxu0 0
      %730 = vmatpush2.bf16.msra.mxu0 0
      %731 = vmatprep.mubr.bf16.mxu0 0
      %732 = vmatmul.mubr.bf16.gmra.mxu0 %v697
      %v733 = vpop.f32.mrf.mxu0
      %v734 = vadd.f32 %v688, %v733
      %v735 = vpop.f32.mrf.mxu0
      %v736 = vpop.f32.mrf.mxu0
      %v737 = vpop.f32.mrf.mxu0
      %738 = vdwg.mxu0
      %v739 = vpack.c.bf16 %v734, %v734
      %vm740 = vcmask 388096
      %741 = vst.msk [vmem:[#allocation3] sm:$0xf] %vm740, %v739
      %v742 = vlaneseq
      %v743 = vand.u32 %v742, 127
      %v744 = vlaneseq
      %v745 = vshrl.u32 %v744, 7
      %vm746 = vcmp.gt.s32.totalorder %v743, %v745
      %v747 = vsel %vm746, -1e+09, 0.0
      %v748 = vadd.f32 %v747, 0.0
      %v749 = vld [vmem:[#allocation3] sm:$0xf]
      %v751 = vunpack.c.l.b16 %v749
      %v752 = vpack.c.b16 %v751, %v751
      %753 = vrot.lane.b32.xlu0 %v752, 112
      %v754 = vpop.permute.xlu0 %753
      %vm755 = vcmask 64512
      %v757 = vsel %vm755, %v749, 0
      %v760 = vsel %vm755, %v754, 0
      %762 = vmatprep.subr.bf16.mxu0 0
      %763 = vmatpush1.bf16.xpose.msra.mxu0 0
      %764 = vmatprep.subr.bf16.mxu0 0
      %765 = vmatpush1.bf16.xpose.msra.mxu0 0
      %766 = vmatprep.subr.bf16.mxu0 0
      %767 = vmatpush1.bf16.xpose.msra.mxu0 0
      %768 = vmatprep.subr.bf16.mxu0 0
      %769 = vmatpush1.bf16.xpose.msra.mxu0 0
      %770 = vmatprep.subr.bf16.mxu0 0
      %771 = vmatpush1.bf16.xpose.msra.mxu0 0
      %772 = vmatprep.subr.bf16.mxu0 0
      %773 = vmatpush1.bf16.xpose.msra.mxu0 0
      %774 = vmatprep.subr.bf16.mxu0 0
      %775 = vmatpush1.bf16.xpose.msra.mxu0 0
      %776 = vmatprep.subr.bf16.mxu0 0
      %777 = vmatpush1.bf16.xpose.msra.mxu0 %v760
      %778 = vmatprep.subr.bf16.mxu0 0
      %779 = vmatpush2.bf16.xpose.msra.mxu0 0
      %780 = vmatprep.subr.bf16.mxu0 0
      %781 = vmatpush2.bf16.xpose.msra.mxu0 0
      %782 = vmatprep.subr.bf16.mxu0 0
      %783 = vmatpush2.bf16.xpose.msra.mxu0 0
      %784 = vmatprep.subr.bf16.mxu0 0
      %785 = vmatpush2.bf16.xpose.msra.mxu0 0
      %786 = vmatprep.subr.bf16.mxu0 0
      %787 = vmatpush2.bf16.xpose.msra.mxu0 0
      %788 = vmatprep.subr.bf16.mxu0 0
      %789 = vmatpush2.bf16.xpose.msra.mxu0 0
      %790 = vmatprep.subr.bf16.mxu0 0
      %791 = vmatpush2.bf16.xpose.msra.mxu0 0
      %792 = vmatprep.subr.bf16.mxu0 0
      %793 = vmatpush2.bf16.xpose.msra.mxu0 0
      %794 = vmatprep.mubr.bf16.mxu0 0
      %795 = vmatmul.mubr.bf16.gmra.mxu0 %v757
      %v796 = vpop.f32.mrf.mxu0
      %v797 = vadd.f32 0.0, %v796
      %v798 = vpop.f32.mrf.mxu0
      %v799 = vpop.f32.mrf.mxu0
      %v800 = vpop.f32.mrf.mxu0
      %801 = vdwg.mxu0
      %v802 = vmul.f32 %v797, 0.35355338
      %v803 = vadd.f32 %v802, %v748
      %v804 = vsel %vm755, %v803, -inf
      %805 = vmax.xlane.f32.xlu0 %v804
      %v806 = vpop.xlane.xlu0 %805
      %v807 = vsub.f32 %v803, %v806
      %v808 = vmul.f32 %v807, 1.442695
      %v809 = vpow.pop %v808
      %v810 = vsel %vm755, %v809, 0.0
      %811 = vadd.xlane.f32.xlu0 %v810
      %v812 = vpop.xlane.xlu0 %811
      %v813 = vrcp.pop %v812
      %v814 = vmul.f32 %v809, %v813
      %v815 = vpack.c.bf16 %v814, %v814
      %816 = vrot.lane.b32.xlu0 %v752, 96
      %v817 = vpop.permute.xlu0 %816
      %v819 = vsel %vm755, %v815, 0
      %vm821 = vcmask 1043456
      %v823 = vsel %vm821, %v817, 0
      %825 = vmatprep.subr.bf16.mxu0 0
      %826 = vmatpush1.bf16.msra.mxu0 0
      %827 = vmatprep.subr.bf16.mxu0 0
      %828 = vmatpush1.bf16.msra.mxu0 0
      %829 = vmatprep.subr.bf16.mxu0 0
      %830 = vmatpush1.bf16.msra.mxu0 0
      %831 = vmatprep.subr.bf16.mxu0 0
      %832 = vmatpush1.bf16.msra.mxu0 0
      %833 = vmatprep.subr.bf16.mxu0 0
      %834 = vmatpush1.bf16.msra.mxu0 0
      %835 = vmatprep.subr.bf16.mxu0 0
      %836 = vmatpush1.bf16.msra.mxu0 0
      %837 = vmatprep.subr.bf16.mxu0 0
      %838 = vmatpush1.bf16.msra.mxu0 0
      %839 = vmatprep.subr.bf16.mxu0 0
      %840 = vmatpush1.bf16.msra.mxu0 %v823
      %841 = vmatprep.subr.bf16.mxu0 0
      %842 = vmatpush2.bf16.msra.mxu0 0
      %843 = vmatprep.subr.bf16.mxu0 0
      %844 = vmatpush2.bf16.msra.mxu0 0
      %845 = vmatprep.subr.bf16.mxu0 0
      %846 = vmatpush2.bf16.msra.mxu0 0
      %847 = vmatprep.subr.bf16.mxu0 0
      %848 = vmatpush2.bf16.msra.mxu0 0
      %849 = vmatprep.subr.bf16.mxu0 0
      %850 = vmatpush2.bf16.msra.mxu0 0
      %851 = vmatprep.subr.bf16.mxu0 0
      %852 = vmatpush2.bf16.msra.mxu0 0
      %853 = vmatprep.subr.bf16.mxu0 0
      %854 = vmatpush2.bf16.msra.mxu0 0
      %855 = vmatprep.subr.bf16.mxu0 0
      %856 = vmatpush2.bf16.msra.mxu0 0
      %857 = vmatprep.mubr.bf16.mxu0 0
      %858 = vmatmul.mubr.bf16.gmra.mxu0 %v819
      %v859 = vpop.f32.mrf.mxu0
      %v860 = vadd.f32 0.0, %v859
      %v861 = vpop.f32.mrf.mxu0
      %v862 = vpop.f32.mrf.mxu0
      %v863 = vpop.f32.mrf.mxu0
      %864 = vdwg.mxu0
      %865 = vst.msk [vmem:[#allocation4] sm:$0xff] %vm755, %v860
      %v866 = vld [vmem:[#allocation3] sm:$0xf]
      %v868 = vunpack.c.l.b16 %v866
      %v869 = vpack.c.b16 %v868, %v868
      %870 = vrot.lane.b32.xlu0 %v869, 120
      %v871 = vpop.permute.xlu0 %870
      %872 = vrot.lane.b32.xlu0 %v869, 104
      %v873 = vpop.permute.xlu0 %872
      %v875 = vsel %vm755, %v871, 0
      %v878 = vsel %vm755, %v873, 0
      %880 = vmatprep.subr.bf16.mxu0 0
      %881 = vmatpush1.bf16.xpose.msra.mxu0 0
      %882 = vmatprep.subr.bf16.mxu0 0
      %883 = vmatpush1.bf16.xpose.msra.mxu0 0
      %884 = vmatprep.subr.bf16.mxu0 0
      %885 = vmatpush1.bf16.xpose.msra.mxu0 0
      %886 = vmatprep.subr.bf16.mxu0 0
      %887 = vmatpush1.bf16.xpose.msra.mxu0 0
      %888 = vmatprep.subr.bf16.mxu0 0
      %889 = vmatpush1.bf16.xpose.msra.mxu0 0
      %890 = vmatprep.subr.bf16.mxu0 0
      %891 = vmatpush1.bf16.xpose.msra.mxu0 0
      %892 = vmatprep.subr.bf16.mxu0 0
      %893 = vmatpush1.bf16.xpose.msra.mxu0 0
      %894 = vmatprep.subr.bf16.mxu0 0
      %895 = vmatpush1.bf16.xpose.msra.mxu0 %v878
      %896 = vmatprep.subr.bf16.mxu0 0
      %897 = vmatpush2.bf16.xpose.msra.mxu0 0
      %898 = vmatprep.subr.bf16.mxu0 0
      %899 = vmatpush2.bf16.xpose.msra.mxu0 0
      %900 = vmatprep.subr.bf16.mxu0 0
      %901 = vmatpush2.bf16.xpose.msra.mxu0 0
      %902 = vmatprep.subr.bf16.mxu0 0
      %903 = vmatpush2.bf16.xpose.msra.mxu0 0
      %904 = vmatprep.subr.bf16.mxu0 0
      %905 = vmatpush2.bf16.xpose.msra.mxu0 0
      %906 = vmatprep.subr.bf16.mxu0 0
      %907 = vmatpush2.bf16.xpose.msra.mxu0 0
      %908 = vmatprep.subr.bf16.mxu0 0
      %909 = vmatpush2.bf16.xpose.msra.mxu0 0
      %910 = vmatprep.subr.bf16.mxu0 0
      %911 = vmatpush2.bf16.xpose.msra.mxu0 0
      %912 = vmatprep.mubr.bf16.mxu0 0
      %913 = vmatmul.mubr.bf16.gmra.mxu0 %v875
      %v914 = vpop.f32.mrf.mxu0
      %v915 = vadd.f32 0.0, %v914
      %v916 = vpop.f32.mrf.mxu0
      %v917 = vpop.f32.mrf.mxu0
      %v918 = vpop.f32.mrf.mxu0
      %919 = vdwg.mxu0
      %v920 = vmul.f32 %v915, 0.35355338
      %v921 = vadd.f32 %v920, %v748
      %v922 = vsel %vm755, %v921, -inf
      %923 = vmax.xlane.f32.xlu0 %v922
      %v924 = vpop.xlane.xlu0 %923
      %v925 = vsub.f32 %v921, %v924
      %v926 = vmul.f32 %v925, 1.442695
      %v927 = vpow.pop %v926
      %v928 = vsel %vm755, %v927, 0.0
      %929 = vadd.xlane.f32.xlu0 %v928
      %v930 = vpop.xlane.xlu0 %929
      %v931 = vrcp.pop %v930
      %v932 = vmul.f32 %v927, %v931
      %v933 = vpack.c.bf16 %v932, %v932
      %934 = vrot.lane.b32.xlu0 %v869, 88
      %v935 = vpop.permute.xlu0 %934
      %v937 = vsel %vm755, %v933, 0
      %v940 = vsel %vm821, %v935, 0
      %942 = vmatprep.subr.bf16.mxu0 0
      %943 = vmatpush1.bf16.msra.mxu0 0
      %944 = vmatprep.subr.bf16.mxu0 0
      %945 = vmatpush1.bf16.msra.mxu0 0
      %946 = vmatprep.subr.bf16.mxu0 0
      %947 = vmatpush1.bf16.msra.mxu0 0
      %948 = vmatprep.subr.bf16.mxu0 0
      %949 = vmatpush1.bf16.msra.mxu0 0
      %950 = vmatprep.subr.bf16.mxu0 0
      %951 = vmatpush1.bf16.msra.mxu0 0
      %952 = vmatprep.subr.bf16.mxu0 0
      %953 = vmatpush1.bf16.msra.mxu0 0
      %954 = vmatprep.subr.bf16.mxu0 0
      %955 = vmatpush1.bf16.msra.mxu0 0
      %956 = vmatprep.subr.bf16.mxu0 0
      %957 = vmatpush1.bf16.msra.mxu0 %v940
      %958 = vmatprep.subr.bf16.mxu0 0
      %959 = vmatpush2.bf16.msra.mxu0 0
      %960 = vmatprep.subr.bf16.mxu0 0
      %961 = vmatpush2.bf16.msra.mxu0 0
      %962 = vmatprep.subr.bf16.mxu0 0
      %963 = vmatpush2.bf16.msra.mxu0 0
      %964 = vmatprep.subr.bf16.mxu0 0
      %965 = vmatpush2.bf16.msra.mxu0 0
      %966 = vmatprep.subr.bf16.mxu0 0
      %967 = vmatpush2.bf16.msra.mxu0 0
      %968 = vmatprep.subr.bf16.mxu0 0
      %969 = vmatpush2.bf16.msra.mxu0 0
      %970 = vmatprep.subr.bf16.mxu0 0
      %971 = vmatpush2.bf16.msra.mxu0 0
      %972 = vmatprep.subr.bf16.mxu0 0
      %973 = vmatpush2.bf16.msra.mxu0 0
      %974 = vmatprep.mubr.bf16.mxu0 0
      %975 = vmatmul.mubr.bf16.gmra.mxu0 %v937
      %v976 = vpop.f32.mrf.mxu0
      %v977 = vadd.f32 0.0, %v976
      %v978 = vpop.f32.mrf.mxu0
      %v979 = vpop.f32.mrf.mxu0
      %v980 = vpop.f32.mrf.mxu0
      %981 = vdwg.mxu0
      %983 = vrot.lane.b32.xlu0 %v977, 8
      %v984 = vpop.permute.xlu0 %983
      %vm986 = vcmask 130112
      %987 = vst.msk [vmem:[#allocation4] sm:$0xff] %vm986, %v984
      %v988 = vld [vmem:[#allocation4] sm:$0xff]
      %v989 = vpack.c.bf16 %v988, %v988
      %v990 = vld [vmem:[%s610] sm:$0xf]
      %v991 = vld [vmem:[%s610 + $0x4] sm:$0xf]
      %v992 = vld [vmem:[%s613] sm:$0x1]
      %v994 = vlaneseq
      %v995 = vshrl.u32 %v994, 7
      %v996 = vsub.s32 0, %v995
      %v997 = vrot.slane %v992, %v996
      %v1001 = vunpack.c.l.b16 %v990
      %v1002 = vunpack.c.l.b16 %v991
      %v1003 = vpack.c.b16 %v1002, %v1001
      %v1006 = vsel %vm651, %v989, 0
      %1008 = vmatprep.subr.bf16.mxu0 0
      %1009 = vmatpush1.bf16.msra.mxu0 0
      %1010 = vmatprep.subr.bf16.mxu0 0
      %1011 = vmatpush1.bf16.msra.mxu0 0
      %1012 = vmatprep.subr.bf16.mxu0 0
      %1013 = vmatpush1.bf16.msra.mxu0 0
      %1014 = vmatprep.subr.bf16.mxu0 0
      %1015 = vmatpush1.bf16.msra.mxu0 0
      %1016 = vmatprep.subr.bf16.mxu0 0
      %1017 = vmatpush1.bf16.msra.mxu0 0
      %1018 = vmatprep.subr.bf16.mxu0 0
      %1019 = vmatpush1.bf16.msra.mxu0 0
      %1020 = vmatprep.subr.bf16.mxu0 0
      %1021 = vmatpush1.bf16.msra.mxu0 0
      %1022 = vmatprep.subr.bf16.mxu0 0
      %1023 = vmatpush1.bf16.msra.mxu0 %v1003
      %1024 = vmatprep.subr.bf16.mxu0 0
      %1025 = vmatpush2.bf16.msra.mxu0 0
      %1026 = vmatprep.subr.bf16.mxu0 0
      %1027 = vmatpush2.bf16.msra.mxu0 0
      %1028 = vmatprep.subr.bf16.mxu0 0
      %1029 = vmatpush2.bf16.msra.mxu0 0
      %1030 = vmatprep.subr.bf16.mxu0 0
      %1031 = vmatpush2.bf16.msra.mxu0 0
      %1032 = vmatprep.subr.bf16.mxu0 0
      %1033 = vmatpush2.bf16.msra.mxu0 0
      %1034 = vmatprep.subr.bf16.mxu0 0
      %1035 = vmatpush2.bf16.msra.mxu0 0
      %1036 = vmatprep.subr.bf16.mxu0 0
      %1037 = vmatpush2.bf16.msra.mxu0 0
      %1038 = vmatprep.subr.bf16.mxu0 0
      %1039 = vmatpush2.bf16.msra.mxu0 0
      %1040 = vmatprep.mubr.bf16.mxu0 0
      %1041 = vmatmul.mubr.bf16.gmra.mxu0 %v1006
      %v1042 = vpop.f32.mrf.mxu0
      %v1043 = vadd.f32 %v997, %v1042
      %v1044 = vpop.f32.mrf.mxu0
      %v1045 = vpop.f32.mrf.mxu0
      %v1046 = vpop.f32.mrf.mxu0
      %1047 = vdwg.mxu0
      %v1048 = vadd.f32 %v648, %v1043
      %v1049 = vld [vmem:[%s616] sm:$0x1]
      %v1050 = vld [vmem:[%s619] sm:$0x1]
      %v1051 = vsel %vm651, %v1048, 0.0
      %1052 = vadd.xlane.f32.xlu0 %v1051
      %v1053 = vpop.xlane.xlu0 %1052
      %v1054 = vmul.f32 %v1053, %v655
      %v1055 = vsub.f32 %v1048, %v1054
      %v1056 = vmul.f32 %v1055, %v1055
      %v1057 = vsel %vm651, %v1056, 0.0
      %1058 = vadd.xlane.f32.xlu0 %v1057
      %v1059 = vpop.xlane.xlu0 %1058
      %v1060 = vmul.f32 %v1059, %v655
      %v1061 = vadd.f32 %v1060, 1e-05
      %v1062 = vrsqrt.pop %v1061
      %v1063 = vmul.f32 %v1055, %v1062
      %v1065 = vlaneseq
      %v1066 = vshrl.u32 %v1065, 7
      %v1067 = vsub.s32 0, %v1066
      %v1068 = vrot.slane %v1049, %v1067
      %v1070 = vmul.f32 %v1063, %v1068
      %v1072 = vlaneseq
      %v1073 = vshrl.u32 %v1072, 7
      %v1074 = vsub.s32 0, %v1073
      %v1075 = vrot.slane %v1050, %v1074
      %v1077 = vadd.f32 %v1070, %v1075
      %v1078 = vpack.c.bf16 %v1077, %v1077
      %v1079 = vld [vmem:[%s624] sm:$0xf]
      %v1080 = vld [vmem:[%s624 + $0x4] sm:$0xf]
      %v1081 = vld [vmem:[%s627] sm:$0x1]
      %v1083 = vlaneseq
      %v1084 = vshrl.u32 %v1083, 7
      %v1085 = vsub.s32 0, %v1084
      %v1086 = vrot.slane %v1081, %v1085
      %v1090 = vunpack.c.l.b16 %v1079
      %v1091 = vunpack.c.l.b16 %v1080
      %v1092 = vpack.c.b16 %v1091, %v1090
      %v1095 = vsel %vm651, %v1078, 0
      %1097 = vmatprep.subr.bf16.mxu0 0
      %1098 = vmatpush1.bf16.msra.mxu0 0
      %1099 = vmatprep.subr.bf16.mxu0 0
      %1100 = vmatpush1.bf16.msra.mxu0 0
      %1101 = vmatprep.subr.bf16.mxu0 0
      %1102 = vmatpush1.bf16.msra.mxu0 0
      %1103 = vmatprep.subr.bf16.mxu0 0
      %1104 = vmatpush1.bf16.msra.mxu0 0
      %1105 = vmatprep.subr.bf16.mxu0 0
      %1106 = vmatpush1.bf16.msra.mxu0 0
      %1107 = vmatprep.subr.bf16.mxu0 0
      %1108 = vmatpush1.bf16.msra.mxu0 0
      %1109 = vmatprep.subr.bf16.mxu0 0
      %1110 = vmatpush1.bf16.msra.mxu0 0
      %1111 = vmatprep.subr.bf16.mxu0 0
      %1112 = vmatpush1.bf16.msra.mxu0 %v1092
      %1113 = vmatprep.subr.bf16.mxu0 0
      %1114 = vmatpush2.bf16.msra.mxu0 0
      %1115 = vmatprep.subr.bf16.mxu0 0
      %1116 = vmatpush2.bf16.msra.mxu0 0
      %1117 = vmatprep.subr.bf16.mxu0 0
      %1118 = vmatpush2.bf16.msra.mxu0 0
      %1119 = vmatprep.subr.bf16.mxu0 0
      %1120 = vmatpush2.bf16.msra.mxu0 0
      %1121 = vmatprep.subr.bf16.mxu0 0
      %1122 = vmatpush2.bf16.msra.mxu0 0
      %1123 = vmatprep.subr.bf16.mxu0 0
      %1124 = vmatpush2.bf16.msra.mxu0 0
      %1125 = vmatprep.subr.bf16.mxu0 0
      %1126 = vmatpush2.bf16.msra.mxu0 0
      %1127 = vmatprep.subr.bf16.mxu0 0
      %1128 = vmatpush2.bf16.msra.mxu0 0
      %1129 = vmatprep.mubr.bf16.mxu0 0
      %1130 = vmatmul.mubr.bf16.gmra.mxu0 %v1095
      %v1131 = vpop.f32.mrf.mxu0
      %v1132 = vadd.f32 %v1086, %v1131
      %v1133 = vpop.f32.mrf.mxu0
      %v1134 = vpop.f32.mrf.mxu0
      %v1135 = vpop.f32.mrf.mxu0
      %1136 = vdwg.mxu0
      %v1137 = vmul.f32 %v1132, 1.702
      %v1138 = vxor.u32 %v1137, 2147483648
      %v1139 = vmul.f32 %v1138, 1.442695
      %v1140 = vpow.pop %v1139
      %v1141 = vadd.f32 %v1140, 1.0
      %v1142 = vrcp.pop %v1141
      %v1143 = vmul.f32 1.0, %v1142
      %v1144 = vmul.f32 %v1132, %v1143
      %v1145 = vpack.c.bf16 %v1144, %v1144
      %v1146 = vld [vmem:[%s632] sm:$0xf]
      %v1147 = vld [vmem:[%s632 + $0x4] sm:$0xf]
      %v1148 = vld [vmem:[%s632 + $0x8] sm:$0xf]
      %v1149 = vld [vmem:[%s632 + $0xc] sm:$0xf]
      %v1150 = vld [vmem:[%s635] sm:$0x1]
      %v1152 = vlaneseq
      %v1153 = vshrl.u32 %v1152, 7
      %v1154 = vsub.s32 0, %v1153
      %v1155 = vrot.slane %v1150, %v1154
      %v1161 = vunpack.c.l.b16 %v1146
      %v1162 = vunpack.c.l.b16 %v1147
      %v1163 = vunpack.c.l.b16 %v1148
      %v1164 = vunpack.c.l.b16 %v1149
      %v1165 = vpack.c.b16 %v1162, %v1161
      %v1166 = vpack.c.b16 %v1164, %v1163
      %vm1169 = vcmask 261120
      %v1171 = vsel %vm1169, %v1145, 0
      %1173 = vmatprep.subr.bf16.mxu0 0
      %1174 = vmatpush1.bf16.msra.mxu0 0
      %1175 = vmatprep.subr.bf16.mxu0 0
      %1176 = vmatpush1.bf16.msra.mxu0 0
      %1177 = vmatprep.subr.bf16.mxu0 0
      %1178 = vmatpush1.bf16.msra.mxu0 0
      %1179 = vmatprep.subr.bf16.mxu0 0
      %1180 = vmatpush1.bf16.msra.mxu0 0
      %1181 = vmatprep.subr.bf16.mxu0 0
      %1182 = vmatpush1.bf16.msra.mxu0 0
      %1183 = vmatprep.subr.bf16.mxu0 0
      %1184 = vmatpush1.bf16.msra.mxu0 0
      %1185 = vmatprep.subr.bf16.mxu0 0
      %1186 = vmatpush1.bf16.msra.mxu0 %v1166
      %1187 = vmatprep.subr.bf16.mxu0 0
      %1188 = vmatpush1.bf16.msra.mxu0 %v1165
      %1189 = vmatprep.subr.bf16.mxu0 0
      %1190 = vmatpush2.bf16.msra.mxu0 0
      %1191 = vmatprep.subr.bf16.mxu0 0
      %1192 = vmatpush2.bf16.msra.mxu0 0
      %1193 = vmatprep.subr.bf16.mxu0 0
      %1194 = vmatpush2.bf16.msra.mxu0 0
      %1195 = vmatprep.subr.bf16.mxu0 0
      %1196 = vmatpush2.bf16.msra.mxu0 0
      %1197 = vmatprep.subr.bf16.mxu0 0
      %1198 = vmatpush2.bf16.msra.mxu0 0
      %1199 = vmatprep.subr.bf16.mxu0 0
      %1200 = vmatpush2.bf16.msra.mxu0 0
      %1201 = vmatprep.subr.bf16.mxu0 0
      %1202 = vmatpush2.bf16.msra.mxu0 0
      %1203 = vmatprep.subr.bf16.mxu0 0
      %1204 = vmatpush2.bf16.msra.mxu0 0
      %1205 = vmatprep.mubr.bf16.mxu0 0
      %1206 = vmatmul.mubr.bf16.gmra.mxu0 %v1171
      %v1207 = vpop.f32.mrf.mxu0
      %v1208 = vadd.f32 %v1155, %v1207
      %v1209 = vpop.f32.mrf.mxu0
      %v1210 = vpop.f32.mrf.mxu0
      %v1211 = vpop.f32.mrf.mxu0
      %1212 = vdwg.mxu0
      %v1213 = vadd.f32 %v1048, %v1208
      %1214 = vst.msk [vmem:[#allocation2] sm:$0xff] %vm651, %v1213
      // Predicated region
      $region77: #{clip_vision_tower_forward.4} parent=71 // pred_check
        %p1215 = pneg %p641
      $region78: #{clip_vision_tower_forward.4} parent=71 // pred_check_branch
        %1217 = sbr.rel (%p1215) target = $region80
      $region79: #{clip_vision_tower_forward.4} parent=71 // pred_region
        %1218 = vst.msk [vmem:[%s639] sm:$0xff] %vm651, %v1213
      $region80: #{clip_vision_tower_forward.4} parent=71 // pred_fallthru
        _
      %p1219 = scmp.lt.s32.totalorder %s28, 1
      %s1220 = scalar_select %p1219, %s28, 1
      %s1221 = smul.addr %s1220, 8
      %s1222 = scalar_lea.vmem %s13, %s1221
      // Predicated region
      $region81: #{clip_vision_tower_forward.4} parent=71 // pred_check
        %p1223 = pneg %p392
      $region82: #{clip_vision_tower_forward.4} parent=71 // pred_check_branch
        %1225 = sbr.rel (%p1223) target = $region84
      $region83: #{clip_vision_tower_forward.4} parent=71 // pred_region
        _
      $region84: #{clip_vision_tower_forward.4} parent=71 // pred_fallthru
        _
    $region72: #{clip_vision_tower_forward.4} parent=5 // pred_fallthru
      _
    %p1226 = scmp.le.s32.totalorder 2, %s19
    // Predicated region
    $region85: #{clip_vision_tower_forward.4} parent=5 // pred_check
      %p1227 = pneg %p1226
    $region86: #{clip_vision_tower_forward.4} parent=5 // pred_check_branch
      %1229 = sbr.rel (%p1227) target = $region88
    $region87: #{clip_vision_tower_forward.4} parent=5 // pred_region
      %s1230 = ssub.s32 %s19, 2
      // Predicated region
      $region89: #{clip_vision_tower_forward.4} parent=87 // pred_check
        %p1231 = pneg %p398
      $region90: #{clip_vision_tower_forward.4} parent=87 // pred_check_branch
        %1233 = sbr.rel (%p1231) target = $region92
      $region91: #{clip_vision_tower_forward.4} parent=87 // pred_region
        %p1234 = scmp.lt.s32.totalorder %s30, 1
        %s1235 = scalar_select %p1234, %s30, 1
        %s1236 = smul.addr %s1235, 8
        %s1237 = scalar_lea.vmem %s13, %s1236
      $region92: #{clip_vision_tower_forward.4} parent=87 // pred_fallthru
        _
    $region88: #{clip_vision_tower_forward.4} parent=5 // pred_fallthru
      _
  $region6: #{clip_vision_tower_forward.4} parent=0 // loop_footer
    %s23 = sadd.s32 1, %s19
  $region7: #{clip_vision_tower_forward.4} parent=0 // loop_footer_branch
    %18 = sbr.rel target = $region3
  $region8: #{clip_vision_tower_forward.4} parent=0 // loop_exit
    _

</llo_original>
